<compile_context>
chip_gen: v5e
topology: v5e:2x2
jax: 0.10.0
libtpu: 0.0.40
codegen_flags: <defaults>
</compile_context>

<pallas_src>
import functools
import numpy as np

import jax
import jax.numpy as jnp
from jax import lax
from jax.experimental import pallas as pl
from jax.experimental.pallas import tpu as pltpu

# ----------------------------- config (scaled down) -----------------------------
IN_CH = 3
SIMPLE_CH = 8
COMPLEX_CH = 8
OUT_CH = SIMPLE_CH + COMPLEX_CH
KSIZE = 7
STRIDE = 2
IMAGE_SIZE = 32
VISUAL_DEGREES = 8
SF_MIN, SF_MAX = 0.5, 9.0
GABOR_SEED = 0
K_EXC = 25.0
NOISE_SCALE = 0.35
NOISE_LEVEL = 0.07
PLANES = 8          # resnet50 layer1 planes (64 in the real model)
EXPANSION = 4
N_BLOCKS = 3        # resnet50 layer1 has 3 Bottleneck blocks
BATCH = 2
BN_EPS = 1e-5

TM_MAX = 512
TK_MAX = 512
VMEM_LIMIT = 32 * 1024 * 1024   # explicit scoped-VMEM budget (fits v5e/v6e/v7x)


def _round_up(x, m):
    return ((x + m - 1) // m) * m


def _pad_k(K):
    # Single-K-step case: keep K exactly (block == full dim, no activation pad needed).
    return K if K <= TK_MAX else _round_up(K, TK_MAX)


def _pick_m(M):
    Mp = _round_up(M, 8)
    tm = min(TM_MAX, Mp)
    # Prefer >=2 blocks on the parallel M axis so both v7x TensorCores get work.
    if Mp // tm < 2 and Mp >= 16:
        tm = max(8, _round_up(Mp // 2, 8))
    Mp = _round_up(M, tm)
    return Mp, tm


# ================================ Pallas kernels =================================

def _mm1_bias_kernel(a_ref, b_ref, bias_ref, o_ref, *, relu):
    """Single-K-step matmul with folded-BN bias (+static ReLU). No accumulator."""
    y = jnp.dot(a_ref[...], b_ref[...], preferred_element_type=jnp.float32)
    y = y + bias_ref[...]
    if relu:
        y = jnp.maximum(y, 0.0)
    o_ref[...] = y.astype(o_ref.dtype)


def _mm1_bias_chanrelu_kernel(a_ref, b_ref, bias_ref, rflag_ref, o_ref):
    """Single-K-step matmul, per-channel ReLU flag (fused block-0 conv1 + downsample)."""
    y = jnp.dot(a_ref[...], b_ref[...], preferred_element_type=jnp.float32)
    y = y + bias_ref[...]
    o_ref[...] = jnp.where(rflag_ref[...] > 0.5, jnp.maximum(y, 0.0), y).astype(o_ref.dtype)


def _mm1_bias_res_relu_kernel(a_ref, b_ref, bias_ref, res_ref, o_ref):
    """Single-K-step matmul + bias + residual add + ReLU (Bottleneck conv3)."""
    y = (jnp.dot(a_ref[...], b_ref[...], preferred_element_type=jnp.float32)
         + bias_ref[...] + res_ref[...].astype(jnp.float32))
    o_ref[...] = jnp.maximum(y, 0.0).astype(o_ref.dtype)


def _mmk_bias_kernel(a_ref, b_ref, bias_ref, o_ref, acc_ref, *, relu):
    """Multi-K accumulation fallback (only needed at real size, K > TK_MAX)."""
    k = pl.program_id(1)

    @pl.when(k == 0)
    def _():
        acc_ref[...] = jnp.zeros_like(acc_ref)

    acc_ref[...] += jnp.dot(a_ref[...], b_ref[...], preferred_element_type=jnp.float32)

    @pl.when(k == pl.num_programs(1) - 1)
    def _():
        y = acc_ref[...] + bias_ref[...]
        if relu:
            y = jnp.maximum(y, 0.0)
        o_ref[...] = y.astype(o_ref.dtype)


def _vone_epilogue(acc, noise, *, k_exc, noise_scale, noise_level, simple_ch):
    """VOneBlock nonlinearity: simple/complex cells, k_exc, 'neuronal' noise, ReLU.

    `acc` lanes are [all-q0 | all-q1] for the same `cout` channels, so the channel index
    is a plain iota (no pl.program_id inside any pl.when body).
    """
    half = acc.shape[-1] // 2
    q0 = acc[:, :half]
    q1 = acc[:, half:]
    chan = lax.broadcasted_iota(jnp.int32, q0.shape, 1)
    simple = jnp.maximum(q0, 0.0)
    cplx = jnp.sqrt(q0 * q0 + q1 * q1) * np.float32(1.0 / np.sqrt(2.0))
    x = k_exc * jnp.where(chan < simple_ch, simple, cplx)
    # 'neuronal' noise (eps = 10e-5), matching VOneBlock.noise_f
    x = x * noise_scale + noise_level
    x = x + noise * jnp.sqrt(jnp.maximum(x, 0.0) + 1e-4)
    x = (x - noise_level) * (1.0 / noise_scale)
    return jnp.maximum(x, 0.0)


def _vone_mm1_kernel(a_ref, b_ref, noise_ref, o_ref, *,
                     k_exc, noise_scale, noise_level, simple_ch):
    acc = jnp.dot(a_ref[...], b_ref[...], preferred_element_type=jnp.float32)
    y = _vone_epilogue(acc, noise_ref[...].astype(jnp.float32), k_exc=k_exc,
                       noise_scale=noise_scale, noise_level=noise_level,
                       simple_ch=simple_ch)
    o_ref[...] = y.astype(o_ref.dtype)


def _vone_mmk_kernel(a_ref, b_ref, noise_ref, o_ref, acc_ref, *,
                     k_exc, noise_scale, noise_level, simple_ch):
    k = pl.program_id(1)

    @pl.when(k == 0)
    def _():
        acc_ref[...] = jnp.zeros_like(acc_ref)

    acc_ref[...] += jnp.dot(a_ref[...], b_ref[...], preferred_element_type=jnp.float32)

    @pl.when(k == pl.num_programs(1) - 1)
    def _():
        y = _vone_epilogue(acc_ref[...], noise_ref[...].astype(jnp.float32), k_exc=k_exc,
                           noise_scale=noise_scale, noise_level=noise_level,
                           simple_ch=simple_ch)
        o_ref[...] = y.astype(o_ref.dtype)


def _maxpool_kernel(x_ref, o_ref, *, Ho, Wo):
    """3x3 / stride 2 / pad 1 maxpool on one halo'd NHWC slab (separable VPU max)."""
    x = x_ref[0]                                             # (Hp, Wp, C)
    rw = jnp.maximum(jnp.maximum(x[:, 0:2 * Wo, :], x[:, 1:2 * Wo + 1, :]),
                     x[:, 2:2 * Wo + 2, :])                  # 3-wide max, stride 1
    rh = jnp.maximum(jnp.maximum(rw[0:2 * Ho], rw[1:2 * Ho + 1]),
                     rw[2:2 * Ho + 2])                       # 3-tall max, stride 1
    # stride-2 subsample via reshape (avoids strided slices inside the kernel)
    o_ref[0] = rh.reshape(Ho, 2, Wo, 2, rh.shape[-1])[:, 0, :, 0, :]


# ================================ Pallas wrappers =================================

def _matmul_fused(a, prep, residual=None):
    """(M,K)@(Kp,cout) with folded-BN bias + ReLU (+optional residual), bf16 out."""
    M, K = a.shape
    wmat, bias = prep["w"], prep["b"]
    Kp, Np = wmat.shape
    Mp, tm = _pick_m(M)

    a = a.astype(jnp.bfloat16)
    if Kp != K:                                   # only in the real-size multi-K case
        a = jnp.pad(a, ((0, 0), (0, Kp - K)))
    if Mp != M:
        a = jnp.pad(a, ((0, Mp - M), (0, 0)))

    tk = min(Kp, TK_MAX)
    nk = Kp // tk
    args = [a, wmat, bias]

    if nk == 1:
        in_specs = [pl.BlockSpec((tm, Kp), lambda i: (i, 0)),
                    pl.BlockSpec((Kp, Np), lambda i: (0, 0)),
                    pl.BlockSpec((1, Np), lambda i: (0, 0))]
        out_spec = pl.BlockSpec((tm, Np), lambda i: (i, 0))
        grid = (Mp // tm,)
        dims = ("parallel",)
        scratch = []
        if residual is not None:
            res = residual.astype(jnp.bfloat16)
            if Mp != M:
                res = jnp.pad(res, ((0, Mp - M), (0, 0)))
            args.append(res)
            in_specs.append(pl.BlockSpec((tm, Np), lambda i: (i, 0)))
            kernel = _mm1_bias_res_relu_kernel
        elif prep["r"] is not None:
            args.append(prep["r"])
            in_specs.append(pl.BlockSpec((1, Np), lambda i: (0, 0)))
            kernel = _mm1_bias_chanrelu_kernel
        else:
            kernel = functools.partial(_mm1_bias_kernel, relu=bool(prep["relu"]))
    else:
        # Multi-K accumulation path (real-size K > TK_MAX only).
        assert residual is None and prep["r"] is None
        in_specs = [pl.BlockSpec((tm, tk), lambda i, k: (i, k)),
                    pl.BlockSpec((tk, Np), lambda i, k: (k, 0)),
                    pl.BlockSpec((1, Np), lambda i, k: (0, 0))]
        out_spec = pl.BlockSpec((tm, Np), lambda i, k: (i, 0))
        grid = (Mp // tm, nk)
        dims = ("parallel", "arbitrary")
        scratch = [pltpu.VMEM((tm, Np), jnp.float32)]
        kernel = functools.partial(_mmk_bias_kernel, relu=bool(prep["relu"]))

    out = pl.pallas_call(
        kernel,
        out_shape=jax.ShapeDtypeStruct((Mp, Np), jnp.bfloat16),
        grid_spec=pltpu.PrefetchScalarGridSpec(
            num_scalar_prefetch=0, grid=grid,
            in_specs=in_specs, out_specs=out_spec, scratch_shapes=scratch),
        compiler_params=pltpu.CompilerParams(
            dimension_semantics=dims, vmem_limit_bytes=VMEM_LIMIT),
    )(*args)
    return out if Mp == M else out[:M]


def _matmul_vone(a, gfb, noise2d):
    """Fused quadrature GFB matmul ([all-q0 | all-q1] weights) + VOne nonlinearity."""
    M, K = a.shape
    wmat = gfb["w"]
    Kp, N2 = wmat.shape
    cout = gfb["cout"]
    assert N2 == 2 * cout
    Mp, tm = _pick_m(M)

    a = a.astype(jnp.bfloat16)
    if Kp != K:
        a = jnp.pad(a, ((0, 0), (0, Kp - K)))
    if Mp != M:
        a = jnp.pad(a, ((0, Mp - M), (0, 0)))
        noise2d = jnp.pad(noise2d, ((0, Mp - M), (0, 0)))

    tk = min(Kp, TK_MAX)
    nk = Kp // tk
    kw = dict(k_exc=K_EXC, noise_scale=NOISE_SCALE, noise_level=NOISE_LEVEL,
              simple_ch=SIMPLE_CH)

    if nk == 1:
        kernel = functools.partial(_vone_mm1_kernel, **kw)
        grid = (Mp // tm,)
        in_specs = [pl.BlockSpec((tm, Kp), lambda i: (i, 0)),
                    pl.BlockSpec((Kp, N2), lambda i: (0, 0)),
                    pl.BlockSpec((tm, cout), lambda i: (i, 0))]
        out_spec = pl.BlockSpec((tm, cout), lambda i: (i, 0))
        dims = ("parallel",)
        scratch = []
    else:
        kernel = functools.partial(_vone_mmk_kernel, **kw)
        grid = (Mp // tm, nk)
        in_specs = [pl.BlockSpec((tm, tk), lambda i, k: (i, k)),
                    pl.BlockSpec((tk, N2), lambda i, k: (k, 0)),
                    pl.BlockSpec((tm, cout), lambda i, k: (i, 0))]
        out_spec = pl.BlockSpec((tm, cout), lambda i, k: (i, 0))
        dims = ("parallel", "arbitrary")
        scratch = [pltpu.VMEM((tm, N2), jnp.float32)]

    out = pl.pallas_call(
        kernel,
        out_shape=jax.ShapeDtypeStruct((Mp, cout), jnp.bfloat16),
        grid_spec=pltpu.PrefetchScalarGridSpec(
            num_scalar_prefetch=0, grid=grid,
            in_specs=in_specs, out_specs=out_spec, scratch_shapes=scratch),
        compiler_params=pltpu.CompilerParams(
            dimension_semantics=dims, vmem_limit_bytes=VMEM_LIMIT),
    )(a, wmat, noise2d)
    return out if Mp == M else out[:M]


def maxpool_3x3_s2_pad1(x):
    """nn.MaxPool2d(3, stride=2, padding=1) on NHWC, single halo'd read per image."""
    N, H, W, C = x.shape
    assert H % 2 == 0 and W % 2 == 0
    Ho = (H + 2 - 3) // 2 + 1
    Wo = (W + 2 - 3) // 2 + 1
    xp = jnp.pad(x, ((0, 0), (1, 1), (1, 1), (0, 0)), constant_values=-jnp.inf)
    Hp, Wp = H + 2, W + 2
    kernel = functools.partial(_maxpool_kernel, Ho=Ho, Wo=Wo)
    return pl.pallas_call(
        kernel,
        out_shape=jax.ShapeDtypeStruct((N, Ho, Wo, C), x.dtype),
        grid_spec=pltpu.PrefetchScalarGridSpec(
            num_scalar_prefetch=0, grid=(N,),
            in_specs=[pl.BlockSpec((1, Hp, Wp, C), lambda n: (n, 0, 0, 0))],
            out_specs=pl.BlockSpec((1, Ho, Wo, C), lambda n: (n, 0, 0, 0))),
        compiler_params=pltpu.CompilerParams(
            dimension_semantics=("parallel",), vmem_limit_bytes=VMEM_LIMIT),
    )(xp)


# ================================ conv glue (im2col) ==============================

def _im2col(x, k, stride, pad):
    # TODO(synk): at real size (ksize=25, stride=4) this patch gather should move
    # in-kernel (halo'd row-band DMA via pltpu.make_async_copy) instead of k*k XLA
    # slices materializing a large HBM slab; kept XLA-side here for the 7x7/3x3 cases.
    N, H, W, Cin = x.shape
    xp = jnp.pad(x, ((0, 0), (pad, pad), (pad, pad), (0, 0))) if pad else x
    Hp, Wp = H + 2 * pad, W + 2 * pad
    Ho = (Hp - k) // stride + 1
    Wo = (Wp - k) // stride + 1
    cols = []
    for kh in range(k):
        for kw in range(k):
            s = xp[:, kh:kh + stride * Ho:stride, kw:kw + stride * Wo:stride, :]
            cols.append(s[:, :Ho, :Wo, :])
    patches = jnp.stack(cols, axis=3)                        # (N, Ho, Wo, k*k, Cin)
    return patches.reshape(N * Ho * Wo, k * k * Cin), (N, Ho, Wo)


def conv_bn_act(x_nhwc, prep, stride=1, pad=0, residual_nhwc=None):
    """conv (BN pre-folded) + bias + ReLU (+fused residual add), bf16 in/out."""
    k = prep["ksize"]
    if k == 1 and stride == 1 and pad == 0:
        N, H, W, Cin = x_nhwc.shape
        a = x_nhwc.reshape(N * H * W, Cin)
        Ho, Wo = H, W
    else:
        a, (N, Ho, Wo) = _im2col(x_nhwc, k, stride, pad)
    res2d = None
    if residual_nhwc is not None:
        res2d = residual_nhwc.reshape(N * Ho * Wo, -1)
    y = _matmul_fused(a, prep, residual=res2d)
    return y.reshape(N, Ho, Wo, prep["cout"])


def vone_block(x_nhwc, gfb, noise_nhwc):
    """VOneBlock: one im2col + one fused quadrature matmul with the VOne epilogue."""
    k = gfb["ksize"]
    a, (N, Ho, Wo) = _im2col(x_nhwc.astype(jnp.bfloat16), k, STRIDE, k // 2)
    noise2d = noise_nhwc.reshape(N * Ho * Wo, gfb["cout"]).astype(jnp.float32)
    v = _matmul_vone(a, gfb, noise2d)
    return v.reshape(N, Ho, Wo, gfb["cout"])


# ================================ parameter init ==================================

def make_gabor_bank(out_ch, in_ch, ksize, seed):
    """Deterministic Gabor filter bank (q0) and its quadrature pair (q1, phase+pi/2)."""
    rng = np.random.RandomState(seed)
    sf = rng.uniform(SF_MIN, SF_MAX, size=out_ch)
    theta = rng.uniform(0, np.pi, size=out_ch)
    phase = rng.uniform(0, 2 * np.pi, size=out_ch)
    nx = rng.uniform(0.2, 1.0, size=out_ch)
    ny = rng.uniform(0.2, 1.0, size=out_ch)
    chan = rng.randint(0, in_ch, size=out_ch)
    ppd = IMAGE_SIZE / VISUAL_DEGREES
    sf_pix = sf / ppd
    sigx, sigy = nx / sf_pix, ny / sf_pix
    half = ksize // 2
    yy, xx = np.meshgrid(np.arange(-half, half + 1), np.arange(-half, half + 1),
                         indexing="ij")

    def gabor(freq, th, sx, sy, ph):
        rotx = xx * np.cos(th) + yy * np.sin(th)
        roty = -xx * np.sin(th) + yy * np.cos(th)
        g = np.exp(-0.5 * ((rotx / sx) ** 2 + (roty / sy) ** 2)) / (2 * np.pi * sx * sy)
        return g * np.cos(2 * np.pi * freq * rotx + ph)

    w0 = np.zeros((out_ch, in_ch, ksize, ksize), np.float32)
    w1 = np.zeros_like(w0)
    for i in range(out_ch):
        w0[i, chan[i]] = gabor(sf_pix[i], theta[i], sigx[i], sigy[i], phase[i])
        w1[i, chan[i]] = gabor(sf_pix[i], theta[i], sigx[i], sigy[i], phase[i] + np.pi / 2)
    return jnp.asarray(w0), jnp.asarray(w1)


def _init_conv(key, cout, cin, k):
    fan_in = cin * k * k
    return jax.random.normal(key, (cout, cin, k, k), jnp.float32) * np.sqrt(2.0 / fan_in)


def _init_bn(key, c):
    k1, k2, k3, k4 = jax.random.split(key, 4)
    gamma = 1.0 + 0.1 * jax.random.normal(k1, (c,), jnp.float32)
    beta = 0.1 * jax.random.normal(k2, (c,), jnp.float32)
    mean = 0.1 * jax.random.normal(k3, (c,), jnp.float32)
    var = 1.0 + 0.5 * jax.random.uniform(k4, (c,), jnp.float32)
    return (gamma, beta, mean, var)


def init_layer1(key, inplanes, planes, expansion, n_blocks):
    blocks = []
    for b in range(n_blocks):
        key, *ks = jax.random.split(key, 9)
        cin = inplanes if b == 0 else planes * expansion
        p = {
            "conv1_w": _init_conv(ks[0], planes, cin, 1),
            "bn1": _init_bn(ks[1], planes),
            "conv2_w": _init_conv(ks[2], planes, planes, 3),
            "bn2": _init_bn(ks[3], planes),
            "conv3_w": _init_conv(ks[4], planes * expansion, planes, 1),
            "bn3": _init_bn(ks[5], planes * expansion),
        }
        if b == 0:
            p["down_w"] = _init_conv(ks[6], planes * expansion, cin, 1)
            p["down_bn"] = _init_bn(ks[7], planes * expansion)
        blocks.append(p)
    return blocks


def init_all_params():
    w0, w1 = make_gabor_bank(OUT_CH, IN_CH, KSIZE, GABOR_SEED)
    key = jax.random.PRNGKey(0)
    kb, kl = jax.random.split(key)
    return {
        "gfb_w0": w0,
        "gfb_w1": w1,
        "bottleneck_w": _init_conv(kb, PLANES, OUT_CH, 1),
        "layer1": init_layer1(kl, PLANES, PLANES, EXPANSION, N_BLOCKS),
    }


# =========================== weight prep (one-time, at init) ======================

def _fold_bn(w_oihw, bn):
    """Fold eval-mode BN (scale, bias) into the conv weight; return (w', bias)."""
    cout = w_oihw.shape[0]
    if bn is None:
        return w_oihw, jnp.zeros((cout,), jnp.float32)
    gamma, beta, mean, var = bn
    scale = gamma * lax.rsqrt(var + BN_EPS)
    return w_oihw * scale[:, None, None, None], beta - mean * scale


def _pack_conv(ws, bs, relu_static=None, rflags=None):
    """Concat (cout) + transpose weight/bias once; K padded only if multi-K needed."""
    kh = ws[0].shape[2]
    w = jnp.concatenate(ws, axis=0)
    bias = jnp.concatenate(bs)
    cout, cin = w.shape[0], w.shape[1]
    K = kh * kh * cin
    wmat = jnp.transpose(w, (2, 3, 1, 0)).reshape(K, cout)
    Kp = _pad_k(K)
    if Kp != K:
        wmat = jnp.pad(wmat, ((0, Kp - K), (0, 0)))
    d = {"w": wmat.astype(jnp.bfloat16),
         "b": bias.astype(jnp.float32)[None, :],
         "r": None,
         "relu": relu_static,
         "ksize": int(kh), "cout": int(cout),
         "splits": [int(wi.shape[0]) for wi in ws]}
    if rflags is not None:
        d["r"] = jnp.concatenate(rflags).astype(jnp.float32)[None, :]
    return d


def prep_conv(w_oihw, bn=None, relu=False):
    wf, bias = _fold_bn(w_oihw, bn)
    return _pack_conv([wf], [bias], relu_static=relu)


def prep_conv_fused(specs):
    """Fuse several same-input 1x1 convs into one matmul (block-0 conv1 + down)."""
    ws, bs, rs = [], [], []
    for w_oihw, bn, relu in specs:
        wf, bias = _fold_bn(w_oihw, bn)
        ws.append(wf)
        bs.append(bias)
        rs.append(jnp.full((w_oihw.shape[0],), 1.0 if relu else 0.0, jnp.float32))
    return _pack_conv(ws, bs, relu_static=None, rflags=rs)


def prep_gfb(w0, w1):
    """Pack the quadrature weights as [all-q0 | all-q1] columns (no channel padding)."""
    cout, cin, k, _ = w0.shape
    K = k * k * cin
    m0 = jnp.transpose(w0, (2, 3, 1, 0)).reshape(K, cout)
    m1 = jnp.transpose(w1, (2, 3, 1, 0)).reshape(K, cout)
    w = jnp.concatenate([m0, m1], axis=1)                    # (K, 2*cout)
    Kp = _pad_k(K)
    if Kp != K:
        w = jnp.pad(w, ((0, Kp - K), (0, 0)))
    return {"w": w.astype(jnp.bfloat16), "ksize": int(k), "cout": int(cout)}


def prep_all_params(params):
    prep = {
        "gfb": prep_gfb(params["gfb_w0"], params["gfb_w1"]),
        "bottleneck": prep_conv(params["bottleneck_w"], bn=None, relu=False),
        "layer1": [],
    }
    for b, p in enumerate(params["layer1"]):
        d = {}
        if b == 0:
            d["conv1_down"] = prep_conv_fused([
                (p["conv1_w"], p["bn1"], True),
                (p["down_w"], p["down_bn"], False)])
        else:
            d["conv1"] = prep_conv(p["conv1_w"], p["bn1"], relu=True)
        d["conv2"] = prep_conv(p["conv2_w"], p["bn2"], relu=True)
        # ReLU applies AFTER the fused residual add inside the conv3 epilogue kernel
        d["conv3"] = prep_conv(p["conv3_w"], p["bn3"], relu=True)
        prep["layer1"].append(d)
    return prep


# ================================ forward pass ====================================

def resnet_bottleneck_block(x, blk, first):
    # TODO(synk): a per-row-band fully fused Bottleneck (conv1->conv2->conv3 with
    # VMEM-resident weights and in-VMEM intermediates) would remove two activation
    # HBM round trips per block; kept as three fused-matmul calls here.
    if first:
        fused = conv_bn_act(x, blk["conv1_down"])            # shared-input conv1 + down
        c1 = blk["conv1_down"]["splits"][0]
        out = fused[..., :c1]                                # conv1 + bn1 + relu
        identity = fused[..., c1:]                           # downsample + bn (no relu)
    else:
        identity = x
        out = conv_bn_act(x, blk["conv1"])
    out = conv_bn_act(out, blk["conv2"], stride=1, pad=1)
    # conv3 + bn3 + residual add + relu fused into one matmul epilogue
    return conv_bn_act(out, blk["conv3"], residual_nhwc=identity)


def vonenet_backbone_forward(x_nchw, prep, noise_nhwc):
    x = jnp.transpose(x_nchw, (0, 2, 3, 1))                  # NCHW -> NHWC
    v = vone_block(x, prep["gfb"], noise_nhwc)               # VOneBlock
    b = conv_bn_act(v, prep["bottleneck"])                   # 1x1 bottleneck (no BN/ReLU)

    # Backbone (n=2): first two children of the conv1-less ResNet back-end.
    # TODO(synk): get_backbone_from_model is not defined in the reference; assumed it
    # returns the first n children of the conv1-less ResNet back-end (maxpool, layer1).
    b = maxpool_3x3_s2_pad1(b)
    for i, blk in enumerate(prep["layer1"]):
        b = resnet_bottleneck_block(b, blk, first=(i == 0))

    return jnp.transpose(b, (0, 3, 1, 2)).astype(jnp.float32)  # NHWC -> NCHW


# ==================================== main ========================================

if __name__ == "__main__":
    params = init_all_params()
    prep = prep_all_params(params)

    x = jax.random.normal(jax.random.PRNGKey(0),
                          (BATCH, IN_CH, IMAGE_SIZE, IMAGE_SIZE), jnp.float32)
    Ho = (IMAGE_SIZE + 2 * (KSIZE // 2) - KSIZE) // STRIDE + 1
    # TODO(synk): VOneBlock samples fresh torch Normal noise each forward; here the
    # noise is a deterministic jax.random input (in-kernel pltpu.prng_* generation
    # would remove this HBM stream at real scale).
    noise = jax.random.normal(jax.random.PRNGKey(1), (BATCH, Ho, Ho, OUT_CH), jnp.float32)

    fwd = jax.jit(lambda xx, nz: vonenet_backbone_forward(xx, prep, nz))
    out = fwd(x, noise)
    jax.block_until_ready(out)

    assert out.shape == (BATCH, PLANES * EXPANSION, Ho // 2, Ho // 2)
    assert bool(jnp.all(jnp.isfinite(out)))
    print("KERNEL_OK")
</pallas_src>

<mosaic_0001>
module attributes {stable_mosaic.version = 11 : i64} {
  func.func @_vone_mm1_kernel(%arg0: i32, %arg1: memref<256x147xbf16, #tpu.memory_space<vmem>>, %arg2: memref<147x32xbf16, #tpu.memory_space<vmem>>, %arg3: memref<256x16xf32, #tpu.memory_space<vmem>>, %arg4: memref<256x16xbf16, #tpu.memory_space<vmem>>) attributes {dimension_semantics = [#tpu.dimension_semantics<parallel>], iteration_bounds = array<i64: 2>, scalar_prefetch = 0 : i64, scratch_operands = 0 : i64, tpu.core_type = #tpu.core_type<tc>, window_params = [{transform_indices = @transform_0, window_bounds = array<i64: 256, 147>}, {pipeline_mode = #tpu.pipeline_mode<synchronous>, transform_indices = @transform_1, window_bounds = array<i64: 147, 32>}, {transform_indices = @transform_2, window_bounds = array<i64: 256, 16>}, {transform_indices = @transform_3, window_bounds = array<i64: 256, 16>}]} {
    %c0 = arith.constant 0 : index
    %c0_0 = arith.constant 0 : index
    %0 = vector.load %arg1[%c0, %c0_0] : memref<256x147xbf16, #tpu.memory_space<vmem>>, vector<256x147xbf16>
    %c0_1 = arith.constant 0 : index
    %c0_2 = arith.constant 0 : index
    %1 = vector.load %arg2[%c0_1, %c0_2] : memref<147x32xbf16, #tpu.memory_space<vmem>>, vector<147x32xbf16>
    %cst = arith.constant dense<0.000000e+00> : vector<256x32xf32>
    %2 = tpu.matmul %0, %1, %cst {dimension_numbers = #tpu.dot_dimension_numbers<[1], [0], [0], [1], [0, 0, 1, 1], [], []>} : vector<256x147xbf16>, vector<147x32xbf16>, vector<256x32xf32> -> vector<256x32xf32>
    %c0_3 = arith.constant 0 : index
    %c0_4 = arith.constant 0 : index
    %3 = vector.load %arg3[%c0_3, %c0_4] : memref<256x16xf32, #tpu.memory_space<vmem>>, vector<256x16xf32>
    %4 = vector.extract_strided_slice %2 {offsets = [0, 0], sizes = [256, 16], strides = [1, 1]} : vector<256x32xf32> to vector<256x16xf32>
    %5 = vector.extract_strided_slice %2 {offsets = [0, 16], sizes = [256, 16], strides = [1, 1]} : vector<256x32xf32> to vector<256x16xf32>
    %6 = tpu.iota {dimensions = array<i32: 1>} : vector<256x16xi32>
    %cst_5 = arith.constant 0.000000e+00 : f32
    %7 = vector.broadcast %cst_5 : f32 to vector<256x16xf32>
    %8 = arith.maximumf %4, %7 : vector<256x16xf32>
    %9 = arith.mulf %4, %4 : vector<256x16xf32>
    %10 = arith.mulf %5, %5 : vector<256x16xf32>
    %11 = arith.addf %9, %10 : vector<256x16xf32>
    %12 = math.sqrt %11 : vector<256x16xf32>
    %cst_6 = arith.constant 0.707106769 : f32
    %13 = vector.broadcast %cst_6 : f32 to vector<256x16xf32>
    %14 = arith.mulf %12, %13 : vector<256x16xf32>
    %c8_i32 = arith.constant 8 : i32
    %15 = vector.broadcast %c8_i32 : i32 to vector<256x16xi32>
    %16 = arith.cmpi slt, %6, %15 : vector<256x16xi32>
    %17 = arith.select %16, %8, %14 : vector<256x16xi1>, vector<256x16xf32>
    %cst_7 = arith.constant 2.500000e+01 : f32
    %18 = vector.broadcast %cst_7 : f32 to vector<256x16xf32>
    %19 = arith.mulf %18, %17 : vector<256x16xf32>
    %cst_8 = arith.constant 3.500000e-01 : f32
    %20 = vector.broadcast %cst_8 : f32 to vector<256x16xf32>
    %21 = arith.mulf %19, %20 : vector<256x16xf32>
    %cst_9 = arith.constant 7.000000e-02 : f32
    %22 = vector.broadcast %cst_9 : f32 to vector<256x16xf32>
    %23 = arith.addf %21, %22 : vector<256x16xf32>
    %cst_10 = arith.constant 0.000000e+00 : f32
    %24 = vector.broadcast %cst_10 : f32 to vector<256x16xf32>
    %25 = arith.maximumf %23, %24 : vector<256x16xf32>
    %cst_11 = arith.constant 9.99999974E-5 : f32
    %26 = vector.broadcast %cst_11 : f32 to vector<256x16xf32>
    %27 = arith.addf %25, %26 : vector<256x16xf32>
    %28 = math.sqrt %27 : vector<256x16xf32>
    %29 = arith.mulf %3, %28 : vector<256x16xf32>
    %30 = arith.addf %23, %29 : vector<256x16xf32>
    %cst_12 = arith.constant 7.000000e-02 : f32
    %31 = vector.broadcast %cst_12 : f32 to vector<256x16xf32>
    %32 = arith.subf %30, %31 : vector<256x16xf32>
    %cst_13 = arith.constant 2.85714293 : f32
    %33 = vector.broadcast %cst_13 : f32 to vector<256x16xf32>
    %34 = arith.mulf %32, %33 : vector<256x16xf32>
    %cst_14 = arith.constant 0.000000e+00 : f32
    %35 = vector.broadcast %cst_14 : f32 to vector<256x16xf32>
    %36 = arith.maximumf %34, %35 : vector<256x16xf32>
    %37 = arith.truncf %36 : vector<256x16xf32> to vector<256x16xbf16>
    %c0_15 = arith.constant 0 : index
    %c0_16 = arith.constant 0 : index
    %38 = vector.load %arg4[%c0_15, %c0_16] : memref<256x16xbf16, #tpu.memory_space<vmem>>, vector<256x16xbf16>
    tpu.vector_store %arg4[%c0_15, %c0_16], %37 {strides = array<i32>} : memref<256x16xbf16, #tpu.memory_space<vmem>>, vector<256x16xbf16>,
    return
  }
  func.func @transform_0(%arg0: i32) -> (i32, i32) {
    %c0_i32 = arith.constant 0 : i32
    %c0_i32_0 = arith.constant 0 : i32
    return %arg0, %c0_i32 : i32, i32
  }
  func.func @transform_1(%arg0: i32) -> (i32, i32) {
    %c0_i32 = arith.constant 0 : i32
    %c0_i32_0 = arith.constant 0 : i32
    %c0_i32_1 = arith.constant 0 : i32
    return %c0_i32, %c0_i32_0 : i32, i32
  }
  func.func @transform_2(%arg0: i32) -> (i32, i32) {
    %c0_i32 = arith.constant 0 : i32
    %c0_i32_0 = arith.constant 0 : i32
    return %arg0, %c0_i32 : i32, i32
  }
  func.func @transform_3(%arg0: i32) -> (i32, i32) {
    %c0_i32 = arith.constant 0 : i32
    %c0_i32_0 = arith.constant 0 : i32
    return %arg0, %c0_i32 : i32, i32
  }
}

module attributes {stable_mosaic.version = 11 : i64} {
  func.func @_mm1_bias_kernel(%arg0: i32, %arg1: memref<256x16xbf16, #tpu.memory_space<vmem>>, %arg2: memref<16x8xbf16, #tpu.memory_space<vmem>>, %arg3: memref<1x8xf32, #tpu.memory_space<vmem>>, %arg4: memref<256x8xbf16, #tpu.memory_space<vmem>>) attributes {dimension_semantics = [#tpu.dimension_semantics<parallel>], iteration_bounds = array<i64: 2>, scalar_prefetch = 0 : i64, scratch_operands = 0 : i64, tpu.core_type = #tpu.core_type<tc>, window_params = [{transform_indices = @transform_0, window_bounds = array<i64: 256, 16>}, {pipeline_mode = #tpu.pipeline_mode<synchronous>, transform_indices = @transform_1, window_bounds = array<i64: 16, 8>}, {pipeline_mode = #tpu.pipeline_mode<synchronous>, transform_indices = @transform_2, window_bounds = array<i64: 1, 8>}, {transform_indices = @transform_3, window_bounds = array<i64: 256, 8>}]} {
    %c0 = arith.constant 0 : index
    %c0_0 = arith.constant 0 : index
    %0 = vector.load %arg1[%c0, %c0_0] : memref<256x16xbf16, #tpu.memory_space<vmem>>, vector<256x16xbf16>
    %c0_1 = arith.constant 0 : index
    %c0_2 = arith.constant 0 : index
    %1 = vector.load %arg2[%c0_1, %c0_2] : memref<16x8xbf16, #tpu.memory_space<vmem>>, vector<16x8xbf16>
    %cst = arith.constant dense<0.000000e+00> : vector<256x8xf32>
    %2 = tpu.matmul %0, %1, %cst {dimension_numbers = #tpu.dot_dimension_numbers<[1], [0], [0], [1], [0, 0, 1, 1], [], []>} : vector<256x16xbf16>, vector<16x8xbf16>, vector<256x8xf32> -> vector<256x8xf32>
    %c0_3 = arith.constant 0 : index
    %c0_4 = arith.constant 0 : index
    %3 = vector.load %arg3[%c0_3, %c0_4] : memref<1x8xf32, #tpu.memory_space<vmem>>, vector<1x8xf32>
    %4 = vector.broadcast %3 : vector<1x8xf32> to vector<256x8xf32>
    %5 = arith.addf %2, %4 : vector<256x8xf32>
    %6 = arith.truncf %5 : vector<256x8xf32> to vector<256x8xbf16>
    %c0_5 = arith.constant 0 : index
    %c0_6 = arith.constant 0 : index
    %7 = vector.load %arg4[%c0_5, %c0_6] : memref<256x8xbf16, #tpu.memory_space<vmem>>, vector<256x8xbf16>
    tpu.vector_store %arg4[%c0_5, %c0_6], %6 {strides = array<i32>} : memref<256x8xbf16, #tpu.memory_space<vmem>>, vector<256x8xbf16>,
    return
  }
  func.func @transform_0(%arg0: i32) -> (i32, i32) {
    %c0_i32 = arith.constant 0 : i32
    %c0_i32_0 = arith.constant 0 : i32
    return %arg0, %c0_i32 : i32, i32
  }
  func.func @transform_1(%arg0: i32) -> (i32, i32) {
    %c0_i32 = arith.constant 0 : i32
    %c0_i32_0 = arith.constant 0 : i32
    %c0_i32_1 = arith.constant 0 : i32
    return %c0_i32, %c0_i32_0 : i32, i32
  }
  func.func @transform_2(%arg0: i32) -> (i32, i32) {
    %c0_i32 = arith.constant 0 : i32
    %c0_i32_0 = arith.constant 0 : i32
    %c0_i32_1 = arith.constant 0 : i32
    return %c0_i32, %c0_i32_0 : i32, i32
  }
  func.func @transform_3(%arg0: i32) -> (i32, i32) {
    %c0_i32 = arith.constant 0 : i32
    %c0_i32_0 = arith.constant 0 : i32
    return %arg0, %c0_i32 : i32, i32
  }
}

module attributes {stable_mosaic.version = 11 : i64} {
  func.func @_maxpool_kernel(%arg0: i32, %arg1: memref<1x18x18x8xbf16, #tpu.memory_space<vmem>>, %arg2: memref<1x8x8x8xbf16, #tpu.memory_space<vmem>>) attributes {dimension_semantics = [#tpu.dimension_semantics<parallel>], iteration_bounds = array<i64: 2>, scalar_prefetch = 0 : i64, scratch_operands = 0 : i64, tpu.core_type = #tpu.core_type<tc>, window_params = [{transform_indices = @transform_0, window_bounds = array<i64: 1, 18, 18, 8>}, {transform_indices = @transform_1, window_bounds = array<i64: 1, 8, 8, 8>}]} {
    %c0 = arith.constant 0 : index
    %c0_0 = arith.constant 0 : index
    %c0_1 = arith.constant 0 : index
    %c0_2 = arith.constant 0 : index
    %0 = vector.load %arg1[%c0, %c0_0, %c0_1, %c0_2] : memref<1x18x18x8xbf16, #tpu.memory_space<vmem>>, vector<1x18x18x8xbf16>
    %1 = vector.shape_cast %0 : vector<1x18x18x8xbf16> to vector<18x18x8xbf16>
    %2 = vector.extract_strided_slice %1 {offsets = [0, 0, 0], sizes = [18, 16, 8], strides = [1, 1, 1]} : vector<18x18x8xbf16> to vector<18x16x8xbf16>
    %3 = vector.extract_strided_slice %1 {offsets = [0, 1, 0], sizes = [18, 16, 8], strides = [1, 1, 1]} : vector<18x18x8xbf16> to vector<18x16x8xbf16>
    %4 = arith.maximumf %2, %3 : vector<18x16x8xbf16>
    %5 = vector.extract_strided_slice %1 {offsets = [0, 2, 0], sizes = [18, 16, 8], strides = [1, 1, 1]} : vector<18x18x8xbf16> to vector<18x16x8xbf16>
    %6 = arith.maximumf %4, %5 : vector<18x16x8xbf16>
    %7 = vector.extract_strided_slice %6 {offsets = [0, 0, 0], sizes = [16, 16, 8], strides = [1, 1, 1]} : vector<18x16x8xbf16> to vector<16x16x8xbf16>
    %8 = vector.extract_strided_slice %6 {offsets = [1, 0, 0], sizes = [16, 16, 8], strides = [1, 1, 1]} : vector<18x16x8xbf16> to vector<16x16x8xbf16>
    %9 = arith.maximumf %7, %8 : vector<16x16x8xbf16>
    %10 = vector.extract_strided_slice %6 {offsets = [2, 0, 0], sizes = [16, 16, 8], strides = [1, 1, 1]} : vector<18x16x8xbf16> to vector<16x16x8xbf16>
    %11 = arith.maximumf %9, %10 : vector<16x16x8xbf16>
    %12 = vector.shape_cast %11 : vector<16x16x8xbf16> to vector<8x2x8x2x8xbf16>
    %13 = vector.extract_strided_slice %12 {offsets = [0, 0, 0, 0, 0], sizes = [8, 1, 8, 1, 8], strides = [1, 1, 1, 1, 1]} : vector<8x2x8x2x8xbf16> to vector<8x1x8x1x8xbf16>
    %14 = vector.shape_cast %13 : vector<8x1x8x1x8xbf16> to vector<8x8x8xbf16>
    %c0_3 = arith.constant 0 : index
    %c0_4 = arith.constant 0 : index
    %c0_5 = arith.constant 0 : index
    %c0_6 = arith.constant 0 : index
    %15 = vector.load %arg2[%c0_3, %c0_4, %c0_5, %c0_6] : memref<1x8x8x8xbf16, #tpu.memory_space<vmem>>, vector<1x8x8x8xbf16>
    %16 = vector.shape_cast %15 : vector<1x8x8x8xbf16> to vector<8x8x8xbf16>
    %17 = vector.shape_cast %14 : vector<8x8x8xbf16> to vector<1x8x8x8xbf16>
    tpu.vector_store %arg2[%c0_3, %c0_4, %c0_5, %c0_6], %17 {strides = array<i32>} : memref<1x8x8x8xbf16, #tpu.memory_space<vmem>>, vector<1x8x8x8xbf16>,
    return
  }
  func.func @transform_0(%arg0: i32) -> (i32, i32, i32, i32) {
    %c0_i32 = arith.constant 0 : i32
    %c0_i32_0 = arith.constant 0 : i32
    %c0_i32_1 = arith.constant 0 : i32
    %c0_i32_2 = arith.constant 0 : i32
    return %arg0, %c0_i32, %c0_i32_0, %c0_i32_1 : i32, i32, i32, i32
  }
  func.func @transform_1(%arg0: i32) -> (i32, i32, i32, i32) {
    %c0_i32 = arith.constant 0 : i32
    %c0_i32_0 = arith.constant 0 : i32
    %c0_i32_1 = arith.constant 0 : i32
    %c0_i32_2 = arith.constant 0 : i32
    return %arg0, %c0_i32, %c0_i32_0, %c0_i32_1 : i32, i32, i32, i32
  }
}

module attributes {stable_mosaic.version = 11 : i64} {
  func.func @_mm1_bias_chanrelu_kernel(%arg0: i32, %arg1: memref<64x8xbf16, #tpu.memory_space<vmem>>, %arg2: memref<8x40xbf16, #tpu.memory_space<vmem>>, %arg3: memref<1x40xf32, #tpu.memory_space<vmem>>, %arg4: memref<1x40xf32, #tpu.memory_space<vmem>>, %arg5: memref<64x40xbf16, #tpu.memory_space<vmem>>) attributes {dimension_semantics = [#tpu.dimension_semantics<parallel>], iteration_bounds = array<i64: 2>, scalar_prefetch = 0 : i64, scratch_operands = 0 : i64, tpu.core_type = #tpu.core_type<tc>, window_params = [{transform_indices = @transform_0, window_bounds = array<i64: 64, 8>}, {pipeline_mode = #tpu.pipeline_mode<synchronous>, transform_indices = @transform_1, window_bounds = array<i64: 8, 40>}, {pipeline_mode = #tpu.pipeline_mode<synchronous>, transform_indices = @transform_2, window_bounds = array<i64: 1, 40>}, {pipeline_mode = #tpu.pipeline_mode<synchronous>, transform_indices = @transform_3, window_bounds = array<i64: 1, 40>}, {transform_indices = @transform_4, window_bounds = array<i64: 64, 40>}]} {
    %c0 = arith.constant 0 : index
    %c0_0 = arith.constant 0 : index
    %0 = vector.load %arg1[%c0, %c0_0] : memref<64x8xbf16, #tpu.memory_space<vmem>>, vector<64x8xbf16>
    %c0_1 = arith.constant 0 : index
    %c0_2 = arith.constant 0 : index
    %1 = vector.load %arg2[%c0_1, %c0_2] : memref<8x40xbf16, #tpu.memory_space<vmem>>, vector<8x40xbf16>
    %cst = arith.constant dense<0.000000e+00> : vector<64x40xf32>
    %2 = tpu.matmul %0, %1, %cst {dimension_numbers = #tpu.dot_dimension_numbers<[1], [0], [0], [1], [0, 0, 1, 1], [], []>} : vector<64x8xbf16>, vector<8x40xbf16>, vector<64x40xf32> -> vector<64x40xf32>
    %c0_3 = arith.constant 0 : index
    %c0_4 = arith.constant 0 : index
    %3 = vector.load %arg3[%c0_3, %c0_4] : memref<1x40xf32, #tpu.memory_space<vmem>>, vector<1x40xf32>
    %4 = vector.broadcast %3 : vector<1x40xf32> to vector<64x40xf32>
    %5 = arith.addf %2, %4 : vector<64x40xf32>
    %c0_5 = arith.constant 0 : index
    %c0_6 = arith.constant 0 : index
    %6 = vector.load %arg4[%c0_5, %c0_6] : memref<1x40xf32, #tpu.memory_space<vmem>>, vector<1x40xf32>
    %cst_7 = arith.constant 5.000000e-01 : f32
    %7 = vector.broadcast %cst_7 : f32 to vector<1x40xf32>
    %8 = arith.cmpf ogt, %6, %7 : vector<1x40xf32>
    %cst_8 = arith.constant 0.000000e+00 : f32
    %9 = vector.broadcast %cst_8 : f32 to vector<64x40xf32>
    %10 = arith.maximumf %5, %9 : vector<64x40xf32>
    %11 = vector.shape_cast %8 : vector<1x40xi1> to vector<1x40xi1>
    %12 = vector.broadcast %11 : vector<1x40xi1> to vector<64x40xi1>
    %13 = arith.select %12, %10, %5 : vector<64x40xi1>, vector<64x40xf32>
    %14 = arith.truncf %13 : vector<64x40xf32> to vector<64x40xbf16>
    %c0_9 = arith.constant 0 : index
    %c0_10 = arith.constant 0 : index
    %15 = vector.load %arg5[%c0_9, %c0_10] : memref<64x40xbf16, #tpu.memory_space<vmem>>, vector<64x40xbf16>
    tpu.vector_store %arg5[%c0_9, %c0_10], %14 {strides = array<i32>} : memref<64x40xbf16, #tpu.memory_space<vmem>>, vector<64x40xbf16>,
    return
  }
  func.func @transform_0(%arg0: i32) -> (i32, i32) {
    %c0_i32 = arith.constant 0 : i32
    %c0_i32_0 = arith.constant 0 : i32
    return %arg0, %c0_i32 : i32, i32
  }
  func.func @transform_1(%arg0: i32) -> (i32, i32) {
    %c0_i32 = arith.constant 0 : i32
    %c0_i32_0 = arith.constant 0 : i32
    %c0_i32_1 = arith.constant 0 : i32
    return %c0_i32, %c0_i32_0 : i32, i32
  }
  func.func @transform_2(%arg0: i32) -> (i32, i32) {
    %c0_i32 = arith.constant 0 : i32
    %c0_i32_0 = arith.constant 0 : i32
    %c0_i32_1 = arith.constant 0 : i32
    return %c0_i32, %c0_i32_0 : i32, i32
  }
  func.func @transform_3(%arg0: i32) -> (i32, i32) {
    %c0_i32 = arith.constant 0 : i32
    %c0_i32_0 = arith.constant 0 : i32
    %c0_i32_1 = arith.constant 0 : i32
    return %c0_i32, %c0_i32_0 : i32, i32
  }
  func.func @transform_4(%arg0: i32) -> (i32, i32) {
    %c0_i32 = arith.constant 0 : i32
    %c0_i32_0 = arith.constant 0 : i32
    return %arg0, %c0_i32 : i32, i32
  }
}

module attributes {stable_mosaic.version = 11 : i64} {
  func.func @_mm1_bias_kernel(%arg0: i32, %arg1: memref<64x72xbf16, #tpu.memory_space<vmem>>, %arg2: memref<72x8xbf16, #tpu.memory_space<vmem>>, %arg3: memref<1x8xf32, #tpu.memory_space<vmem>>, %arg4: memref<64x8xbf16, #tpu.memory_space<vmem>>) attributes {dimension_semantics = [#tpu.dimension_semantics<parallel>], iteration_bounds = array<i64: 2>, scalar_prefetch = 0 : i64, scratch_operands = 0 : i64, tpu.core_type = #tpu.core_type<tc>, window_params = [{transform_indices = @transform_0, window_bounds = array<i64: 64, 72>}, {pipeline_mode = #tpu.pipeline_mode<synchronous>, transform_indices = @transform_1, window_bounds = array<i64: 72, 8>}, {pipeline_mode = #tpu.pipeline_mode<synchronous>, transform_indices = @transform_2, window_bounds = array<i64: 1, 8>}, {transform_indices = @transform_3, window_bounds = array<i64: 64, 8>}]} {
    %c0 = arith.constant 0 : index
    %c0_0 = arith.constant 0 : index
    %0 = vector.load %arg1[%c0, %c0_0] : memref<64x72xbf16, #tpu.memory_space<vmem>>, vector<64x72xbf16>
    %c0_1 = arith.constant 0 : index
    %c0_2 = arith.constant 0 : index
    %1 = vector.load %arg2[%c0_1, %c0_2] : memref<72x8xbf16, #tpu.memory_space<vmem>>, vector<72x8xbf16>
    %cst = arith.constant dense<0.000000e+00> : vector<64x8xf32>
    %2 = tpu.matmul %0, %1, %cst {dimension_numbers = #tpu.dot_dimension_numbers<[1], [0], [0], [1], [0, 0, 1, 1], [], []>} : vector<64x72xbf16>, vector<72x8xbf16>, vector<64x8xf32> -> vector<64x8xf32>
    %c0_3 = arith.constant 0 : index
    %c0_4 = arith.constant 0 : index
    %3 = vector.load %arg3[%c0_3, %c0_4] : memref<1x8xf32, #tpu.memory_space<vmem>>, vector<1x8xf32>
    %4 = vector.broadcast %3 : vector<1x8xf32> to vector<64x8xf32>
    %5 = arith.addf %2, %4 : vector<64x8xf32>
    %cst_5 = arith.constant 0.000000e+00 : f32
    %6 = vector.broadcast %cst_5 : f32 to vector<64x8xf32>
    %7 = arith.maximumf %5, %6 : vector<64x8xf32>
    %8 = arith.truncf %7 : vector<64x8xf32> to vector<64x8xbf16>
    %c0_6 = arith.constant 0 : index
    %c0_7 = arith.constant 0 : index
    %9 = vector.load %arg4[%c0_6, %c0_7] : memref<64x8xbf16, #tpu.memory_space<vmem>>, vector<64x8xbf16>
    tpu.vector_store %arg4[%c0_6, %c0_7], %8 {strides = array<i32>} : memref<64x8xbf16, #tpu.memory_space<vmem>>, vector<64x8xbf16>,
    return
  }
  func.func @transform_0(%arg0: i32) -> (i32, i32) {
    %c0_i32 = arith.constant 0 : i32
    %c0_i32_0 = arith.constant 0 : i32
    return %arg0, %c0_i32 : i32, i32
  }
  func.func @transform_1(%arg0: i32) -> (i32, i32) {
    %c0_i32 = arith.constant 0 : i32
    %c0_i32_0 = arith.constant 0 : i32
    %c0_i32_1 = arith.constant 0 : i32
    return %c0_i32, %c0_i32_0 : i32, i32
  }
  func.func @transform_2(%arg0: i32) -> (i32, i32) {
    %c0_i32 = arith.constant 0 : i32
    %c0_i32_0 = arith.constant 0 : i32
    %c0_i32_1 = arith.constant 0 : i32
    return %c0_i32, %c0_i32_0 : i32, i32
  }
  func.func @transform_3(%arg0: i32) -> (i32, i32) {
    %c0_i32 = arith.constant 0 : i32
    %c0_i32_0 = arith.constant 0 : i32
    return %arg0, %c0_i32 : i32, i32
  }
}

module attributes {stable_mosaic.version = 11 : i64} {
  func.func @_mm1_bias_res_relu_kernel(%arg0: i32, %arg1: memref<64x8xbf16, #tpu.memory_space<vmem>>, %arg2: memref<8x32xbf16, #tpu.memory_space<vmem>>, %arg3: memref<1x32xf32, #tpu.memory_space<vmem>>, %arg4: memref<64x32xbf16, #tpu.memory_space<vmem>>, %arg5: memref<64x32xbf16, #tpu.memory_space<vmem>>) attributes {dimension_semantics = [#tpu.dimension_semantics<parallel>], iteration_bounds = array<i64: 2>, scalar_prefetch = 0 : i64, scratch_operands = 0 : i64, tpu.core_type = #tpu.core_type<tc>, window_params = [{transform_indices = @transform_0, window_bounds = array<i64: 64, 8>}, {pipeline_mode = #tpu.pipeline_mode<synchronous>, transform_indices = @transform_1, window_bounds = array<i64: 8, 32>}, {pipeline_mode = #tpu.pipeline_mode<synchronous>, transform_indices = @transform_2, window_bounds = array<i64: 1, 32>}, {transform_indices = @transform_3, window_bounds = array<i64: 64, 32>}, {transform_indices = @transform_4, window_bounds = array<i64: 64, 32>}]} {
    %c0 = arith.constant 0 : index
    %c0_0 = arith.constant 0 : index
    %0 = vector.load %arg1[%c0, %c0_0] : memref<64x8xbf16, #tpu.memory_space<vmem>>, vector<64x8xbf16>
    %c0_1 = arith.constant 0 : index
    %c0_2 = arith.constant 0 : index
    %1 = vector.load %arg2[%c0_1, %c0_2] : memref<8x32xbf16, #tpu.memory_space<vmem>>, vector<8x32xbf16>
    %cst = arith.constant dense<0.000000e+00> : vector<64x32xf32>
    %2 = tpu.matmul %0, %1, %cst {dimension_numbers = #tpu.dot_dimension_numbers<[1], [0], [0], [1], [0, 0, 1, 1], [], []>} : vector<64x8xbf16>, vector<8x32xbf16>, vector<64x32xf32> -> vector<64x32xf32>
    %c0_3 = arith.constant 0 : index
    %c0_4 = arith.constant 0 : index
    %3 = vector.load %arg3[%c0_3, %c0_4] : memref<1x32xf32, #tpu.memory_space<vmem>>, vector<1x32xf32>
    %4 = vector.broadcast %3 : vector<1x32xf32> to vector<64x32xf32>
    %5 = arith.addf %2, %4 : vector<64x32xf32>
    %c0_5 = arith.constant 0 : index
    %c0_6 = arith.constant 0 : index
    %6 = vector.load %arg4[%c0_5, %c0_6] : memref<64x32xbf16, #tpu.memory_space<vmem>>, vector<64x32xbf16>
    %7 = arith.extf %6 : vector<64x32xbf16> to vector<64x32xf32>
    %8 = arith.addf %5, %7 : vector<64x32xf32>
    %cst_7 = arith.constant 0.000000e+00 : f32
    %9 = vector.broadcast %cst_7 : f32 to vector<64x32xf32>
    %10 = arith.maximumf %8, %9 : vector<64x32xf32>
    %11 = arith.truncf %10 : vector<64x32xf32> to vector<64x32xbf16>
    %c0_8 = arith.constant 0 : index
    %c0_9 = arith.constant 0 : index
    %12 = vector.load %arg5[%c0_8, %c0_9] : memref<64x32xbf16, #tpu.memory_space<vmem>>, vector<64x32xbf16>
    tpu.vector_store %arg5[%c0_8, %c0_9], %11 {strides = array<i32>} : memref<64x32xbf16, #tpu.memory_space<vmem>>, vector<64x32xbf16>,
    return
  }
  func.func @transform_0(%arg0: i32) -> (i32, i32) {
    %c0_i32 = arith.constant 0 : i32
    %c0_i32_0 = arith.constant 0 : i32
    return %arg0, %c0_i32 : i32, i32
  }
  func.func @transform_1(%arg0: i32) -> (i32, i32) {
    %c0_i32 = arith.constant 0 : i32
    %c0_i32_0 = arith.constant 0 : i32
    %c0_i32_1 = arith.constant 0 : i32
    return %c0_i32, %c0_i32_0 : i32, i32
  }
  func.func @transform_2(%arg0: i32) -> (i32, i32) {
    %c0_i32 = arith.constant 0 : i32
    %c0_i32_0 = arith.constant 0 : i32
    %c0_i32_1 = arith.constant 0 : i32
    return %c0_i32, %c0_i32_0 : i32, i32
  }
  func.func @transform_3(%arg0: i32) -> (i32, i32) {
    %c0_i32 = arith.constant 0 : i32
    %c0_i32_0 = arith.constant 0 : i32
    return %arg0, %c0_i32 : i32, i32
  }
  func.func @transform_4(%arg0: i32) -> (i32, i32) {
    %c0_i32 = arith.constant 0 : i32
    %c0_i32_0 = arith.constant 0 : i32
    return %arg0, %c0_i32 : i32, i32
  }
}

module attributes {stable_mosaic.version = 11 : i64} {
  func.func @_mm1_bias_kernel(%arg0: i32, %arg1: memref<64x32xbf16, #tpu.memory_space<vmem>>, %arg2: memref<32x8xbf16, #tpu.memory_space<vmem>>, %arg3: memref<1x8xf32, #tpu.memory_space<vmem>>, %arg4: memref<64x8xbf16, #tpu.memory_space<vmem>>) attributes {dimension_semantics = [#tpu.dimension_semantics<parallel>], iteration_bounds = array<i64: 2>, scalar_prefetch = 0 : i64, scratch_operands = 0 : i64, tpu.core_type = #tpu.core_type<tc>, window_params = [{transform_indices = @transform_0, window_bounds = array<i64: 64, 32>}, {pipeline_mode = #tpu.pipeline_mode<synchronous>, transform_indices = @transform_1, window_bounds = array<i64: 32, 8>}, {pipeline_mode = #tpu.pipeline_mode<synchronous>, transform_indices = @transform_2, window_bounds = array<i64: 1, 8>}, {transform_indices = @transform_3, window_bounds = array<i64: 64, 8>}]} {
    %c0 = arith.constant 0 : index
    %c0_0 = arith.constant 0 : index
    %0 = vector.load %arg1[%c0, %c0_0] : memref<64x32xbf16, #tpu.memory_space<vmem>>, vector<64x32xbf16>
    %c0_1 = arith.constant 0 : index
    %c0_2 = arith.constant 0 : index
    %1 = vector.load %arg2[%c0_1, %c0_2] : memref<32x8xbf16, #tpu.memory_space<vmem>>, vector<32x8xbf16>
    %cst = arith.constant dense<0.000000e+00> : vector<64x8xf32>
    %2 = tpu.matmul %0, %1, %cst {dimension_numbers = #tpu.dot_dimension_numbers<[1], [0], [0], [1], [0, 0, 1, 1], [], []>} : vector<64x32xbf16>, vector<32x8xbf16>, vector<64x8xf32> -> vector<64x8xf32>
    %c0_3 = arith.constant 0 : index
    %c0_4 = arith.constant 0 : index
    %3 = vector.load %arg3[%c0_3, %c0_4] : memref<1x8xf32, #tpu.memory_space<vmem>>, vector<1x8xf32>
    %4 = vector.broadcast %3 : vector<1x8xf32> to vector<64x8xf32>
    %5 = arith.addf %2, %4 : vector<64x8xf32>
    %cst_5 = arith.constant 0.000000e+00 : f32
    %6 = vector.broadcast %cst_5 : f32 to vector<64x8xf32>
    %7 = arith.maximumf %5, %6 : vector<64x8xf32>
    %8 = arith.truncf %7 : vector<64x8xf32> to vector<64x8xbf16>
    %c0_6 = arith.constant 0 : index
    %c0_7 = arith.constant 0 : index
    %9 = vector.load %arg4[%c0_6, %c0_7] : memref<64x8xbf16, #tpu.memory_space<vmem>>, vector<64x8xbf16>
    tpu.vector_store %arg4[%c0_6, %c0_7], %8 {strides = array<i32>} : memref<64x8xbf16, #tpu.memory_space<vmem>>, vector<64x8xbf16>,
    return
  }
  func.func @transform_0(%arg0: i32) -> (i32, i32) {
    %c0_i32 = arith.constant 0 : i32
    %c0_i32_0 = arith.constant 0 : i32
    return %arg0, %c0_i32 : i32, i32
  }
  func.func @transform_1(%arg0: i32) -> (i32, i32) {
    %c0_i32 = arith.constant 0 : i32
    %c0_i32_0 = arith.constant 0 : i32
    %c0_i32_1 = arith.constant 0 : i32
    return %c0_i32, %c0_i32_0 : i32, i32
  }
  func.func @transform_2(%arg0: i32) -> (i32, i32) {
    %c0_i32 = arith.constant 0 : i32
    %c0_i32_0 = arith.constant 0 : i32
    %c0_i32_1 = arith.constant 0 : i32
    return %c0_i32, %c0_i32_0 : i32, i32
  }
  func.func @transform_3(%arg0: i32) -> (i32, i32) {
    %c0_i32 = arith.constant 0 : i32
    %c0_i32_0 = arith.constant 0 : i32
    return %arg0, %c0_i32 : i32, i32
  }
}

</mosaic_0001>

<llo_original>
// kernel: _lambda_.13
$region0: #{_lambda_.13}
  #allocation0 [shape = 'u32[]', space=smem, size = 0x4, offset = 0x4, fixed_abs, tag = 'smem constant byte address 0x4 - core index']
  #allocation1 [shape = 'u32[72,128]{1,0:T(1,128)}', space=vmem, size = 0x9000, scoped, tag = 'internal scratch']
  %s0 = inlined_call_operand.vmem [shape: bf16[512,16], index: 0, kind: input, shape index: {}]
  %s1 = inlined_call_operand.vmem [shape: bf16[16,8], index: 1, kind: input, shape index: {}]
  %s2 = inlined_call_operand.vmem [shape: f32[1,8], index: 2, kind: input, shape index: {}]
  %s3 = inlined_call_operand.vmem [shape: bf16[512,8], index: 3, kind: output, shape index: {}]
  %s4 = sld [smem:[#allocation0]]
  $region45: #{_lambda_.13} parent=0
    _
  %s6 = ssub.s32 1, %s4
  %s7 = scalar_select 0, %s6, %s4
  loop: start=0, step=1, limit=4
  $region2: #{_lambda_.13} parent=0 // loop_pre_header
    _
  $region3: #{_lambda_.13} parent=0 // loop_header
    %s9 = sphi 0, %s13
    %p10 = scmp.ge.s32.totalorder %s9, 4
    %s19 = sphi 0, %s21
    %s22 = sphi 0, %s19
    %s23 = sphi 0, %s22
    %s39 = sphi 0, %s23
    %s43 = sphi 0, %s43
    %s45 = sphi 0, %s43
    %s46 = sphi 0, %s45
    %s60 = sphi 0, %s46
    %s64 = sphi 0, %s64
    %s66 = sphi 0, %s64
    %s67 = sphi 0, %s66
    %s81 = sphi 0, %s67
    %s87 = sphi 0, %s89
    %s90 = sphi 0, %s87
    %s91 = sphi 0, %s90
    %s107 = sphi 0, %s91
  $region4: #{_lambda_.13} parent=0 // loop_header_branch
    %12 = sbr.rel (%p10) target = $region8
  $region5: #{_lambda_.13} parent=0 // loop_body
    %s14 = ssub.s32 %s9, 1
    %s15 = ssub.s32 %s9, 2
    %s16 = sadd.s32 %s9, 1
    %s17 = ssub.s32 %s9, %s16
    %p18 = scmp.eq.s32.totalorder %s17, 0
    %s20 = sadd.s32 %s19, 1
    %s21 = scalar_select %p18, %s19, %s20
    %p24 = pneg %p18
    %p25 = scmp.eq.s32.totalorder %s9, 1
    %p26 = por %p24, %p25
    %p27 = scmp.ne.s32.totalorder %s19, %s22
    %p28 = scmp.eq.s32.totalorder %s9, 0
    %p29 = por %p27, %p28
    %p30 = scmp.ne.s32.totalorder %s19, %s22
    %p31 = scmp.eq.s32.totalorder %s14, 1
    %p32 = por %p30, %p31
    %p33 = scmp.ne.s32.totalorder %s22, %s23
    %p34 = scmp.eq.s32.totalorder %s14, 0
    %p35 = por %p33, %p34
    %p36 = scmp.ne.s32.totalorder %s22, %s23
    %p37 = scmp.eq.s32.totalorder %s15, 1
    %p38 = por %p36, %p37
    %p40 = scmp.ne.s32.totalorder %s23, %s39
    %p41 = scmp.eq.s32.totalorder %s15, 0
    %p42 = por %p40, %p41
    %s44 = sadd.s32 %s43, 1
    %p47 = scmp.eq.s32.totalorder %s9, 1
    %p48 = scmp.ne.s32.totalorder %s43, %s45
    %p49 = scmp.eq.s32.totalorder %s9, 0
    %p50 = por %p48, %p49
    %p51 = scmp.ne.s32.totalorder %s43, %s45
    %p52 = scmp.eq.s32.totalorder %s14, 1
    %p53 = por %p51, %p52
    %p54 = scmp.ne.s32.totalorder %s45, %s46
    %p55 = scmp.eq.s32.totalorder %s14, 0
    %p56 = por %p54, %p55
    %p57 = scmp.ne.s32.totalorder %s45, %s46
    %p58 = scmp.eq.s32.totalorder %s15, 1
    %p59 = por %p57, %p58
    %p61 = scmp.ne.s32.totalorder %s46, %s60
    %p62 = scmp.eq.s32.totalorder %s15, 0
    %p63 = por %p61, %p62
    %s65 = sadd.s32 %s64, 1
    %p68 = scmp.eq.s32.totalorder %s9, 1
    %p69 = scmp.ne.s32.totalorder %s64, %s66
    %p70 = scmp.eq.s32.totalorder %s9, 0
    %p71 = por %p69, %p70
    %p72 = scmp.ne.s32.totalorder %s64, %s66
    %p73 = scmp.eq.s32.totalorder %s14, 1
    %p74 = por %p72, %p73
    %p75 = scmp.ne.s32.totalorder %s66, %s67
    %p76 = scmp.eq.s32.totalorder %s14, 0
    %p77 = por %p75, %p76
    %p78 = scmp.ne.s32.totalorder %s66, %s67
    %p79 = scmp.eq.s32.totalorder %s15, 1
    %p80 = por %p78, %p79
    %p82 = scmp.ne.s32.totalorder %s67, %s81
    %p83 = scmp.eq.s32.totalorder %s15, 0
    %p84 = por %p82, %p83
    %s85 = ssub.s32 %s9, %s16
    %p86 = scmp.eq.s32.totalorder %s85, 0
    %s88 = sadd.s32 %s87, 1
    %s89 = scalar_select %p86, %s87, %s88
    %p92 = pneg %p86
    %p93 = scmp.eq.s32.totalorder %s9, 1
    %p94 = por %p92, %p93
    %p95 = scmp.ne.s32.totalorder %s87, %s90
    %p96 = scmp.eq.s32.totalorder %s9, 0
    %p97 = por %p95, %p96
    %p98 = scmp.ne.s32.totalorder %s87, %s90
    %p99 = scmp.eq.s32.totalorder %s14, 1
    %p100 = por %p98, %p99
    %p101 = scmp.ne.s32.totalorder %s90, %s91
    %p102 = scmp.eq.s32.totalorder %s14, 0
    %p103 = por %p101, %p102
    %p104 = scmp.ne.s32.totalorder %s90, %s91
    %p105 = scmp.eq.s32.totalorder %s15, 1
    %p106 = por %p104, %p105
    %p108 = scmp.ne.s32.totalorder %s91, %s107
    %p109 = scmp.eq.s32.totalorder %s15, 0
    %p110 = por %p108, %p109
    %p111 = scmp.le.s32.totalorder 1, %s9
    %p112 = scmp.lt.s32.totalorder %s9, 3
    %p113 = pnand %p111, %p112
    %p114 = pneg %p113
    // Predicated region
    $region9: #{_lambda_.13} parent=5 // pred_check
      _
    $region10: #{_lambda_.13} parent=5 // pred_check_branch
      %116 = sbr.rel (%p113) target = $region12
    $region11: #{_lambda_.13} parent=5 // pred_region
      %s117 = ssub.s32 %s9, 1
      // Predicated region
      $region13: #{_lambda_.13} parent=11 // pred_check
        %p118 = pneg %p56
      $region14: #{_lambda_.13} parent=11 // pred_check_branch
        %120 = sbr.rel (%p118) target = $region16
      $region15: #{_lambda_.13} parent=11 // pred_region
        _
      $region16: #{_lambda_.13} parent=11 // pred_fallthru
        _
      // Predicated region
      $region17: #{_lambda_.13} parent=11 // pred_check
        %p121 = pneg %p77
      $region18: #{_lambda_.13} parent=11 // pred_check_branch
        %123 = sbr.rel (%p121) target = $region20
      $region19: #{_lambda_.13} parent=11 // pred_region
        _
      $region20: #{_lambda_.13} parent=11 // pred_fallthru
        _
    $region12: #{_lambda_.13} parent=5 // pred_fallthru
      _
    %p124 = scmp.lt.s32.totalorder %s9, 2
    // Predicated region
    $region21: #{_lambda_.13} parent=5 // pred_check
      %p125 = pneg %p124
    $region22: #{_lambda_.13} parent=5 // pred_check_branch
      %127 = sbr.rel (%p125) target = $region24
    $region23: #{_lambda_.13} parent=5 // pred_region
      // Predicated region
      $region25: #{_lambda_.13} parent=23 // pred_check
        %p128 = pneg %p29
      $region26: #{_lambda_.13} parent=23 // pred_check_branch
        %130 = sbr.rel (%p128) target = $region28
      $region27: #{_lambda_.13} parent=23 // pred_region
        %s131 = smul.u32 32, %s9
        %p132 = scmp.lt.s32.totalorder %s131, 63
        %s133 = scalar_select %p132, %s131, 63
        %s134 = smul.addr %s133, 4
        %s135 = scalar_lea.vmem %s0, %s134
        %s136 = smul.u32 32, %s9
      $region28: #{_lambda_.13} parent=23 // pred_fallthru
        _
    $region24: #{_lambda_.13} parent=5 // pred_fallthru
      _
    %p137 = scmp.le.s32.totalorder 1, %s9
    %p138 = scmp.lt.s32.totalorder %s9, 3
    %p139 = pnand %p137, %p138
    %p140 = pneg %p139
    // Predicated region
    $region29: #{_lambda_.13} parent=5 // pred_check
      _
    $region30: #{_lambda_.13} parent=5 // pred_check_branch
      %142 = sbr.rel (%p139) target = $region32
    $region31: #{_lambda_.13} parent=5 // pred_region
      %s143 = ssub.s32 %s9, 1
      %s144 = smul.u32 32, %s14
      %p145 = scmp.lt.s32.totalorder %s144, 63
      %s146 = scalar_select %p145, %s144, 63
      %s147 = smul.addr %s146, 4
      %s148 = scalar_lea.vmem %s0, %s147
      %p149 = pneg %p35
      %p150 = pneg %p32
      %p151 = pneg %p56
      %p152 = pneg %p53
      %p153 = pneg %p77
      %p154 = pneg %p74
      %p155 = pneg %p103
      %p156 = pneg %p100
      %s157 = smul.u32 32, %s14
      %p158 = scmp.lt.s32.totalorder %s157, 63
      %s159 = scalar_select %p158, %s157, 63
      %s160 = smul.addr %s159, 4
      %s161 = scalar_lea.vmem %s3, %s160
      %s162 = smul.u32 32, %s14
      %p163 = scmp.lt.s32.totalorder %s162, 63
      %s164 = scalar_select %p163, %s162, 63
      %s165 = smul.addr %s164, 4
      %s166 = scalar_lea.vmem %s0, %s165
      %s167 = smul.u32 32, %s14
      %s168 = smul.u32 32, %s14
      %p169 = scmp.lt.s32.totalorder %s168, 63
      %s170 = scalar_select %p169, %s168, 63
      %s171 = smul.addr %s170, 4
      %s172 = scalar_lea.vmem %s3, %s171
      %s173 = smul.u32 32, %s14
      %v175 = vld [vmem:[%s166] sm:$0xf]
      %v176 = vld [vmem:[%s166 + $0x4] sm:$0xf]
      %v177 = vld [vmem:[%s166 + $0x8] sm:$0xf]
      %v178 = vld [vmem:[%s166 + $0xc] sm:$0xf]
      %v179 = vld [vmem:[%s166 + $0x10] sm:$0xf]
      %v180 = vld [vmem:[%s166 + $0x14] sm:$0xf]
      %v181 = vld [vmem:[%s166 + $0x18] sm:$0xf]
      %v182 = vld [vmem:[%s166 + $0x1c] sm:$0xf]
      %v183 = vld [vmem:[%s166 + $0x20] sm:$0xf]
      %v184 = vld [vmem:[%s166 + $0x24] sm:$0xf]
      %v185 = vld [vmem:[%s166 + $0x28] sm:$0xf]
      %v186 = vld [vmem:[%s166 + $0x2c] sm:$0xf]
      %v187 = vld [vmem:[%s166 + $0x30] sm:$0xf]
      %v188 = vld [vmem:[%s166 + $0x34] sm:$0xf]
      %v189 = vld [vmem:[%s166 + $0x38] sm:$0xf]
      %v190 = vld [vmem:[%s166 + $0x3c] sm:$0xf]
      %v191 = vld [vmem:[%s166 + $0x40] sm:$0xf]
      %v192 = vld [vmem:[%s166 + $0x44] sm:$0xf]
      %v193 = vld [vmem:[%s166 + $0x48] sm:$0xf]
      %v194 = vld [vmem:[%s166 + $0x4c] sm:$0xf]
      %v195 = vld [vmem:[%s166 + $0x50] sm:$0xf]
      %v196 = vld [vmem:[%s166 + $0x54] sm:$0xf]
      %v197 = vld [vmem:[%s166 + $0x58] sm:$0xf]
      %v198 = vld [vmem:[%s166 + $0x5c] sm:$0xf]
      %v199 = vld [vmem:[%s166 + $0x60] sm:$0xf]
      %v200 = vld [vmem:[%s166 + $0x64] sm:$0xf]
      %v201 = vld [vmem:[%s166 + $0x68] sm:$0xf]
      %v202 = vld [vmem:[%s166 + $0x6c] sm:$0xf]
      %v203 = vld [vmem:[%s166 + $0x70] sm:$0xf]
      %v204 = vld [vmem:[%s166 + $0x74] sm:$0xf]
      %v205 = vld [vmem:[%s166 + $0x78] sm:$0xf]
      %v206 = vld [vmem:[%s166 + $0x7c] sm:$0xf]
      %v207 = vld [vmem:[%s1] sm:$0xf]
      %v208 = vld [vmem:[%s1 + $0x4] sm:$0xf]
      %v209 = vld [vmem:[%s2] sm:$0x1]
      %v211 = vperm.slane %v209, 0
      %v245 = vunpack.c.l.b16 %v175
      %v246 = vunpack.c.l.b16 %v176
      %v247 = vunpack.c.l.b16 %v177
      %v248 = vunpack.c.l.b16 %v178
      %v249 = vunpack.c.l.b16 %v179
      %v250 = vunpack.c.l.b16 %v180
      %v251 = vunpack.c.l.b16 %v181
      %v252 = vunpack.c.l.b16 %v182
      %v253 = vunpack.c.l.b16 %v183
      %v254 = vunpack.c.l.b16 %v184
      %v255 = vunpack.c.l.b16 %v185
      %v256 = vunpack.c.l.b16 %v186
      %v257 = vunpack.c.l.b16 %v187
      %v258 = vunpack.c.l.b16 %v188
      %v259 = vunpack.c.l.b16 %v189
      %v260 = vunpack.c.l.b16 %v190
      %v261 = vunpack.c.l.b16 %v191
      %v262 = vunpack.c.l.b16 %v192
      %v263 = vunpack.c.l.b16 %v193
      %v264 = vunpack.c.l.b16 %v194
      %v265 = vunpack.c.l.b16 %v195
      %v266 = vunpack.c.l.b16 %v196
      %v267 = vunpack.c.l.b16 %v197
      %v268 = vunpack.c.l.b16 %v198
      %v269 = vunpack.c.l.b16 %v199
      %v270 = vunpack.c.l.b16 %v200
      %v271 = vunpack.c.l.b16 %v201
      %v272 = vunpack.c.l.b16 %v202
      %v273 = vunpack.c.l.b16 %v203
      %v274 = vunpack.c.l.b16 %v204
      %v275 = vunpack.c.l.b16 %v205
      %v276 = vunpack.c.l.b16 %v206
      %v277 = vpack.c.b16 %v246, %v245
      %v278 = vpack.c.b16 %v248, %v247
      %v279 = vpack.c.b16 %v250, %v249
      %v280 = vpack.c.b16 %v252, %v251
      %v281 = vpack.c.b16 %v254, %v253
      %v282 = vpack.c.b16 %v256, %v255
      %v283 = vpack.c.b16 %v258, %v257
      %v284 = vpack.c.b16 %v260, %v259
      %v285 = vpack.c.b16 %v262, %v261
      %v286 = vpack.c.b16 %v264, %v263
      %v287 = vpack.c.b16 %v266, %v265
      %v288 = vpack.c.b16 %v268, %v267
      %v289 = vpack.c.b16 %v270, %v269
      %v290 = vpack.c.b16 %v272, %v271
      %v291 = vpack.c.b16 %v274, %v273
      %v292 = vpack.c.b16 %v276, %v275
      %v295 = vunpack.c.l.b16 %v207
      %v296 = vunpack.c.l.b16 %v208
      %v297 = vpack.c.b16 %v296, %v295
      %vm299 = vcmask 130048
      %v301 = vsel %vm299, %v277, 0
      %v304 = vsel %vm299, %v278, 0
      %v307 = vsel %vm299, %v279, 0
      %v310 = vsel %vm299, %v280, 0
      %v313 = vsel %vm299, %v281, 0
      %v316 = vsel %vm299, %v282, 0
      %v319 = vsel %vm299, %v283, 0
      %v322 = vsel %vm299, %v284, 0
      %v325 = vsel %vm299, %v285, 0
      %v328 = vsel %vm299, %v286, 0
      %v331 = vsel %vm299, %v287, 0
      %v334 = vsel %vm299, %v288, 0
      %v337 = vsel %vm299, %v289, 0
      %v340 = vsel %vm299, %v290, 0
      %v343 = vsel %vm299, %v291, 0
      %v346 = vsel %vm299, %v292, 0
      %348 = vmatpush.bf16.msra.mxu0 0
      %349 = vmatpush.bf16.msra.mxu0 0
      %350 = vmatpush.bf16.msra.mxu0 0
      %351 = vmatpush.bf16.msra.mxu0 0
      %352 = vmatpush.bf16.msra.mxu0 0
      %353 = vmatpush.bf16.msra.mxu0 0
      %354 = vmatpush.bf16.msra.mxu0 0
      %355 = vmatpush.bf16.msra.mxu0 %v297
      %356 = vmatmul.bf16.gmra.mxu0 %v301
      %v357 = vpop.f32.mrf.mxu0
      %v358 = vadd.f32 %v211, %v357
      %v359 = vpop.f32.mrf.mxu0
      %v360 = vadd.f32 %v211, %v359
      %361 = vmatmul.bf16.gmra.mxu0 %v304
      %v362 = vpop.f32.mrf.mxu0
      %v363 = vadd.f32 %v211, %v362
      %v364 = vpop.f32.mrf.mxu0
      %v365 = vadd.f32 %v211, %v364
      %366 = vmatmul.bf16.gmra.mxu0 %v307
      %v367 = vpop.f32.mrf.mxu0
      %v368 = vadd.f32 %v211, %v367
      %v369 = vpop.f32.mrf.mxu0
      %v370 = vadd.f32 %v211, %v369
      %371 = vmatmul.bf16.gmra.mxu0 %v310
      %v372 = vpop.f32.mrf.mxu0
      %v373 = vadd.f32 %v211, %v372
      %v374 = vpop.f32.mrf.mxu0
      %v375 = vadd.f32 %v211, %v374
      %376 = vmatmul.bf16.gmra.mxu0 %v313
      %v377 = vpop.f32.mrf.mxu0
      %v378 = vadd.f32 %v211, %v377
      %v379 = vpop.f32.mrf.mxu0
      %v380 = vadd.f32 %v211, %v379
      %381 = vmatmul.bf16.gmra.mxu0 %v316
      %v382 = vpop.f32.mrf.mxu0
      %v383 = vadd.f32 %v211, %v382
      %v384 = vpop.f32.mrf.mxu0
      %v385 = vadd.f32 %v211, %v384
      %386 = vmatmul.bf16.gmra.mxu0 %v319
      %v387 = vpop.f32.mrf.mxu0
      %v388 = vadd.f32 %v211, %v387
      %v389 = vpop.f32.mrf.mxu0
      %v390 = vadd.f32 %v211, %v389
      %391 = vmatmul.bf16.gmra.mxu0 %v322
      %v392 = vpop.f32.mrf.mxu0
      %v393 = vadd.f32 %v211, %v392
      %v394 = vpop.f32.mrf.mxu0
      %v395 = vadd.f32 %v211, %v394
      %396 = vmatmul.bf16.gmra.mxu0 %v325
      %v397 = vpop.f32.mrf.mxu0
      %v398 = vadd.f32 %v211, %v397
      %v399 = vpop.f32.mrf.mxu0
      %v400 = vadd.f32 %v211, %v399
      %401 = vmatmul.bf16.gmra.mxu0 %v328
      %v402 = vpop.f32.mrf.mxu0
      %v403 = vadd.f32 %v211, %v402
      %v404 = vpop.f32.mrf.mxu0
      %v405 = vadd.f32 %v211, %v404
      %406 = vmatmul.bf16.gmra.mxu0 %v331
      %v407 = vpop.f32.mrf.mxu0
      %v408 = vadd.f32 %v211, %v407
      %v409 = vpop.f32.mrf.mxu0
      %v410 = vadd.f32 %v211, %v409
      %411 = vmatmul.bf16.gmra.mxu0 %v334
      %v412 = vpop.f32.mrf.mxu0
      %v413 = vadd.f32 %v211, %v412
      %v414 = vpop.f32.mrf.mxu0
      %v415 = vadd.f32 %v211, %v414
      %416 = vmatmul.bf16.gmra.mxu0 %v337
      %v417 = vpop.f32.mrf.mxu0
      %v418 = vadd.f32 %v211, %v417
      %v419 = vpop.f32.mrf.mxu0
      %v420 = vadd.f32 %v211, %v419
      %421 = vmatmul.bf16.gmra.mxu0 %v340
      %v422 = vpop.f32.mrf.mxu0
      %v423 = vadd.f32 %v211, %v422
      %v424 = vpop.f32.mrf.mxu0
      %v425 = vadd.f32 %v211, %v424
      %426 = vmatmul.bf16.gmra.mxu0 %v343
      %v427 = vpop.f32.mrf.mxu0
      %v428 = vadd.f32 %v211, %v427
      %v429 = vpop.f32.mrf.mxu0
      %v430 = vadd.f32 %v211, %v429
      %431 = vmatmul.bf16.gmra.mxu0 %v346
      %v432 = vpop.f32.mrf.mxu0
      %v433 = vadd.f32 %v211, %v432
      %v434 = vpop.f32.mrf.mxu0
      %v435 = vadd.f32 %v211, %v434
      %436 = vdwg.mxu0
      %v437 = vpack.c.bf16 %v358, %v358
      %v438 = vpack.c.bf16 %v360, %v360
      %v439 = vpack.c.bf16 %v363, %v363
      %v440 = vpack.c.bf16 %v365, %v365
      %v441 = vpack.c.bf16 %v368, %v368
      %v442 = vpack.c.bf16 %v370, %v370
      %v443 = vpack.c.bf16 %v373, %v373
      %v444 = vpack.c.bf16 %v375, %v375
      %v445 = vpack.c.bf16 %v378, %v378
      %v446 = vpack.c.bf16 %v380, %v380
      %v447 = vpack.c.bf16 %v383, %v383
      %v448 = vpack.c.bf16 %v385, %v385
      %v449 = vpack.c.bf16 %v388, %v388
      %v450 = vpack.c.bf16 %v390, %v390
      %v451 = vpack.c.bf16 %v393, %v393
      %v452 = vpack.c.bf16 %v395, %v395
      %v453 = vpack.c.bf16 %v398, %v398
      %v454 = vpack.c.bf16 %v400, %v400
      %v455 = vpack.c.bf16 %v403, %v403
      %v456 = vpack.c.bf16 %v405, %v405
      %v457 = vpack.c.bf16 %v408, %v408
      %v458 = vpack.c.bf16 %v410, %v410
      %v459 = vpack.c.bf16 %v413, %v413
      %v460 = vpack.c.bf16 %v415, %v415
      %v461 = vpack.c.bf16 %v418, %v418
      %v462 = vpack.c.bf16 %v420, %v420
      %v463 = vpack.c.bf16 %v423, %v423
      %v464 = vpack.c.bf16 %v425, %v425
      %v465 = vpack.c.bf16 %v428, %v428
      %v466 = vpack.c.bf16 %v430, %v430
      %v467 = vpack.c.bf16 %v433, %v433
      %v468 = vpack.c.bf16 %v435, %v435
      %vm469 = vcmask 60416
      %470 = vst.msk [vmem:[%s172] sm:$0xf] %vm469, %v437
      %471 = vst.msk [vmem:[%s172 + $0x4] sm:$0xf] %vm469, %v438
      %472 = vst.msk [vmem:[%s172 + $0x8] sm:$0xf] %vm469, %v439
      %473 = vst.msk [vmem:[%s172 + $0xc] sm:$0xf] %vm469, %v440
      %474 = vst.msk [vmem:[%s172 + $0x10] sm:$0xf] %vm469, %v441
      %475 = vst.msk [vmem:[%s172 + $0x14] sm:$0xf] %vm469, %v442
      %476 = vst.msk [vmem:[%s172 + $0x18] sm:$0xf] %vm469, %v443
      %477 = vst.msk [vmem:[%s172 + $0x1c] sm:$0xf] %vm469, %v444
      %478 = vst.msk [vmem:[%s172 + $0x20] sm:$0xf] %vm469, %v445
      %479 = vst.msk [vmem:[%s172 + $0x24] sm:$0xf] %vm469, %v446
      %480 = vst.msk [vmem:[%s172 + $0x28] sm:$0xf] %vm469, %v447
      %481 = vst.msk [vmem:[%s172 + $0x2c] sm:$0xf] %vm469, %v448
      %482 = vst.msk [vmem:[%s172 + $0x30] sm:$0xf] %vm469, %v449
      %483 = vst.msk [vmem:[%s172 + $0x34] sm:$0xf] %vm469, %v450
      %484 = vst.msk [vmem:[%s172 + $0x38] sm:$0xf] %vm469, %v451
      %485 = vst.msk [vmem:[%s172 + $0x3c] sm:$0xf] %vm469, %v452
      %486 = vst.msk [vmem:[%s172 + $0x40] sm:$0xf] %vm469, %v453
      %487 = vst.msk [vmem:[%s172 + $0x44] sm:$0xf] %vm469, %v454
      %488 = vst.msk [vmem:[%s172 + $0x48] sm:$0xf] %vm469, %v455
      %489 = vst.msk [vmem:[%s172 + $0x4c] sm:$0xf] %vm469, %v456
      %490 = vst.msk [vmem:[%s172 + $0x50] sm:$0xf] %vm469, %v457
      %491 = vst.msk [vmem:[%s172 + $0x54] sm:$0xf] %vm469, %v458
      %492 = vst.msk [vmem:[%s172 + $0x58] sm:$0xf] %vm469, %v459
      %493 = vst.msk [vmem:[%s172 + $0x5c] sm:$0xf] %vm469, %v460
      %494 = vst.msk [vmem:[%s172 + $0x60] sm:$0xf] %vm469, %v461
      %495 = vst.msk [vmem:[%s172 + $0x64] sm:$0xf] %vm469, %v462
      %496 = vst.msk [vmem:[%s172 + $0x68] sm:$0xf] %vm469, %v463
      %497 = vst.msk [vmem:[%s172 + $0x6c] sm:$0xf] %vm469, %v464
      %498 = vst.msk [vmem:[%s172 + $0x70] sm:$0xf] %vm469, %v465
      %499 = vst.msk [vmem:[%s172 + $0x74] sm:$0xf] %vm469, %v466
      %500 = vst.msk [vmem:[%s172 + $0x78] sm:$0xf] %vm469, %v467
      %501 = vst.msk [vmem:[%s172 + $0x7c] sm:$0xf] %vm469, %v468
      %s502 = smul.u32 32, %s14
      %p503 = scmp.lt.s32.totalorder %s502, 63
      %s504 = scalar_select %p503, %s502, 63
      %s505 = smul.addr %s504, 4
      %s506 = scalar_lea.vmem %s3, %s505
      // Predicated region
      $region33: #{_lambda_.13} parent=31 // pred_check
        %p507 = pneg %p100
      $region34: #{_lambda_.13} parent=31 // pred_check_branch
        %509 = sbr.rel (%p507) target = $region36
      $region35: #{_lambda_.13} parent=31 // pred_region
        %s510 = smul.u32 32, %s14
      $region36: #{_lambda_.13} parent=31 // pred_fallthru
        _
    $region32: #{_lambda_.13} parent=5 // pred_fallthru
      _
    %p511 = scmp.le.s32.totalorder 2, %s9
    // Predicated region
    $region37: #{_lambda_.13} parent=5 // pred_check
      %p512 = pneg %p511
    $region38: #{_lambda_.13} parent=5 // pred_check_branch
      %514 = sbr.rel (%p512) target = $region40
    $region39: #{_lambda_.13} parent=5 // pred_region
      %s515 = ssub.s32 %s9, 2
      // Predicated region
      $region41: #{_lambda_.13} parent=39 // pred_check
        %p516 = pneg %p106
      $region42: #{_lambda_.13} parent=39 // pred_check_branch
        %518 = sbr.rel (%p516) target = $region44
      $region43: #{_lambda_.13} parent=39 // pred_region
        %s519 = smul.u32 32, %s15
        %p520 = scmp.lt.s32.totalorder %s519, 63
        %s521 = scalar_select %p520, %s519, 63
        %s522 = smul.addr %s521, 4
        %s523 = scalar_lea.vmem %s3, %s522
      $region44: #{_lambda_.13} parent=39 // pred_fallthru
        _
    $region40: #{_lambda_.13} parent=5 // pred_fallthru
      _
  $region6: #{_lambda_.13} parent=0 // loop_footer
    %s13 = sadd.s32 1, %s9
  $region7: #{_lambda_.13} parent=0 // loop_footer_branch
    %8 = sbr.rel target = $region3
  $region8: #{_lambda_.13} parent=0 // loop_exit
    _

// kernel: _lambda_.12
$region0: #{_lambda_.12}
  #allocation0 [shape = 'u32[]', space=smem, size = 0x4, offset = 0x4, fixed_abs, tag = 'smem constant byte address 0x4 - core index']
  #allocation1 [shape = 'u32[72,128]{1,0:T(1,128)}', space=vmem, size = 0x9000, scoped, tag = 'internal scratch']
  %s0 = inlined_call_operand.vmem [shape: bf16[512,147], index: 0, kind: input, shape index: {}]
  %s1 = inlined_call_operand.vmem [shape: bf16[147,32], index: 1, kind: input, shape index: {}]
  %s2 = inlined_call_operand.vmem [shape: f32[512,16], index: 2, kind: input, shape index: {}]
  %s3 = inlined_call_operand.vmem [shape: bf16[512,16], index: 3, kind: output, shape index: {}]
  %s4 = sld [smem:[#allocation0]]
  $region45: #{_lambda_.12} parent=0
    _
  %s6 = ssub.s32 1, %s4
  %s7 = scalar_select 0, %s6, %s4
  loop: start=0, step=1, limit=4
  $region2: #{_lambda_.12} parent=0 // loop_pre_header
    _
  $region3: #{_lambda_.12} parent=0 // loop_header
    %s9 = sphi 0, %s13
    %p10 = scmp.ge.s32.totalorder %s9, 4
    %s19 = sphi 0, %s21
    %s22 = sphi 0, %s19
    %s23 = sphi 0, %s22
    %s39 = sphi 0, %s23
    %s43 = sphi 0, %s43
    %s45 = sphi 0, %s43
    %s46 = sphi 0, %s45
    %s60 = sphi 0, %s46
    %s66 = sphi 0, %s68
    %s69 = sphi 0, %s66
    %s70 = sphi 0, %s69
    %s86 = sphi 0, %s70
    %s92 = sphi 0, %s94
    %s95 = sphi 0, %s92
    %s96 = sphi 0, %s95
    %s112 = sphi 0, %s96
  $region4: #{_lambda_.12} parent=0 // loop_header_branch
    %12 = sbr.rel (%p10) target = $region8
  $region5: #{_lambda_.12} parent=0 // loop_body
    %s14 = ssub.s32 %s9, 1
    %s15 = ssub.s32 %s9, 2
    %s16 = sadd.s32 %s9, 1
    %s17 = ssub.s32 %s9, %s16
    %p18 = scmp.eq.s32.totalorder %s17, 0
    %s20 = sadd.s32 %s19, 1
    %s21 = scalar_select %p18, %s19, %s20
    %p24 = pneg %p18
    %p25 = scmp.eq.s32.totalorder %s9, 1
    %p26 = por %p24, %p25
    %p27 = scmp.ne.s32.totalorder %s19, %s22
    %p28 = scmp.eq.s32.totalorder %s9, 0
    %p29 = por %p27, %p28
    %p30 = scmp.ne.s32.totalorder %s19, %s22
    %p31 = scmp.eq.s32.totalorder %s14, 1
    %p32 = por %p30, %p31
    %p33 = scmp.ne.s32.totalorder %s22, %s23
    %p34 = scmp.eq.s32.totalorder %s14, 0
    %p35 = por %p33, %p34
    %p36 = scmp.ne.s32.totalorder %s22, %s23
    %p37 = scmp.eq.s32.totalorder %s15, 1
    %p38 = por %p36, %p37
    %p40 = scmp.ne.s32.totalorder %s23, %s39
    %p41 = scmp.eq.s32.totalorder %s15, 0
    %p42 = por %p40, %p41
    %s44 = sadd.s32 %s43, 1
    %p47 = scmp.eq.s32.totalorder %s9, 1
    %p48 = scmp.ne.s32.totalorder %s43, %s45
    %p49 = scmp.eq.s32.totalorder %s9, 0
    %p50 = por %p48, %p49
    %p51 = scmp.ne.s32.totalorder %s43, %s45
    %p52 = scmp.eq.s32.totalorder %s14, 1
    %p53 = por %p51, %p52
    %p54 = scmp.ne.s32.totalorder %s45, %s46
    %p55 = scmp.eq.s32.totalorder %s14, 0
    %p56 = por %p54, %p55
    %p57 = scmp.ne.s32.totalorder %s45, %s46
    %p58 = scmp.eq.s32.totalorder %s15, 1
    %p59 = por %p57, %p58
    %p61 = scmp.ne.s32.totalorder %s46, %s60
    %p62 = scmp.eq.s32.totalorder %s15, 0
    %p63 = por %p61, %p62
    %s64 = ssub.s32 %s9, %s16
    %p65 = scmp.eq.s32.totalorder %s64, 0
    %s67 = sadd.s32 %s66, 1
    %s68 = scalar_select %p65, %s66, %s67
    %p71 = pneg %p65
    %p72 = scmp.eq.s32.totalorder %s9, 1
    %p73 = por %p71, %p72
    %p74 = scmp.ne.s32.totalorder %s66, %s69
    %p75 = scmp.eq.s32.totalorder %s9, 0
    %p76 = por %p74, %p75
    %p77 = scmp.ne.s32.totalorder %s66, %s69
    %p78 = scmp.eq.s32.totalorder %s14, 1
    %p79 = por %p77, %p78
    %p80 = scmp.ne.s32.totalorder %s69, %s70
    %p81 = scmp.eq.s32.totalorder %s14, 0
    %p82 = por %p80, %p81
    %p83 = scmp.ne.s32.totalorder %s69, %s70
    %p84 = scmp.eq.s32.totalorder %s15, 1
    %p85 = por %p83, %p84
    %p87 = scmp.ne.s32.totalorder %s70, %s86
    %p88 = scmp.eq.s32.totalorder %s15, 0
    %p89 = por %p87, %p88
    %s90 = ssub.s32 %s9, %s16
    %p91 = scmp.eq.s32.totalorder %s90, 0
    %s93 = sadd.s32 %s92, 1
    %s94 = scalar_select %p91, %s92, %s93
    %p97 = pneg %p91
    %p98 = scmp.eq.s32.totalorder %s9, 1
    %p99 = por %p97, %p98
    %p100 = scmp.ne.s32.totalorder %s92, %s95
    %p101 = scmp.eq.s32.totalorder %s9, 0
    %p102 = por %p100, %p101
    %p103 = scmp.ne.s32.totalorder %s92, %s95
    %p104 = scmp.eq.s32.totalorder %s14, 1
    %p105 = por %p103, %p104
    %p106 = scmp.ne.s32.totalorder %s95, %s96
    %p107 = scmp.eq.s32.totalorder %s14, 0
    %p108 = por %p106, %p107
    %p109 = scmp.ne.s32.totalorder %s95, %s96
    %p110 = scmp.eq.s32.totalorder %s15, 1
    %p111 = por %p109, %p110
    %p113 = scmp.ne.s32.totalorder %s96, %s112
    %p114 = scmp.eq.s32.totalorder %s15, 0
    %p115 = por %p113, %p114
    %p116 = scmp.le.s32.totalorder 1, %s9
    %p117 = scmp.lt.s32.totalorder %s9, 3
    %p118 = pnand %p116, %p117
    %p119 = pneg %p118
    // Predicated region
    $region9: #{_lambda_.12} parent=5 // pred_check
      _
    $region10: #{_lambda_.12} parent=5 // pred_check_branch
      %121 = sbr.rel (%p118) target = $region12
    $region11: #{_lambda_.12} parent=5 // pred_region
      %s122 = ssub.s32 %s9, 1
      // Predicated region
      $region13: #{_lambda_.12} parent=11 // pred_check
        %p123 = pneg %p56
      $region14: #{_lambda_.12} parent=11 // pred_check_branch
        %125 = sbr.rel (%p123) target = $region16
      $region15: #{_lambda_.12} parent=11 // pred_region
        _
      $region16: #{_lambda_.12} parent=11 // pred_fallthru
        _
    $region12: #{_lambda_.12} parent=5 // pred_fallthru
      _
    %p126 = scmp.lt.s32.totalorder %s9, 2
    // Predicated region
    $region17: #{_lambda_.12} parent=5 // pred_check
      %p127 = pneg %p126
    $region18: #{_lambda_.12} parent=5 // pred_check_branch
      %129 = sbr.rel (%p127) target = $region20
    $region19: #{_lambda_.12} parent=5 // pred_region
      // Predicated region
      $region21: #{_lambda_.12} parent=19 // pred_check
        %p130 = pneg %p29
      $region22: #{_lambda_.12} parent=19 // pred_check_branch
        %132 = sbr.rel (%p130) target = $region24
      $region23: #{_lambda_.12} parent=19 // pred_region
        %s133 = smul.u32 32, %s9
        %p134 = scmp.lt.s32.totalorder %s133, 63
        %s135 = scalar_select %p134, %s133, 63
        %s136 = smul.addr %s135, 2
        %s137 = smul.addr %s136, 4
        %s138 = scalar_lea.vmem %s0, %s137
        %s139 = smul.u32 32, %s9
      $region24: #{_lambda_.12} parent=19 // pred_fallthru
        _
      // Predicated region
      $region25: #{_lambda_.12} parent=19 // pred_check
        %p140 = pneg %p76
      $region26: #{_lambda_.12} parent=19 // pred_check_branch
        %142 = sbr.rel (%p140) target = $region28
      $region27: #{_lambda_.12} parent=19 // pred_region
        %s143 = smul.u32 32, %s9
        %p144 = scmp.lt.s32.totalorder %s143, 63
        %s145 = scalar_select %p144, %s143, 63
        %s146 = smul.addr %s145, 8
        %s147 = scalar_lea.vmem %s2, %s146
        %s148 = smul.u32 32, %s9
      $region28: #{_lambda_.12} parent=19 // pred_fallthru
        _
    $region20: #{_lambda_.12} parent=5 // pred_fallthru
      _
    %p149 = scmp.le.s32.totalorder 1, %s9
    %p150 = scmp.lt.s32.totalorder %s9, 3
    %p151 = pnand %p149, %p150
    %p152 = pneg %p151
    // Predicated region
    $region29: #{_lambda_.12} parent=5 // pred_check
      _
    $region30: #{_lambda_.12} parent=5 // pred_check_branch
      %154 = sbr.rel (%p151) target = $region32
    $region31: #{_lambda_.12} parent=5 // pred_region
      %s155 = ssub.s32 %s9, 1
      %s156 = smul.u32 32, %s14
      %p157 = scmp.lt.s32.totalorder %s156, 63
      %s158 = scalar_select %p157, %s156, 63
      %s159 = smul.addr %s158, 2
      %s160 = smul.addr %s159, 4
      %s161 = scalar_lea.vmem %s0, %s160
      %p162 = pneg %p35
      %p163 = pneg %p32
      %p164 = pneg %p56
      %p165 = pneg %p53
      %s166 = smul.u32 32, %s14
      %p167 = scmp.lt.s32.totalorder %s166, 63
      %s168 = scalar_select %p167, %s166, 63
      %s169 = smul.addr %s168, 8
      %s170 = scalar_lea.vmem %s2, %s169
      %p171 = pneg %p82
      %p172 = pneg %p79
      %p173 = pneg %p108
      %p174 = pneg %p105
      %s175 = smul.u32 32, %s14
      %p176 = scmp.lt.s32.totalorder %s175, 63
      %s177 = scalar_select %p176, %s175, 63
      %s178 = smul.addr %s177, 4
      %s179 = scalar_lea.vmem %s3, %s178
      %s180 = smul.u32 32, %s14
      %p181 = scmp.lt.s32.totalorder %s180, 63
      %s182 = scalar_select %p181, %s180, 63
      %s183 = smul.addr %s182, 2
      %s184 = smul.addr %s183, 4
      %s185 = scalar_lea.vmem %s0, %s184
      %s186 = smul.u32 32, %s14
      %s187 = smul.u32 32, %s14
      %p188 = scmp.lt.s32.totalorder %s187, 63
      %s189 = scalar_select %p188, %s187, 63
      %s190 = smul.addr %s189, 8
      %s191 = scalar_lea.vmem %s2, %s190
      %s192 = smul.u32 32, %s14
      %s193 = smul.u32 32, %s14
      %p194 = scmp.lt.s32.totalorder %s193, 63
      %s195 = scalar_select %p194, %s193, 63
      %s196 = smul.addr %s195, 4
      %s197 = scalar_lea.vmem %s3, %s196
      %s198 = smul.u32 32, %s14
      %v200 = vld [vmem:[%s185] sm:$0xff]
      %v201 = vld [vmem:[%s185 + $0x8] sm:$0xff]
      %v202 = vld [vmem:[%s185 + $0x10] sm:$0xff]
      %v203 = vld [vmem:[%s185 + $0x18] sm:$0xff]
      %v204 = vld [vmem:[%s185 + $0x20] sm:$0xff]
      %v205 = vld [vmem:[%s185 + $0x28] sm:$0xff]
      %v206 = vld [vmem:[%s185 + $0x30] sm:$0xff]
      %v207 = vld [vmem:[%s185 + $0x38] sm:$0xff]
      %v208 = vld [vmem:[%s185 + $0x40] sm:$0xff]
      %v209 = vld [vmem:[%s185 + $0x48] sm:$0xff]
      %v210 = vld [vmem:[%s185 + $0x50] sm:$0xff]
      %v211 = vld [vmem:[%s185 + $0x58] sm:$0xff]
      %v212 = vld [vmem:[%s185 + $0x60] sm:$0xff]
      %v213 = vld [vmem:[%s185 + $0x68] sm:$0xff]
      %v214 = vld [vmem:[%s185 + $0x70] sm:$0xff]
      %v215 = vld [vmem:[%s185 + $0x78] sm:$0xff]
      %v216 = vld [vmem:[%s185 + $0x80] sm:$0xff]
      %v217 = vld [vmem:[%s185 + $0x88] sm:$0xff]
      %v218 = vld [vmem:[%s185 + $0x90] sm:$0xff]
      %v219 = vld [vmem:[%s185 + $0x98] sm:$0xff]
      %v220 = vld [vmem:[%s185 + $0xa0] sm:$0xff]
      %v221 = vld [vmem:[%s185 + $0xa8] sm:$0xff]
      %v222 = vld [vmem:[%s185 + $0xb0] sm:$0xff]
      %v223 = vld [vmem:[%s185 + $0xb8] sm:$0xff]
      %v224 = vld [vmem:[%s185 + $0xc0] sm:$0xff]
      %v225 = vld [vmem:[%s185 + $0xc8] sm:$0xff]
      %v226 = vld [vmem:[%s185 + $0xd0] sm:$0xff]
      %v227 = vld [vmem:[%s185 + $0xd8] sm:$0xff]
      %v228 = vld [vmem:[%s185 + $0xe0] sm:$0xff]
      %v229 = vld [vmem:[%s185 + $0xe8] sm:$0xff]
      %v230 = vld [vmem:[%s185 + $0xf0] sm:$0xff]
      %v231 = vld [vmem:[%s185 + $0xf8] sm:$0xff]
      %v232 = vld [vmem:[%s1] sm:$0xf]
      %v233 = vld [vmem:[%s1 + $0x4] sm:$0xf]
      %v234 = vld [vmem:[%s1 + $0x8] sm:$0xf]
      %v235 = vld [vmem:[%s1 + $0xc] sm:$0xf]
      %v236 = vld [vmem:[%s1 + $0x10] sm:$0xf]
      %v237 = vld [vmem:[%s1 + $0x14] sm:$0xf]
      %v238 = vld [vmem:[%s1 + $0x18] sm:$0xf]
      %v239 = vld [vmem:[%s1 + $0x1c] sm:$0xf]
      %v240 = vld [vmem:[%s1 + $0x20] sm:$0xf]
      %v241 = vld [vmem:[%s1 + $0x24] sm:$0xf]
      %v242 = vld [vmem:[%s1 + $0x28] sm:$0xf]
      %v243 = vld [vmem:[%s1 + $0x2c] sm:$0xf]
      %v244 = vld [vmem:[%s1 + $0x30] sm:$0xf]
      %v245 = vld [vmem:[%s1 + $0x34] sm:$0xf]
      %v246 = vld [vmem:[%s1 + $0x38] sm:$0xf]
      %v247 = vld [vmem:[%s1 + $0x3c] sm:$0xf]
      %v248 = vld [vmem:[%s1 + $0x40] sm:$0xf]
      %v249 = vld [vmem:[%s1 + $0x44] sm:$0xf]
      %v250 = vld [vmem:[%s1 + $0x48] sm:$0x3]
      %v283 = vunpack.c.l.b16 %v200
      %v284 = vunpack.c.h.b16 %v200
      %v285 = vunpack.c.l.b16 %v201
      %v286 = vunpack.c.h.b16 %v201
      %v287 = vunpack.c.l.b16 %v202
      %v288 = vunpack.c.h.b16 %v202
      %v289 = vunpack.c.l.b16 %v203
      %v290 = vunpack.c.h.b16 %v203
      %v291 = vunpack.c.l.b16 %v204
      %v292 = vunpack.c.h.b16 %v204
      %v293 = vunpack.c.l.b16 %v205
      %v294 = vunpack.c.h.b16 %v205
      %v295 = vunpack.c.l.b16 %v206
      %v296 = vunpack.c.h.b16 %v206
      %v297 = vunpack.c.l.b16 %v207
      %v298 = vunpack.c.h.b16 %v207
      %v299 = vunpack.c.l.b16 %v208
      %v300 = vunpack.c.h.b16 %v208
      %v301 = vunpack.c.l.b16 %v209
      %v302 = vunpack.c.h.b16 %v209
      %v303 = vunpack.c.l.b16 %v210
      %v304 = vunpack.c.h.b16 %v210
      %v305 = vunpack.c.l.b16 %v211
      %v306 = vunpack.c.h.b16 %v211
      %v307 = vunpack.c.l.b16 %v212
      %v308 = vunpack.c.h.b16 %v212
      %v309 = vunpack.c.l.b16 %v213
      %v310 = vunpack.c.h.b16 %v213
      %v311 = vunpack.c.l.b16 %v214
      %v312 = vunpack.c.h.b16 %v214
      %v313 = vunpack.c.l.b16 %v215
      %v314 = vunpack.c.h.b16 %v215
      %v315 = vunpack.c.l.b16 %v216
      %v316 = vunpack.c.h.b16 %v216
      %v317 = vunpack.c.l.b16 %v217
      %v318 = vunpack.c.h.b16 %v217
      %v319 = vunpack.c.l.b16 %v218
      %v320 = vunpack.c.h.b16 %v218
      %v321 = vunpack.c.l.b16 %v219
      %v322 = vunpack.c.h.b16 %v219
      %v323 = vunpack.c.l.b16 %v220
      %v324 = vunpack.c.h.b16 %v220
      %v325 = vunpack.c.l.b16 %v221
      %v326 = vunpack.c.h.b16 %v221
      %v327 = vunpack.c.l.b16 %v222
      %v328 = vunpack.c.h.b16 %v222
      %v329 = vunpack.c.l.b16 %v223
      %v330 = vunpack.c.h.b16 %v223
      %v331 = vunpack.c.l.b16 %v224
      %v332 = vunpack.c.h.b16 %v224
      %v333 = vunpack.c.l.b16 %v225
      %v334 = vunpack.c.h.b16 %v225
      %v335 = vunpack.c.l.b16 %v226
      %v336 = vunpack.c.h.b16 %v226
      %v337 = vunpack.c.l.b16 %v227
      %v338 = vunpack.c.h.b16 %v227
      %v339 = vunpack.c.l.b16 %v228
      %v340 = vunpack.c.h.b16 %v228
      %v341 = vunpack.c.l.b16 %v229
      %v342 = vunpack.c.h.b16 %v229
      %v343 = vunpack.c.l.b16 %v230
      %v344 = vunpack.c.h.b16 %v230
      %v345 = vunpack.c.l.b16 %v231
      %v346 = vunpack.c.h.b16 %v231
      %v347 = vpack.c.b16 %v285, %v283
      %v348 = vpack.c.b16 %v286, %v284
      %v349 = vpack.c.b16 %v289, %v287
      %v350 = vpack.c.b16 %v290, %v288
      %v351 = vpack.c.b16 %v293, %v291
      %v352 = vpack.c.b16 %v294, %v292
      %v353 = vpack.c.b16 %v297, %v295
      %v354 = vpack.c.b16 %v298, %v296
      %v355 = vpack.c.b16 %v301, %v299
      %v356 = vpack.c.b16 %v302, %v300
      %v357 = vpack.c.b16 %v305, %v303
      %v358 = vpack.c.b16 %v306, %v304
      %v359 = vpack.c.b16 %v309, %v307
      %v360 = vpack.c.b16 %v310, %v308
      %v361 = vpack.c.b16 %v313, %v311
      %v362 = vpack.c.b16 %v314, %v312
      %v363 = vpack.c.b16 %v317, %v315
      %v364 = vpack.c.b16 %v318, %v316
      %v365 = vpack.c.b16 %v321, %v319
      %v366 = vpack.c.b16 %v322, %v320
      %v367 = vpack.c.b16 %v325, %v323
      %v368 = vpack.c.b16 %v326, %v324
      %v369 = vpack.c.b16 %v329, %v327
      %v370 = vpack.c.b16 %v330, %v328
      %v371 = vpack.c.b16 %v333, %v331
      %v372 = vpack.c.b16 %v334, %v332
      %v373 = vpack.c.b16 %v337, %v335
      %v374 = vpack.c.b16 %v338, %v336
      %v375 = vpack.c.b16 %v341, %v339
      %v376 = vpack.c.b16 %v342, %v340
      %v377 = vpack.c.b16 %v345, %v343
      %v378 = vpack.c.b16 %v346, %v344
      %v414 = vunpack.c.l.b16 %v232
      %v415 = vunpack.c.l.b16 %v233
      %v416 = vunpack.c.l.b16 %v234
      %v417 = vunpack.c.l.b16 %v235
      %v418 = vunpack.c.l.b16 %v236
      %v419 = vunpack.c.l.b16 %v237
      %v420 = vunpack.c.l.b16 %v238
      %v421 = vunpack.c.l.b16 %v239
      %v422 = vunpack.c.l.b16 %v240
      %v423 = vunpack.c.l.b16 %v241
      %v424 = vunpack.c.l.b16 %v242
      %v425 = vunpack.c.l.b16 %v243
      %v426 = vunpack.c.l.b16 %v244
      %v427 = vunpack.c.l.b16 %v245
      %v428 = vunpack.c.l.b16 %v246
      %v429 = vunpack.c.l.b16 %v247
      %v430 = vunpack.c.l.b16 %v248
      %v431 = vunpack.c.l.b16 %v249
      %v432 = vunpack.c.l.b16 %v250
      %v433 = vpack.c.b16 %v415, %v414
      %v434 = vpack.c.b16 %v417, %v416
      %v435 = vpack.c.b16 %v419, %v418
      %v436 = vpack.c.b16 %v421, %v420
      %v437 = vpack.c.b16 %v423, %v422
      %v438 = vpack.c.b16 %v425, %v424
      %v439 = vpack.c.b16 %v427, %v426
      %v440 = vpack.c.b16 %v429, %v428
      %v441 = vpack.c.b16 %v431, %v430
      %v442 = vpack.c.b16 %v432, %v432
      %vm452 = vcmask 154624
      %v454 = vsel %vm452, %v348, 0
      %v457 = vsel %vm452, %v350, 0
      %v460 = vsel %vm452, %v352, 0
      %v463 = vsel %vm452, %v354, 0
      %v466 = vsel %vm452, %v356, 0
      %v469 = vsel %vm452, %v358, 0
      %v472 = vsel %vm452, %v360, 0
      %v475 = vsel %vm452, %v362, 0
      %v478 = vsel %vm452, %v364, 0
      %v481 = vsel %vm452, %v366, 0
      %v484 = vsel %vm452, %v368, 0
      %v487 = vsel %vm452, %v370, 0
      %v490 = vsel %vm452, %v372, 0
      %v493 = vsel %vm452, %v374, 0
      %v496 = vsel %vm452, %v376, 0
      %v499 = vsel %vm452, %v378, 0
      %vm501 = vcmask 1040384
      %vm502 = vcmask 1041408
      %v503 = vsel %vm501, 4294967295, 65535
      %v504 = vsel %vm502, %v503, 0
      %v506 = vand.u32 %v442, %v504
      %508 = vmatpush.bf16.msra.mxu0 %v440
      %509 = vmatpush.bf16.msra.mxu0 %v439
      %510 = vmatpush.bf16.msra.mxu0 %v438
      %511 = vmatpush.bf16.msra.mxu0 %v437
      %512 = vmatpush.bf16.msra.mxu0 %v436
      %513 = vmatpush.bf16.msra.mxu0 %v435
      %514 = vmatpush.bf16.msra.mxu0 %v434
      %515 = vmatpush.bf16.msra.mxu0 %v433
      %516 = vmatmul.bf16.gmra.mxu0 %v347
      %v517 = vpop.f32.mrf.mxu0
      %v518 = vadd.f32 0.0, %v517
      %v519 = vpop.f32.mrf.mxu0
      %v520 = vadd.f32 0.0, %v519
      %521 = vmatmul.bf16.gmra.mxu0 %v349
      %v522 = vpop.f32.mrf.mxu0
      %v523 = vadd.f32 0.0, %v522
      %v524 = vpop.f32.mrf.mxu0
      %v525 = vadd.f32 0.0, %v524
      %526 = vmatmul.bf16.gmra.mxu0 %v351
      %v527 = vpop.f32.mrf.mxu0
      %v528 = vadd.f32 0.0, %v527
      %v529 = vpop.f32.mrf.mxu0
      %v530 = vadd.f32 0.0, %v529
      %531 = vmatmul.bf16.gmra.mxu0 %v353
      %v532 = vpop.f32.mrf.mxu0
      %v533 = vadd.f32 0.0, %v532
      %v534 = vpop.f32.mrf.mxu0
      %v535 = vadd.f32 0.0, %v534
      %536 = vmatmul.bf16.gmra.mxu0 %v355
      %v537 = vpop.f32.mrf.mxu0
      %v538 = vadd.f32 0.0, %v537
      %v539 = vpop.f32.mrf.mxu0
      %v540 = vadd.f32 0.0, %v539
      %541 = vmatmul.bf16.gmra.mxu0 %v357
      %v542 = vpop.f32.mrf.mxu0
      %v543 = vadd.f32 0.0, %v542
      %v544 = vpop.f32.mrf.mxu0
      %v545 = vadd.f32 0.0, %v544
      %546 = vmatmul.bf16.gmra.mxu0 %v359
      %v547 = vpop.f32.mrf.mxu0
      %v548 = vadd.f32 0.0, %v547
      %v549 = vpop.f32.mrf.mxu0
      %v550 = vadd.f32 0.0, %v549
      %551 = vmatmul.bf16.gmra.mxu0 %v361
      %v552 = vpop.f32.mrf.mxu0
      %v553 = vadd.f32 0.0, %v552
      %v554 = vpop.f32.mrf.mxu0
      %v555 = vadd.f32 0.0, %v554
      %556 = vmatmul.bf16.gmra.mxu0 %v363
      %v557 = vpop.f32.mrf.mxu0
      %v558 = vadd.f32 0.0, %v557
      %v559 = vpop.f32.mrf.mxu0
      %v560 = vadd.f32 0.0, %v559
      %561 = vmatmul.bf16.gmra.mxu0 %v365
      %v562 = vpop.f32.mrf.mxu0
      %v563 = vadd.f32 0.0, %v562
      %v564 = vpop.f32.mrf.mxu0
      %v565 = vadd.f32 0.0, %v564
      %566 = vmatmul.bf16.gmra.mxu0 %v367
      %v567 = vpop.f32.mrf.mxu0
      %v568 = vadd.f32 0.0, %v567
      %v569 = vpop.f32.mrf.mxu0
      %v570 = vadd.f32 0.0, %v569
      %571 = vmatmul.bf16.gmra.mxu0 %v369
      %v572 = vpop.f32.mrf.mxu0
      %v573 = vadd.f32 0.0, %v572
      %v574 = vpop.f32.mrf.mxu0
      %v575 = vadd.f32 0.0, %v574
      %576 = vmatmul.bf16.gmra.mxu0 %v371
      %v577 = vpop.f32.mrf.mxu0
      %v578 = vadd.f32 0.0, %v577
      %v579 = vpop.f32.mrf.mxu0
      %v580 = vadd.f32 0.0, %v579
      %581 = vmatmul.bf16.gmra.mxu0 %v373
      %v582 = vpop.f32.mrf.mxu0
      %v583 = vadd.f32 0.0, %v582
      %v584 = vpop.f32.mrf.mxu0
      %v585 = vadd.f32 0.0, %v584
      %586 = vmatmul.bf16.gmra.mxu0 %v375
      %v587 = vpop.f32.mrf.mxu0
      %v588 = vadd.f32 0.0, %v587
      %v589 = vpop.f32.mrf.mxu0
      %v590 = vadd.f32 0.0, %v589
      %591 = vmatmul.bf16.gmra.mxu0 %v377
      %v592 = vpop.f32.mrf.mxu0
      %v593 = vadd.f32 0.0, %v592
      %v594 = vpop.f32.mrf.mxu0
      %v595 = vadd.f32 0.0, %v594
      %596 = vdwg.mxu0
      %597 = vmatpush.bf16.msra.mxu0 0
      %598 = vmatpush.bf16.msra.mxu0 0
      %599 = vmatpush.bf16.msra.mxu0 0
      %600 = vmatpush.bf16.msra.mxu0 0
      %601 = vmatpush.bf16.msra.mxu0 0
      %602 = vmatpush.bf16.msra.mxu0 0
      %603 = vmatpush.bf16.msra.mxu0 %v506
      %604 = vmatpush.bf16.msra.mxu0 %v441
      %605 = vmatmul.bf16.gmra.mxu0 %v454
      %v606 = vpop.f32.mrf.mxu0
      %v607 = vadd.f32 %v518, %v606
      %v608 = vpop.f32.mrf.mxu0
      %v609 = vadd.f32 %v520, %v608
      %610 = vmatmul.bf16.gmra.mxu0 %v457
      %v611 = vpop.f32.mrf.mxu0
      %v612 = vadd.f32 %v523, %v611
      %v613 = vpop.f32.mrf.mxu0
      %v614 = vadd.f32 %v525, %v613
      %615 = vmatmul.bf16.gmra.mxu0 %v460
      %v616 = vpop.f32.mrf.mxu0
      %v617 = vadd.f32 %v528, %v616
      %v618 = vpop.f32.mrf.mxu0
      %v619 = vadd.f32 %v530, %v618
      %620 = vmatmul.bf16.gmra.mxu0 %v463
      %v621 = vpop.f32.mrf.mxu0
      %v622 = vadd.f32 %v533, %v621
      %v623 = vpop.f32.mrf.mxu0
      %v624 = vadd.f32 %v535, %v623
      %625 = vmatmul.bf16.gmra.mxu0 %v466
      %v626 = vpop.f32.mrf.mxu0
      %v627 = vadd.f32 %v538, %v626
      %v628 = vpop.f32.mrf.mxu0
      %v629 = vadd.f32 %v540, %v628
      %630 = vmatmul.bf16.gmra.mxu0 %v469
      %v631 = vpop.f32.mrf.mxu0
      %v632 = vadd.f32 %v543, %v631
      %v633 = vpop.f32.mrf.mxu0
      %v634 = vadd.f32 %v545, %v633
      %635 = vmatmul.bf16.gmra.mxu0 %v472
      %v636 = vpop.f32.mrf.mxu0
      %v637 = vadd.f32 %v548, %v636
      %v638 = vpop.f32.mrf.mxu0
      %v639 = vadd.f32 %v550, %v638
      %640 = vmatmul.bf16.gmra.mxu0 %v475
      %v641 = vpop.f32.mrf.mxu0
      %v642 = vadd.f32 %v553, %v641
      %v643 = vpop.f32.mrf.mxu0
      %v644 = vadd.f32 %v555, %v643
      %645 = vmatmul.bf16.gmra.mxu0 %v478
      %v646 = vpop.f32.mrf.mxu0
      %v647 = vadd.f32 %v558, %v646
      %v648 = vpop.f32.mrf.mxu0
      %v649 = vadd.f32 %v560, %v648
      %650 = vmatmul.bf16.gmra.mxu0 %v481
      %v651 = vpop.f32.mrf.mxu0
      %v652 = vadd.f32 %v563, %v651
      %v653 = vpop.f32.mrf.mxu0
      %v654 = vadd.f32 %v565, %v653
      %655 = vmatmul.bf16.gmra.mxu0 %v484
      %v656 = vpop.f32.mrf.mxu0
      %v657 = vadd.f32 %v568, %v656
      %v658 = vpop.f32.mrf.mxu0
      %v659 = vadd.f32 %v570, %v658
      %660 = vmatmul.bf16.gmra.mxu0 %v487
      %v661 = vpop.f32.mrf.mxu0
      %v662 = vadd.f32 %v573, %v661
      %v663 = vpop.f32.mrf.mxu0
      %v664 = vadd.f32 %v575, %v663
      %665 = vmatmul.bf16.gmra.mxu0 %v490
      %v666 = vpop.f32.mrf.mxu0
      %v667 = vadd.f32 %v578, %v666
      %v668 = vpop.f32.mrf.mxu0
      %v669 = vadd.f32 %v580, %v668
      %670 = vmatmul.bf16.gmra.mxu0 %v493
      %v671 = vpop.f32.mrf.mxu0
      %v672 = vadd.f32 %v583, %v671
      %v673 = vpop.f32.mrf.mxu0
      %v674 = vadd.f32 %v585, %v673
      %675 = vmatmul.bf16.gmra.mxu0 %v496
      %v676 = vpop.f32.mrf.mxu0
      %v677 = vadd.f32 %v588, %v676
      %v678 = vpop.f32.mrf.mxu0
      %v679 = vadd.f32 %v590, %v678
      %680 = vmatmul.bf16.gmra.mxu0 %v499
      %v681 = vpop.f32.mrf.mxu0
      %v682 = vadd.f32 %v593, %v681
      %v683 = vpop.f32.mrf.mxu0
      %v684 = vadd.f32 %v595, %v683
      %685 = vdwg.mxu0
      %v686 = vld [vmem:[%s191] sm:$0xff]
      %v687 = vld [vmem:[%s191 + $0x8] sm:$0xff]
      %v688 = vld [vmem:[%s191 + $0x10] sm:$0xff]
      %v689 = vld [vmem:[%s191 + $0x18] sm:$0xff]
      %v690 = vld [vmem:[%s191 + $0x20] sm:$0xff]
      %v691 = vld [vmem:[%s191 + $0x28] sm:$0xff]
      %v692 = vld [vmem:[%s191 + $0x30] sm:$0xff]
      %v693 = vld [vmem:[%s191 + $0x38] sm:$0xff]
      %v694 = vld [vmem:[%s191 + $0x40] sm:$0xff]
      %v695 = vld [vmem:[%s191 + $0x48] sm:$0xff]
      %v696 = vld [vmem:[%s191 + $0x50] sm:$0xff]
      %v697 = vld [vmem:[%s191 + $0x58] sm:$0xff]
      %v698 = vld [vmem:[%s191 + $0x60] sm:$0xff]
      %v699 = vld [vmem:[%s191 + $0x68] sm:$0xff]
      %v700 = vld [vmem:[%s191 + $0x70] sm:$0xff]
      %v701 = vld [vmem:[%s191 + $0x78] sm:$0xff]
      %v702 = vld [vmem:[%s191 + $0x80] sm:$0xff]
      %v703 = vld [vmem:[%s191 + $0x88] sm:$0xff]
      %v704 = vld [vmem:[%s191 + $0x90] sm:$0xff]
      %v705 = vld [vmem:[%s191 + $0x98] sm:$0xff]
      %v706 = vld [vmem:[%s191 + $0xa0] sm:$0xff]
      %v707 = vld [vmem:[%s191 + $0xa8] sm:$0xff]
      %v708 = vld [vmem:[%s191 + $0xb0] sm:$0xff]
      %v709 = vld [vmem:[%s191 + $0xb8] sm:$0xff]
      %v710 = vld [vmem:[%s191 + $0xc0] sm:$0xff]
      %v711 = vld [vmem:[%s191 + $0xc8] sm:$0xff]
      %v712 = vld [vmem:[%s191 + $0xd0] sm:$0xff]
      %v713 = vld [vmem:[%s191 + $0xd8] sm:$0xff]
      %v714 = vld [vmem:[%s191 + $0xe0] sm:$0xff]
      %v715 = vld [vmem:[%s191 + $0xe8] sm:$0xff]
      %v716 = vld [vmem:[%s191 + $0xf0] sm:$0xff]
      %v717 = vld [vmem:[%s191 + $0xf8] sm:$0xff]
      %v718 = vlaneseq
      %v719 = vand.u32 %v718, 127
      %v720 = vmax.f32 %v607, 0.0
      %v721 = vmax.f32 %v609, 0.0
      %v722 = vmax.f32 %v612, 0.0
      %v723 = vmax.f32 %v614, 0.0
      %v724 = vmax.f32 %v617, 0.0
      %v725 = vmax.f32 %v619, 0.0
      %v726 = vmax.f32 %v622, 0.0
      %v727 = vmax.f32 %v624, 0.0
      %v728 = vmax.f32 %v627, 0.0
      %v729 = vmax.f32 %v629, 0.0
      %v730 = vmax.f32 %v632, 0.0
      %v731 = vmax.f32 %v634, 0.0
      %v732 = vmax.f32 %v637, 0.0
      %v733 = vmax.f32 %v639, 0.0
      %v734 = vmax.f32 %v642, 0.0
      %v735 = vmax.f32 %v644, 0.0
      %v736 = vmax.f32 %v647, 0.0
      %v737 = vmax.f32 %v649, 0.0
      %v738 = vmax.f32 %v652, 0.0
      %v739 = vmax.f32 %v654, 0.0
      %v740 = vmax.f32 %v657, 0.0
      %v741 = vmax.f32 %v659, 0.0
      %v742 = vmax.f32 %v662, 0.0
      %v743 = vmax.f32 %v664, 0.0
      %v744 = vmax.f32 %v667, 0.0
      %v745 = vmax.f32 %v669, 0.0
      %v746 = vmax.f32 %v672, 0.0
      %v747 = vmax.f32 %v674, 0.0
      %v748 = vmax.f32 %v677, 0.0
      %v749 = vmax.f32 %v679, 0.0
      %v750 = vmax.f32 %v682, 0.0
      %v751 = vmax.f32 %v684, 0.0
      %v752 = vmul.f32 %v607, %v607
      %v753 = vmul.f32 %v609, %v609
      %v754 = vmul.f32 %v612, %v612
      %v755 = vmul.f32 %v614, %v614
      %v756 = vmul.f32 %v617, %v617
      %v757 = vmul.f32 %v619, %v619
      %v758 = vmul.f32 %v622, %v622
      %v759 = vmul.f32 %v624, %v624
      %v760 = vmul.f32 %v627, %v627
      %v761 = vmul.f32 %v629, %v629
      %v762 = vmul.f32 %v632, %v632
      %v763 = vmul.f32 %v634, %v634
      %v764 = vmul.f32 %v637, %v637
      %v765 = vmul.f32 %v639, %v639
      %v766 = vmul.f32 %v642, %v642
      %v767 = vmul.f32 %v644, %v644
      %v768 = vmul.f32 %v647, %v647
      %v769 = vmul.f32 %v649, %v649
      %v770 = vmul.f32 %v652, %v652
      %v771 = vmul.f32 %v654, %v654
      %v772 = vmul.f32 %v657, %v657
      %v773 = vmul.f32 %v659, %v659
      %v774 = vmul.f32 %v662, %v662
      %v775 = vmul.f32 %v664, %v664
      %v776 = vmul.f32 %v667, %v667
      %v777 = vmul.f32 %v669, %v669
      %v778 = vmul.f32 %v672, %v672
      %v779 = vmul.f32 %v674, %v674
      %v780 = vmul.f32 %v677, %v677
      %v781 = vmul.f32 %v679, %v679
      %v782 = vmul.f32 %v682, %v682
      %v783 = vmul.f32 %v684, %v684
      %816 = vrot.lane.b32.xlu0 %v752, 112
      %v817 = vpop.permute.xlu0 %816
      %818 = vrot.lane.b32.xlu0 %v753, 112
      %v819 = vpop.permute.xlu0 %818
      %820 = vrot.lane.b32.xlu0 %v754, 112
      %v821 = vpop.permute.xlu0 %820
      %822 = vrot.lane.b32.xlu0 %v755, 112
      %v823 = vpop.permute.xlu0 %822
      %824 = vrot.lane.b32.xlu0 %v756, 112
      %v825 = vpop.permute.xlu0 %824
      %826 = vrot.lane.b32.xlu0 %v757, 112
      %v827 = vpop.permute.xlu0 %826
      %828 = vrot.lane.b32.xlu0 %v758, 112
      %v829 = vpop.permute.xlu0 %828
      %830 = vrot.lane.b32.xlu0 %v759, 112
      %v831 = vpop.permute.xlu0 %830
      %832 = vrot.lane.b32.xlu0 %v760, 112
      %v833 = vpop.permute.xlu0 %832
      %834 = vrot.lane.b32.xlu0 %v761, 112
      %v835 = vpop.permute.xlu0 %834
      %836 = vrot.lane.b32.xlu0 %v762, 112
      %v837 = vpop.permute.xlu0 %836
      %838 = vrot.lane.b32.xlu0 %v763, 112
      %v839 = vpop.permute.xlu0 %838
      %840 = vrot.lane.b32.xlu0 %v764, 112
      %v841 = vpop.permute.xlu0 %840
      %842 = vrot.lane.b32.xlu0 %v765, 112
      %v843 = vpop.permute.xlu0 %842
      %844 = vrot.lane.b32.xlu0 %v766, 112
      %v845 = vpop.permute.xlu0 %844
      %846 = vrot.lane.b32.xlu0 %v767, 112
      %v847 = vpop.permute.xlu0 %846
      %848 = vrot.lane.b32.xlu0 %v768, 112
      %v849 = vpop.permute.xlu0 %848
      %850 = vrot.lane.b32.xlu0 %v769, 112
      %v851 = vpop.permute.xlu0 %850
      %852 = vrot.lane.b32.xlu0 %v770, 112
      %v853 = vpop.permute.xlu0 %852
      %854 = vrot.lane.b32.xlu0 %v771, 112
      %v855 = vpop.permute.xlu0 %854
      %856 = vrot.lane.b32.xlu0 %v772, 112
      %v857 = vpop.permute.xlu0 %856
      %858 = vrot.lane.b32.xlu0 %v773, 112
      %v859 = vpop.permute.xlu0 %858
      %860 = vrot.lane.b32.xlu0 %v774, 112
      %v861 = vpop.permute.xlu0 %860
      %862 = vrot.lane.b32.xlu0 %v775, 112
      %v863 = vpop.permute.xlu0 %862
      %864 = vrot.lane.b32.xlu0 %v776, 112
      %v865 = vpop.permute.xlu0 %864
      %866 = vrot.lane.b32.xlu0 %v777, 112
      %v867 = vpop.permute.xlu0 %866
      %868 = vrot.lane.b32.xlu0 %v778, 112
      %v869 = vpop.permute.xlu0 %868
      %870 = vrot.lane.b32.xlu0 %v779, 112
      %v871 = vpop.permute.xlu0 %870
      %872 = vrot.lane.b32.xlu0 %v780, 112
      %v873 = vpop.permute.xlu0 %872
      %874 = vrot.lane.b32.xlu0 %v781, 112
      %v875 = vpop.permute.xlu0 %874
      %876 = vrot.lane.b32.xlu0 %v782, 112
      %v877 = vpop.permute.xlu0 %876
      %878 = vrot.lane.b32.xlu0 %v783, 112
      %v879 = vpop.permute.xlu0 %878
      %v912 = vadd.f32 %v752, %v817
      %v913 = vadd.f32 %v753, %v819
      %v914 = vadd.f32 %v754, %v821
      %v915 = vadd.f32 %v755, %v823
      %v916 = vadd.f32 %v756, %v825
      %v917 = vadd.f32 %v757, %v827
      %v918 = vadd.f32 %v758, %v829
      %v919 = vadd.f32 %v759, %v831
      %v920 = vadd.f32 %v760, %v833
      %v921 = vadd.f32 %v761, %v835
      %v922 = vadd.f32 %v762, %v837
      %v923 = vadd.f32 %v763, %v839
      %v924 = vadd.f32 %v764, %v841
      %v925 = vadd.f32 %v765, %v843
      %v926 = vadd.f32 %v766, %v845
      %v927 = vadd.f32 %v767, %v847
      %v928 = vadd.f32 %v768, %v849
      %v929 = vadd.f32 %v769, %v851
      %v930 = vadd.f32 %v770, %v853
      %v931 = vadd.f32 %v771, %v855
      %v932 = vadd.f32 %v772, %v857
      %v933 = vadd.f32 %v773, %v859
      %v934 = vadd.f32 %v774, %v861
      %v935 = vadd.f32 %v775, %v863
      %v936 = vadd.f32 %v776, %v865
      %v937 = vadd.f32 %v777, %v867
      %v938 = vadd.f32 %v778, %v869
      %v939 = vadd.f32 %v779, %v871
      %v940 = vadd.f32 %v780, %v873
      %v941 = vadd.f32 %v781, %v875
      %v942 = vadd.f32 %v782, %v877
      %v943 = vadd.f32 %v783, %v879
      %v944 = vrsqrt.pop %v912
      %v945 = vmul.f32 %v944, %v912
      %v946 = vmul.f32 %v945, %v944
      %v947 = vmul.f32 0.5, %v946
      %v948 = vsub.f32 1.5, %v947
      %v949 = vmul.f32 %v944, %v948
      %v950 = vmul.f32 %v912, %v949
      %vm951 = vcmp.eq.f32.partialorder %v912, inf
      %v952 = vsel %vm951, %v912, %v950
      %vm953 = vcmp.eq.f32.partialorder %v912, 0.0
      %v954 = vand.u32 %v912, 2147483648
      %v955 = vsel %vm953, %v954, %v952
      %v956 = vrsqrt.pop %v913
      %v957 = vmul.f32 %v956, %v913
      %v958 = vmul.f32 %v957, %v956
      %v959 = vmul.f32 0.5, %v958
      %v960 = vsub.f32 1.5, %v959
      %v961 = vmul.f32 %v956, %v960
      %v962 = vmul.f32 %v913, %v961
      %vm963 = vcmp.eq.f32.partialorder %v913, inf
      %v964 = vsel %vm963, %v913, %v962
      %vm965 = vcmp.eq.f32.partialorder %v913, 0.0
      %v966 = vand.u32 %v913, 2147483648
      %v967 = vsel %vm965, %v966, %v964
      %v968 = vrsqrt.pop %v914
      %v969 = vmul.f32 %v968, %v914
      %v970 = vmul.f32 %v969, %v968
      %v971 = vmul.f32 0.5, %v970
      %v972 = vsub.f32 1.5, %v971
      %v973 = vmul.f32 %v968, %v972
      %v974 = vmul.f32 %v914, %v973
      %vm975 = vcmp.eq.f32.partialorder %v914, inf
      %v976 = vsel %vm975, %v914, %v974
      %vm977 = vcmp.eq.f32.partialorder %v914, 0.0
      %v978 = vand.u32 %v914, 2147483648
      %v979 = vsel %vm977, %v978, %v976
      %v980 = vrsqrt.pop %v915
      %v981 = vmul.f32 %v980, %v915
      %v982 = vmul.f32 %v981, %v980
      %v983 = vmul.f32 0.5, %v982
      %v984 = vsub.f32 1.5, %v983
      %v985 = vmul.f32 %v980, %v984
      %v986 = vmul.f32 %v915, %v985
      %vm987 = vcmp.eq.f32.partialorder %v915, inf
      %v988 = vsel %vm987, %v915, %v986
      %vm989 = vcmp.eq.f32.partialorder %v915, 0.0
      %v990 = vand.u32 %v915, 2147483648
      %v991 = vsel %vm989, %v990, %v988
      %v992 = vrsqrt.pop %v916
      %v993 = vmul.f32 %v992, %v916
      %v994 = vmul.f32 %v993, %v992
      %v995 = vmul.f32 0.5, %v994
      %v996 = vsub.f32 1.5, %v995
      %v997 = vmul.f32 %v992, %v996
      %v998 = vmul.f32 %v916, %v997
      %vm999 = vcmp.eq.f32.partialorder %v916, inf
      %v1000 = vsel %vm999, %v916, %v998
      %vm1001 = vcmp.eq.f32.partialorder %v916, 0.0
      %v1002 = vand.u32 %v916, 2147483648
      %v1003 = vsel %vm1001, %v1002, %v1000
      %v1004 = vrsqrt.pop %v917
      %v1005 = vmul.f32 %v1004, %v917
      %v1006 = vmul.f32 %v1005, %v1004
      %v1007 = vmul.f32 0.5, %v1006
      %v1008 = vsub.f32 1.5, %v1007
      %v1009 = vmul.f32 %v1004, %v1008
      %v1010 = vmul.f32 %v917, %v1009
      %vm1011 = vcmp.eq.f32.partialorder %v917, inf
      %v1012 = vsel %vm1011, %v917, %v1010
      %vm1013 = vcmp.eq.f32.partialorder %v917, 0.0
      %v1014 = vand.u32 %v917, 2147483648
      %v1015 = vsel %vm1013, %v1014, %v1012
      %v1016 = vrsqrt.pop %v918
      %v1017 = vmul.f32 %v1016, %v918
      %v1018 = vmul.f32 %v1017, %v1016
      %v1019 = vmul.f32 0.5, %v1018
      %v1020 = vsub.f32 1.5, %v1019
      %v1021 = vmul.f32 %v1016, %v1020
      %v1022 = vmul.f32 %v918, %v1021
      %vm1023 = vcmp.eq.f32.partialorder %v918, inf
      %v1024 = vsel %vm1023, %v918, %v1022
      %vm1025 = vcmp.eq.f32.partialorder %v918, 0.0
      %v1026 = vand.u32 %v918, 2147483648
      %v1027 = vsel %vm1025, %v1026, %v1024
      %v1028 = vrsqrt.pop %v919
      %v1029 = vmul.f32 %v1028, %v919
      %v1030 = vmul.f32 %v1029, %v1028
      %v1031 = vmul.f32 0.5, %v1030
      %v1032 = vsub.f32 1.5, %v1031
      %v1033 = vmul.f32 %v1028, %v1032
      %v1034 = vmul.f32 %v919, %v1033
      %vm1035 = vcmp.eq.f32.partialorder %v919, inf
      %v1036 = vsel %vm1035, %v919, %v1034
      %vm1037 = vcmp.eq.f32.partialorder %v919, 0.0
      %v1038 = vand.u32 %v919, 2147483648
      %v1039 = vsel %vm1037, %v1038, %v1036
      %v1040 = vrsqrt.pop %v920
      %v1041 = vmul.f32 %v1040, %v920
      %v1042 = vmul.f32 %v1041, %v1040
      %v1043 = vmul.f32 0.5, %v1042
      %v1044 = vsub.f32 1.5, %v1043
      %v1045 = vmul.f32 %v1040, %v1044
      %v1046 = vmul.f32 %v920, %v1045
      %vm1047 = vcmp.eq.f32.partialorder %v920, inf
      %v1048 = vsel %vm1047, %v920, %v1046
      %vm1049 = vcmp.eq.f32.partialorder %v920, 0.0
      %v1050 = vand.u32 %v920, 2147483648
      %v1051 = vsel %vm1049, %v1050, %v1048
      %v1052 = vrsqrt.pop %v921
      %v1053 = vmul.f32 %v1052, %v921
      %v1054 = vmul.f32 %v1053, %v1052
      %v1055 = vmul.f32 0.5, %v1054
      %v1056 = vsub.f32 1.5, %v1055
      %v1057 = vmul.f32 %v1052, %v1056
      %v1058 = vmul.f32 %v921, %v1057
      %vm1059 = vcmp.eq.f32.partialorder %v921, inf
      %v1060 = vsel %vm1059, %v921, %v1058
      %vm1061 = vcmp.eq.f32.partialorder %v921, 0.0
      %v1062 = vand.u32 %v921, 2147483648
      %v1063 = vsel %vm1061, %v1062, %v1060
      %v1064 = vrsqrt.pop %v922
      %v1065 = vmul.f32 %v1064, %v922
      %v1066 = vmul.f32 %v1065, %v1064
      %v1067 = vmul.f32 0.5, %v1066
      %v1068 = vsub.f32 1.5, %v1067
      %v1069 = vmul.f32 %v1064, %v1068
      %v1070 = vmul.f32 %v922, %v1069
      %vm1071 = vcmp.eq.f32.partialorder %v922, inf
      %v1072 = vsel %vm1071, %v922, %v1070
      %vm1073 = vcmp.eq.f32.partialorder %v922, 0.0
      %v1074 = vand.u32 %v922, 2147483648
      %v1075 = vsel %vm1073, %v1074, %v1072
      %v1076 = vrsqrt.pop %v923
      %v1077 = vmul.f32 %v1076, %v923
      %v1078 = vmul.f32 %v1077, %v1076
      %v1079 = vmul.f32 0.5, %v1078
      %v1080 = vsub.f32 1.5, %v1079
      %v1081 = vmul.f32 %v1076, %v1080
      %v1082 = vmul.f32 %v923, %v1081
      %vm1083 = vcmp.eq.f32.partialorder %v923, inf
      %v1084 = vsel %vm1083, %v923, %v1082
      %vm1085 = vcmp.eq.f32.partialorder %v923, 0.0
      %v1086 = vand.u32 %v923, 2147483648
      %v1087 = vsel %vm1085, %v1086, %v1084
      %v1088 = vrsqrt.pop %v924
      %v1089 = vmul.f32 %v1088, %v924
      %v1090 = vmul.f32 %v1089, %v1088
      %v1091 = vmul.f32 0.5, %v1090
      %v1092 = vsub.f32 1.5, %v1091
      %v1093 = vmul.f32 %v1088, %v1092
      %v1094 = vmul.f32 %v924, %v1093
      %vm1095 = vcmp.eq.f32.partialorder %v924, inf
      %v1096 = vsel %vm1095, %v924, %v1094
      %vm1097 = vcmp.eq.f32.partialorder %v924, 0.0
      %v1098 = vand.u32 %v924, 2147483648
      %v1099 = vsel %vm1097, %v1098, %v1096
      %v1100 = vrsqrt.pop %v925
      %v1101 = vmul.f32 %v1100, %v925
      %v1102 = vmul.f32 %v1101, %v1100
      %v1103 = vmul.f32 0.5, %v1102
      %v1104 = vsub.f32 1.5, %v1103
      %v1105 = vmul.f32 %v1100, %v1104
      %v1106 = vmul.f32 %v925, %v1105
      %vm1107 = vcmp.eq.f32.partialorder %v925, inf
      %v1108 = vsel %vm1107, %v925, %v1106
      %vm1109 = vcmp.eq.f32.partialorder %v925, 0.0
      %v1110 = vand.u32 %v925, 2147483648
      %v1111 = vsel %vm1109, %v1110, %v1108
      %v1112 = vrsqrt.pop %v926
      %v1113 = vmul.f32 %v1112, %v926
      %v1114 = vmul.f32 %v1113, %v1112
      %v1115 = vmul.f32 0.5, %v1114
      %v1116 = vsub.f32 1.5, %v1115
      %v1117 = vmul.f32 %v1112, %v1116
      %v1118 = vmul.f32 %v926, %v1117
      %vm1119 = vcmp.eq.f32.partialorder %v926, inf
      %v1120 = vsel %vm1119, %v926, %v1118
      %vm1121 = vcmp.eq.f32.partialorder %v926, 0.0
      %v1122 = vand.u32 %v926, 2147483648
      %v1123 = vsel %vm1121, %v1122, %v1120
      %v1124 = vrsqrt.pop %v927
      %v1125 = vmul.f32 %v1124, %v927
      %v1126 = vmul.f32 %v1125, %v1124
      %v1127 = vmul.f32 0.5, %v1126
      %v1128 = vsub.f32 1.5, %v1127
      %v1129 = vmul.f32 %v1124, %v1128
      %v1130 = vmul.f32 %v927, %v1129
      %vm1131 = vcmp.eq.f32.partialorder %v927, inf
      %v1132 = vsel %vm1131, %v927, %v1130
      %vm1133 = vcmp.eq.f32.partialorder %v927, 0.0
      %v1134 = vand.u32 %v927, 2147483648
      %v1135 = vsel %vm1133, %v1134, %v1132
      %v1136 = vrsqrt.pop %v928
      %v1137 = vmul.f32 %v1136, %v928
      %v1138 = vmul.f32 %v1137, %v1136
      %v1139 = vmul.f32 0.5, %v1138
      %v1140 = vsub.f32 1.5, %v1139
      %v1141 = vmul.f32 %v1136, %v1140
      %v1142 = vmul.f32 %v928, %v1141
      %vm1143 = vcmp.eq.f32.partialorder %v928, inf
      %v1144 = vsel %vm1143, %v928, %v1142
      %vm1145 = vcmp.eq.f32.partialorder %v928, 0.0
      %v1146 = vand.u32 %v928, 2147483648
      %v1147 = vsel %vm1145, %v1146, %v1144
      %v1148 = vrsqrt.pop %v929
      %v1149 = vmul.f32 %v1148, %v929
      %v1150 = vmul.f32 %v1149, %v1148
      %v1151 = vmul.f32 0.5, %v1150
      %v1152 = vsub.f32 1.5, %v1151
      %v1153 = vmul.f32 %v1148, %v1152
      %v1154 = vmul.f32 %v929, %v1153
      %vm1155 = vcmp.eq.f32.partialorder %v929, inf
      %v1156 = vsel %vm1155, %v929, %v1154
      %vm1157 = vcmp.eq.f32.partialorder %v929, 0.0
      %v1158 = vand.u32 %v929, 2147483648
      %v1159 = vsel %vm1157, %v1158, %v1156
      %v1160 = vrsqrt.pop %v930
      %v1161 = vmul.f32 %v1160, %v930
      %v1162 = vmul.f32 %v1161, %v1160
      %v1163 = vmul.f32 0.5, %v1162
      %v1164 = vsub.f32 1.5, %v1163
      %v1165 = vmul.f32 %v1160, %v1164
      %v1166 = vmul.f32 %v930, %v1165
      %vm1167 = vcmp.eq.f32.partialorder %v930, inf
      %v1168 = vsel %vm1167, %v930, %v1166
      %vm1169 = vcmp.eq.f32.partialorder %v930, 0.0
      %v1170 = vand.u32 %v930, 2147483648
      %v1171 = vsel %vm1169, %v1170, %v1168
      %v1172 = vrsqrt.pop %v931
      %v1173 = vmul.f32 %v1172, %v931
      %v1174 = vmul.f32 %v1173, %v1172
      %v1175 = vmul.f32 0.5, %v1174
      %v1176 = vsub.f32 1.5, %v1175
      %v1177 = vmul.f32 %v1172, %v1176
      %v1178 = vmul.f32 %v931, %v1177
      %vm1179 = vcmp.eq.f32.partialorder %v931, inf
      %v1180 = vsel %vm1179, %v931, %v1178
      %vm1181 = vcmp.eq.f32.partialorder %v931, 0.0
      %v1182 = vand.u32 %v931, 2147483648
      %v1183 = vsel %vm1181, %v1182, %v1180
      %v1184 = vrsqrt.pop %v932
      %v1185 = vmul.f32 %v1184, %v932
      %v1186 = vmul.f32 %v1185, %v1184
      %v1187 = vmul.f32 0.5, %v1186
      %v1188 = vsub.f32 1.5, %v1187
      %v1189 = vmul.f32 %v1184, %v1188
      %v1190 = vmul.f32 %v932, %v1189
      %vm1191 = vcmp.eq.f32.partialorder %v932, inf
      %v1192 = vsel %vm1191, %v932, %v1190
      %vm1193 = vcmp.eq.f32.partialorder %v932, 0.0
      %v1194 = vand.u32 %v932, 2147483648
      %v1195 = vsel %vm1193, %v1194, %v1192
      %v1196 = vrsqrt.pop %v933
      %v1197 = vmul.f32 %v1196, %v933
      %v1198 = vmul.f32 %v1197, %v1196
      %v1199 = vmul.f32 0.5, %v1198
      %v1200 = vsub.f32 1.5, %v1199
      %v1201 = vmul.f32 %v1196, %v1200
      %v1202 = vmul.f32 %v933, %v1201
      %vm1203 = vcmp.eq.f32.partialorder %v933, inf
      %v1204 = vsel %vm1203, %v933, %v1202
      %vm1205 = vcmp.eq.f32.partialorder %v933, 0.0
      %v1206 = vand.u32 %v933, 2147483648
      %v1207 = vsel %vm1205, %v1206, %v1204
      %v1208 = vrsqrt.pop %v934
      %v1209 = vmul.f32 %v1208, %v934
      %v1210 = vmul.f32 %v1209, %v1208
      %v1211 = vmul.f32 0.5, %v1210
      %v1212 = vsub.f32 1.5, %v1211
      %v1213 = vmul.f32 %v1208, %v1212
      %v1214 = vmul.f32 %v934, %v1213
      %vm1215 = vcmp.eq.f32.partialorder %v934, inf
      %v1216 = vsel %vm1215, %v934, %v1214
      %vm1217 = vcmp.eq.f32.partialorder %v934, 0.0
      %v1218 = vand.u32 %v934, 2147483648
      %v1219 = vsel %vm1217, %v1218, %v1216
      %v1220 = vrsqrt.pop %v935
      %v1221 = vmul.f32 %v1220, %v935
      %v1222 = vmul.f32 %v1221, %v1220
      %v1223 = vmul.f32 0.5, %v1222
      %v1224 = vsub.f32 1.5, %v1223
      %v1225 = vmul.f32 %v1220, %v1224
      %v1226 = vmul.f32 %v935, %v1225
      %vm1227 = vcmp.eq.f32.partialorder %v935, inf
      %v1228 = vsel %vm1227, %v935, %v1226
      %vm1229 = vcmp.eq.f32.partialorder %v935, 0.0
      %v1230 = vand.u32 %v935, 2147483648
      %v1231 = vsel %vm1229, %v1230, %v1228
      %v1232 = vrsqrt.pop %v936
      %v1233 = vmul.f32 %v1232, %v936
      %v1234 = vmul.f32 %v1233, %v1232
      %v1235 = vmul.f32 0.5, %v1234
      %v1236 = vsub.f32 1.5, %v1235
      %v1237 = vmul.f32 %v1232, %v1236
      %v1238 = vmul.f32 %v936, %v1237
      %vm1239 = vcmp.eq.f32.partialorder %v936, inf
      %v1240 = vsel %vm1239, %v936, %v1238
      %vm1241 = vcmp.eq.f32.partialorder %v936, 0.0
      %v1242 = vand.u32 %v936, 2147483648
      %v1243 = vsel %vm1241, %v1242, %v1240
      %v1244 = vrsqrt.pop %v937
      %v1245 = vmul.f32 %v1244, %v937
      %v1246 = vmul.f32 %v1245, %v1244
      %v1247 = vmul.f32 0.5, %v1246
      %v1248 = vsub.f32 1.5, %v1247
      %v1249 = vmul.f32 %v1244, %v1248
      %v1250 = vmul.f32 %v937, %v1249
      %vm1251 = vcmp.eq.f32.partialorder %v937, inf
      %v1252 = vsel %vm1251, %v937, %v1250
      %vm1253 = vcmp.eq.f32.partialorder %v937, 0.0
      %v1254 = vand.u32 %v937, 2147483648
      %v1255 = vsel %vm1253, %v1254, %v1252
      %v1256 = vrsqrt.pop %v938
      %v1257 = vmul.f32 %v1256, %v938
      %v1258 = vmul.f32 %v1257, %v1256
      %v1259 = vmul.f32 0.5, %v1258
      %v1260 = vsub.f32 1.5, %v1259
      %v1261 = vmul.f32 %v1256, %v1260
      %v1262 = vmul.f32 %v938, %v1261
      %vm1263 = vcmp.eq.f32.partialorder %v938, inf
      %v1264 = vsel %vm1263, %v938, %v1262
      %vm1265 = vcmp.eq.f32.partialorder %v938, 0.0
      %v1266 = vand.u32 %v938, 2147483648
      %v1267 = vsel %vm1265, %v1266, %v1264
      %v1268 = vrsqrt.pop %v939
      %v1269 = vmul.f32 %v1268, %v939
      %v1270 = vmul.f32 %v1269, %v1268
      %v1271 = vmul.f32 0.5, %v1270
      %v1272 = vsub.f32 1.5, %v1271
      %v1273 = vmul.f32 %v1268, %v1272
      %v1274 = vmul.f32 %v939, %v1273
      %vm1275 = vcmp.eq.f32.partialorder %v939, inf
      %v1276 = vsel %vm1275, %v939, %v1274
      %vm1277 = vcmp.eq.f32.partialorder %v939, 0.0
      %v1278 = vand.u32 %v939, 2147483648
      %v1279 = vsel %vm1277, %v1278, %v1276
      %v1280 = vrsqrt.pop %v940
      %v1281 = vmul.f32 %v1280, %v940
      %v1282 = vmul.f32 %v1281, %v1280
      %v1283 = vmul.f32 0.5, %v1282
      %v1284 = vsub.f32 1.5, %v1283
      %v1285 = vmul.f32 %v1280, %v1284
      %v1286 = vmul.f32 %v940, %v1285
      %vm1287 = vcmp.eq.f32.partialorder %v940, inf
      %v1288 = vsel %vm1287, %v940, %v1286
      %vm1289 = vcmp.eq.f32.partialorder %v940, 0.0
      %v1290 = vand.u32 %v940, 2147483648
      %v1291 = vsel %vm1289, %v1290, %v1288
      %v1292 = vrsqrt.pop %v941
      %v1293 = vmul.f32 %v1292, %v941
      %v1294 = vmul.f32 %v1293, %v1292
      %v1295 = vmul.f32 0.5, %v1294
      %v1296 = vsub.f32 1.5, %v1295
      %v1297 = vmul.f32 %v1292, %v1296
      %v1298 = vmul.f32 %v941, %v1297
      %vm1299 = vcmp.eq.f32.partialorder %v941, inf
      %v1300 = vsel %vm1299, %v941, %v1298
      %vm1301 = vcmp.eq.f32.partialorder %v941, 0.0
      %v1302 = vand.u32 %v941, 2147483648
      %v1303 = vsel %vm1301, %v1302, %v1300
      %v1304 = vrsqrt.pop %v942
      %v1305 = vmul.f32 %v1304, %v942
      %v1306 = vmul.f32 %v1305, %v1304
      %v1307 = vmul.f32 0.5, %v1306
      %v1308 = vsub.f32 1.5, %v1307
      %v1309 = vmul.f32 %v1304, %v1308
      %v1310 = vmul.f32 %v942, %v1309
      %vm1311 = vcmp.eq.f32.partialorder %v942, inf
      %v1312 = vsel %vm1311, %v942, %v1310
      %vm1313 = vcmp.eq.f32.partialorder %v942, 0.0
      %v1314 = vand.u32 %v942, 2147483648
      %v1315 = vsel %vm1313, %v1314, %v1312
      %v1316 = vrsqrt.pop %v943
      %v1317 = vmul.f32 %v1316, %v943
      %v1318 = vmul.f32 %v1317, %v1316
      %v1319 = vmul.f32 0.5, %v1318
      %v1320 = vsub.f32 1.5, %v1319
      %v1321 = vmul.f32 %v1316, %v1320
      %v1322 = vmul.f32 %v943, %v1321
      %vm1323 = vcmp.eq.f32.partialorder %v943, inf
      %v1324 = vsel %vm1323, %v943, %v1322
      %vm1325 = vcmp.eq.f32.partialorder %v943, 0.0
      %v1326 = vand.u32 %v943, 2147483648
      %v1327 = vsel %vm1325, %v1326, %v1324
      %v1328 = vmul.f32 %v955, 0.70710677
      %v1329 = vmul.f32 %v967, 0.70710677
      %v1330 = vmul.f32 %v979, 0.70710677
      %v1331 = vmul.f32 %v991, 0.70710677
      %v1332 = vmul.f32 %v1003, 0.70710677
      %v1333 = vmul.f32 %v1015, 0.70710677
      %v1334 = vmul.f32 %v1027, 0.70710677
      %v1335 = vmul.f32 %v1039, 0.70710677
      %v1336 = vmul.f32 %v1051, 0.70710677
      %v1337 = vmul.f32 %v1063, 0.70710677
      %v1338 = vmul.f32 %v1075, 0.70710677
      %v1339 = vmul.f32 %v1087, 0.70710677
      %v1340 = vmul.f32 %v1099, 0.70710677
      %v1341 = vmul.f32 %v1111, 0.70710677
      %v1342 = vmul.f32 %v1123, 0.70710677
      %v1343 = vmul.f32 %v1135, 0.70710677
      %v1344 = vmul.f32 %v1147, 0.70710677
      %v1345 = vmul.f32 %v1159, 0.70710677
      %v1346 = vmul.f32 %v1171, 0.70710677
      %v1347 = vmul.f32 %v1183, 0.70710677
      %v1348 = vmul.f32 %v1195, 0.70710677
      %v1349 = vmul.f32 %v1207, 0.70710677
      %v1350 = vmul.f32 %v1219, 0.70710677
      %v1351 = vmul.f32 %v1231, 0.70710677
      %v1352 = vmul.f32 %v1243, 0.70710677
      %v1353 = vmul.f32 %v1255, 0.70710677
      %v1354 = vmul.f32 %v1267, 0.70710677
      %v1355 = vmul.f32 %v1279, 0.70710677
      %v1356 = vmul.f32 %v1291, 0.70710677
      %v1357 = vmul.f32 %v1303, 0.70710677
      %v1358 = vmul.f32 %v1315, 0.70710677
      %v1359 = vmul.f32 %v1327, 0.70710677
      %vm1360 = vcmp.lt.s32.totalorder %v719, 8
      %v1361 = vsel %vm1360, %v720, %v1328
      %v1362 = vsel %vm1360, %v721, %v1329
      %v1363 = vsel %vm1360, %v722, %v1330
      %v1364 = vsel %vm1360, %v723, %v1331
      %v1365 = vsel %vm1360, %v724, %v1332
      %v1366 = vsel %vm1360, %v725, %v1333
      %v1367 = vsel %vm1360, %v726, %v1334
      %v1368 = vsel %vm1360, %v727, %v1335
      %v1369 = vsel %vm1360, %v728, %v1336
      %v1370 = vsel %vm1360, %v729, %v1337
      %v1371 = vsel %vm1360, %v730, %v1338
      %v1372 = vsel %vm1360, %v731, %v1339
      %v1373 = vsel %vm1360, %v732, %v1340
      %v1374 = vsel %vm1360, %v733, %v1341
      %v1375 = vsel %vm1360, %v734, %v1342
      %v1376 = vsel %vm1360, %v735, %v1343
      %v1377 = vsel %vm1360, %v736, %v1344
      %v1378 = vsel %vm1360, %v737, %v1345
      %v1379 = vsel %vm1360, %v738, %v1346
      %v1380 = vsel %vm1360, %v739, %v1347
      %v1381 = vsel %vm1360, %v740, %v1348
      %v1382 = vsel %vm1360, %v741, %v1349
      %v1383 = vsel %vm1360, %v742, %v1350
      %v1384 = vsel %vm1360, %v743, %v1351
      %v1385 = vsel %vm1360, %v744, %v1352
      %v1386 = vsel %vm1360, %v745, %v1353
      %v1387 = vsel %vm1360, %v746, %v1354
      %v1388 = vsel %vm1360, %v747, %v1355
      %v1389 = vsel %vm1360, %v748, %v1356
      %v1390 = vsel %vm1360, %v749, %v1357
      %v1391 = vsel %vm1360, %v750, %v1358
      %v1392 = vsel %vm1360, %v751, %v1359
      %v1393 = vmul.f32 %v1361, 25.0
      %v1394 = vmul.f32 %v1362, 25.0
      %v1395 = vmul.f32 %v1363, 25.0
      %v1396 = vmul.f32 %v1364, 25.0
      %v1397 = vmul.f32 %v1365, 25.0
      %v1398 = vmul.f32 %v1366, 25.0
      %v1399 = vmul.f32 %v1367, 25.0
      %v1400 = vmul.f32 %v1368, 25.0
      %v1401 = vmul.f32 %v1369, 25.0
      %v1402 = vmul.f32 %v1370, 25.0
      %v1403 = vmul.f32 %v1371, 25.0
      %v1404 = vmul.f32 %v1372, 25.0
      %v1405 = vmul.f32 %v1373, 25.0
      %v1406 = vmul.f32 %v1374, 25.0
      %v1407 = vmul.f32 %v1375, 25.0
      %v1408 = vmul.f32 %v1376, 25.0
      %v1409 = vmul.f32 %v1377, 25.0
      %v1410 = vmul.f32 %v1378, 25.0
      %v1411 = vmul.f32 %v1379, 25.0
      %v1412 = vmul.f32 %v1380, 25.0
      %v1413 = vmul.f32 %v1381, 25.0
      %v1414 = vmul.f32 %v1382, 25.0
      %v1415 = vmul.f32 %v1383, 25.0
      %v1416 = vmul.f32 %v1384, 25.0
      %v1417 = vmul.f32 %v1385, 25.0
      %v1418 = vmul.f32 %v1386, 25.0
      %v1419 = vmul.f32 %v1387, 25.0
      %v1420 = vmul.f32 %v1388, 25.0
      %v1421 = vmul.f32 %v1389, 25.0
      %v1422 = vmul.f32 %v1390, 25.0
      %v1423 = vmul.f32 %v1391, 25.0
      %v1424 = vmul.f32 %v1392, 25.0
      %v1425 = vmul.f32 %v1393, 0.35
      %v1426 = vmul.f32 %v1394, 0.35
      %v1427 = vmul.f32 %v1395, 0.35
      %v1428 = vmul.f32 %v1396, 0.35
      %v1429 = vmul.f32 %v1397, 0.35
      %v1430 = vmul.f32 %v1398, 0.35
      %v1431 = vmul.f32 %v1399, 0.35
      %v1432 = vmul.f32 %v1400, 0.35
      %v1433 = vmul.f32 %v1401, 0.35
      %v1434 = vmul.f32 %v1402, 0.35
      %v1435 = vmul.f32 %v1403, 0.35
      %v1436 = vmul.f32 %v1404, 0.35
      %v1437 = vmul.f32 %v1405, 0.35
      %v1438 = vmul.f32 %v1406, 0.35
      %v1439 = vmul.f32 %v1407, 0.35
      %v1440 = vmul.f32 %v1408, 0.35
      %v1441 = vmul.f32 %v1409, 0.35
      %v1442 = vmul.f32 %v1410, 0.35
      %v1443 = vmul.f32 %v1411, 0.35
      %v1444 = vmul.f32 %v1412, 0.35
      %v1445 = vmul.f32 %v1413, 0.35
      %v1446 = vmul.f32 %v1414, 0.35
      %v1447 = vmul.f32 %v1415, 0.35
      %v1448 = vmul.f32 %v1416, 0.35
      %v1449 = vmul.f32 %v1417, 0.35
      %v1450 = vmul.f32 %v1418, 0.35
      %v1451 = vmul.f32 %v1419, 0.35
      %v1452 = vmul.f32 %v1420, 0.35
      %v1453 = vmul.f32 %v1421, 0.35
      %v1454 = vmul.f32 %v1422, 0.35
      %v1455 = vmul.f32 %v1423, 0.35
      %v1456 = vmul.f32 %v1424, 0.35
      %v1457 = vadd.f32 %v1425, 0.07
      %v1458 = vadd.f32 %v1426, 0.07
      %v1459 = vadd.f32 %v1427, 0.07
      %v1460 = vadd.f32 %v1428, 0.07
      %v1461 = vadd.f32 %v1429, 0.07
      %v1462 = vadd.f32 %v1430, 0.07
      %v1463 = vadd.f32 %v1431, 0.07
      %v1464 = vadd.f32 %v1432, 0.07
      %v1465 = vadd.f32 %v1433, 0.07
      %v1466 = vadd.f32 %v1434, 0.07
      %v1467 = vadd.f32 %v1435, 0.07
      %v1468 = vadd.f32 %v1436, 0.07
      %v1469 = vadd.f32 %v1437, 0.07
      %v1470 = vadd.f32 %v1438, 0.07
      %v1471 = vadd.f32 %v1439, 0.07
      %v1472 = vadd.f32 %v1440, 0.07
      %v1473 = vadd.f32 %v1441, 0.07
      %v1474 = vadd.f32 %v1442, 0.07
      %v1475 = vadd.f32 %v1443, 0.07
      %v1476 = vadd.f32 %v1444, 0.07
      %v1477 = vadd.f32 %v1445, 0.07
      %v1478 = vadd.f32 %v1446, 0.07
      %v1479 = vadd.f32 %v1447, 0.07
      %v1480 = vadd.f32 %v1448, 0.07
      %v1481 = vadd.f32 %v1449, 0.07
      %v1482 = vadd.f32 %v1450, 0.07
      %v1483 = vadd.f32 %v1451, 0.07
      %v1484 = vadd.f32 %v1452, 0.07
      %v1485 = vadd.f32 %v1453, 0.07
      %v1486 = vadd.f32 %v1454, 0.07
      %v1487 = vadd.f32 %v1455, 0.07
      %v1488 = vadd.f32 %v1456, 0.07
      %v1489 = vmax.f32 %v1457, 0.0
      %v1490 = vmax.f32 %v1458, 0.0
      %v1491 = vmax.f32 %v1459, 0.0
      %v1492 = vmax.f32 %v1460, 0.0
      %v1493 = vmax.f32 %v1461, 0.0
      %v1494 = vmax.f32 %v1462, 0.0
      %v1495 = vmax.f32 %v1463, 0.0
      %v1496 = vmax.f32 %v1464, 0.0
      %v1497 = vmax.f32 %v1465, 0.0
      %v1498 = vmax.f32 %v1466, 0.0
      %v1499 = vmax.f32 %v1467, 0.0
      %v1500 = vmax.f32 %v1468, 0.0
      %v1501 = vmax.f32 %v1469, 0.0
      %v1502 = vmax.f32 %v1470, 0.0
      %v1503 = vmax.f32 %v1471, 0.0
      %v1504 = vmax.f32 %v1472, 0.0
      %v1505 = vmax.f32 %v1473, 0.0
      %v1506 = vmax.f32 %v1474, 0.0
      %v1507 = vmax.f32 %v1475, 0.0
      %v1508 = vmax.f32 %v1476, 0.0
      %v1509 = vmax.f32 %v1477, 0.0
      %v1510 = vmax.f32 %v1478, 0.0
      %v1511 = vmax.f32 %v1479, 0.0
      %v1512 = vmax.f32 %v1480, 0.0
      %v1513 = vmax.f32 %v1481, 0.0
      %v1514 = vmax.f32 %v1482, 0.0
      %v1515 = vmax.f32 %v1483, 0.0
      %v1516 = vmax.f32 %v1484, 0.0
      %v1517 = vmax.f32 %v1485, 0.0
      %v1518 = vmax.f32 %v1486, 0.0
      %v1519 = vmax.f32 %v1487, 0.0
      %v1520 = vmax.f32 %v1488, 0.0
      %v1521 = vadd.f32 %v1489, 0.0001
      %v1522 = vadd.f32 %v1490, 0.0001
      %v1523 = vadd.f32 %v1491, 0.0001
      %v1524 = vadd.f32 %v1492, 0.0001
      %v1525 = vadd.f32 %v1493, 0.0001
      %v1526 = vadd.f32 %v1494, 0.0001
      %v1527 = vadd.f32 %v1495, 0.0001
      %v1528 = vadd.f32 %v1496, 0.0001
      %v1529 = vadd.f32 %v1497, 0.0001
      %v1530 = vadd.f32 %v1498, 0.0001
      %v1531 = vadd.f32 %v1499, 0.0001
      %v1532 = vadd.f32 %v1500, 0.0001
      %v1533 = vadd.f32 %v1501, 0.0001
      %v1534 = vadd.f32 %v1502, 0.0001
      %v1535 = vadd.f32 %v1503, 0.0001
      %v1536 = vadd.f32 %v1504, 0.0001
      %v1537 = vadd.f32 %v1505, 0.0001
      %v1538 = vadd.f32 %v1506, 0.0001
      %v1539 = vadd.f32 %v1507, 0.0001
      %v1540 = vadd.f32 %v1508, 0.0001
      %v1541 = vadd.f32 %v1509, 0.0001
      %v1542 = vadd.f32 %v1510, 0.0001
      %v1543 = vadd.f32 %v1511, 0.0001
      %v1544 = vadd.f32 %v1512, 0.0001
      %v1545 = vadd.f32 %v1513, 0.0001
      %v1546 = vadd.f32 %v1514, 0.0001
      %v1547 = vadd.f32 %v1515, 0.0001
      %v1548 = vadd.f32 %v1516, 0.0001
      %v1549 = vadd.f32 %v1517, 0.0001
      %v1550 = vadd.f32 %v1518, 0.0001
      %v1551 = vadd.f32 %v1519, 0.0001
      %v1552 = vadd.f32 %v1520, 0.0001
      %v1553 = vrsqrt.pop %v1521
      %v1554 = vmul.f32 %v1553, %v1521
      %v1555 = vmul.f32 %v1554, %v1553
      %v1556 = vmul.f32 0.5, %v1555
      %v1557 = vsub.f32 1.5, %v1556
      %v1558 = vmul.f32 %v1553, %v1557
      %v1559 = vmul.f32 %v1521, %v1558
      %vm1560 = vcmp.eq.f32.partialorder %v1521, inf
      %v1561 = vsel %vm1560, %v1521, %v1559
      %vm1562 = vcmp.eq.f32.partialorder %v1521, 0.0
      %v1563 = vand.u32 %v1521, 2147483648
      %v1564 = vsel %vm1562, %v1563, %v1561
      %v1565 = vrsqrt.pop %v1522
      %v1566 = vmul.f32 %v1565, %v1522
      %v1567 = vmul.f32 %v1566, %v1565
      %v1568 = vmul.f32 0.5, %v1567
      %v1569 = vsub.f32 1.5, %v1568
      %v1570 = vmul.f32 %v1565, %v1569
      %v1571 = vmul.f32 %v1522, %v1570
      %vm1572 = vcmp.eq.f32.partialorder %v1522, inf
      %v1573 = vsel %vm1572, %v1522, %v1571
      %vm1574 = vcmp.eq.f32.partialorder %v1522, 0.0
      %v1575 = vand.u32 %v1522, 2147483648
      %v1576 = vsel %vm1574, %v1575, %v1573
      %v1577 = vrsqrt.pop %v1523
      %v1578 = vmul.f32 %v1577, %v1523
      %v1579 = vmul.f32 %v1578, %v1577
      %v1580 = vmul.f32 0.5, %v1579
      %v1581 = vsub.f32 1.5, %v1580
      %v1582 = vmul.f32 %v1577, %v1581
      %v1583 = vmul.f32 %v1523, %v1582
      %vm1584 = vcmp.eq.f32.partialorder %v1523, inf
      %v1585 = vsel %vm1584, %v1523, %v1583
      %vm1586 = vcmp.eq.f32.partialorder %v1523, 0.0
      %v1587 = vand.u32 %v1523, 2147483648
      %v1588 = vsel %vm1586, %v1587, %v1585
      %v1589 = vrsqrt.pop %v1524
      %v1590 = vmul.f32 %v1589, %v1524
      %v1591 = vmul.f32 %v1590, %v1589
      %v1592 = vmul.f32 0.5, %v1591
      %v1593 = vsub.f32 1.5, %v1592
      %v1594 = vmul.f32 %v1589, %v1593
      %v1595 = vmul.f32 %v1524, %v1594
      %vm1596 = vcmp.eq.f32.partialorder %v1524, inf
      %v1597 = vsel %vm1596, %v1524, %v1595
      %vm1598 = vcmp.eq.f32.partialorder %v1524, 0.0
      %v1599 = vand.u32 %v1524, 2147483648
      %v1600 = vsel %vm1598, %v1599, %v1597
      %v1601 = vrsqrt.pop %v1525
      %v1602 = vmul.f32 %v1601, %v1525
      %v1603 = vmul.f32 %v1602, %v1601
      %v1604 = vmul.f32 0.5, %v1603
      %v1605 = vsub.f32 1.5, %v1604
      %v1606 = vmul.f32 %v1601, %v1605
      %v1607 = vmul.f32 %v1525, %v1606
      %vm1608 = vcmp.eq.f32.partialorder %v1525, inf
      %v1609 = vsel %vm1608, %v1525, %v1607
      %vm1610 = vcmp.eq.f32.partialorder %v1525, 0.0
      %v1611 = vand.u32 %v1525, 2147483648
      %v1612 = vsel %vm1610, %v1611, %v1609
      %v1613 = vrsqrt.pop %v1526
      %v1614 = vmul.f32 %v1613, %v1526
      %v1615 = vmul.f32 %v1614, %v1613
      %v1616 = vmul.f32 0.5, %v1615
      %v1617 = vsub.f32 1.5, %v1616
      %v1618 = vmul.f32 %v1613, %v1617
      %v1619 = vmul.f32 %v1526, %v1618
      %vm1620 = vcmp.eq.f32.partialorder %v1526, inf
      %v1621 = vsel %vm1620, %v1526, %v1619
      %vm1622 = vcmp.eq.f32.partialorder %v1526, 0.0
      %v1623 = vand.u32 %v1526, 2147483648
      %v1624 = vsel %vm1622, %v1623, %v1621
      %v1625 = vrsqrt.pop %v1527
      %v1626 = vmul.f32 %v1625, %v1527
      %v1627 = vmul.f32 %v1626, %v1625
      %v1628 = vmul.f32 0.5, %v1627
      %v1629 = vsub.f32 1.5, %v1628
      %v1630 = vmul.f32 %v1625, %v1629
      %v1631 = vmul.f32 %v1527, %v1630
      %vm1632 = vcmp.eq.f32.partialorder %v1527, inf
      %v1633 = vsel %vm1632, %v1527, %v1631
      %vm1634 = vcmp.eq.f32.partialorder %v1527, 0.0
      %v1635 = vand.u32 %v1527, 2147483648
      %v1636 = vsel %vm1634, %v1635, %v1633
      %v1637 = vrsqrt.pop %v1528
      %v1638 = vmul.f32 %v1637, %v1528
      %v1639 = vmul.f32 %v1638, %v1637
      %v1640 = vmul.f32 0.5, %v1639
      %v1641 = vsub.f32 1.5, %v1640
      %v1642 = vmul.f32 %v1637, %v1641
      %v1643 = vmul.f32 %v1528, %v1642
      %vm1644 = vcmp.eq.f32.partialorder %v1528, inf
      %v1645 = vsel %vm1644, %v1528, %v1643
      %vm1646 = vcmp.eq.f32.partialorder %v1528, 0.0
      %v1647 = vand.u32 %v1528, 2147483648
      %v1648 = vsel %vm1646, %v1647, %v1645
      %v1649 = vrsqrt.pop %v1529
      %v1650 = vmul.f32 %v1649, %v1529
      %v1651 = vmul.f32 %v1650, %v1649
      %v1652 = vmul.f32 0.5, %v1651
      %v1653 = vsub.f32 1.5, %v1652
      %v1654 = vmul.f32 %v1649, %v1653
      %v1655 = vmul.f32 %v1529, %v1654
      %vm1656 = vcmp.eq.f32.partialorder %v1529, inf
      %v1657 = vsel %vm1656, %v1529, %v1655
      %vm1658 = vcmp.eq.f32.partialorder %v1529, 0.0
      %v1659 = vand.u32 %v1529, 2147483648
      %v1660 = vsel %vm1658, %v1659, %v1657
      %v1661 = vrsqrt.pop %v1530
      %v1662 = vmul.f32 %v1661, %v1530
      %v1663 = vmul.f32 %v1662, %v1661
      %v1664 = vmul.f32 0.5, %v1663
      %v1665 = vsub.f32 1.5, %v1664
      %v1666 = vmul.f32 %v1661, %v1665
      %v1667 = vmul.f32 %v1530, %v1666
      %vm1668 = vcmp.eq.f32.partialorder %v1530, inf
      %v1669 = vsel %vm1668, %v1530, %v1667
      %vm1670 = vcmp.eq.f32.partialorder %v1530, 0.0
      %v1671 = vand.u32 %v1530, 2147483648
      %v1672 = vsel %vm1670, %v1671, %v1669
      %v1673 = vrsqrt.pop %v1531
      %v1674 = vmul.f32 %v1673, %v1531
      %v1675 = vmul.f32 %v1674, %v1673
      %v1676 = vmul.f32 0.5, %v1675
      %v1677 = vsub.f32 1.5, %v1676
      %v1678 = vmul.f32 %v1673, %v1677
      %v1679 = vmul.f32 %v1531, %v1678
      %vm1680 = vcmp.eq.f32.partialorder %v1531, inf
      %v1681 = vsel %vm1680, %v1531, %v1679
      %vm1682 = vcmp.eq.f32.partialorder %v1531, 0.0
      %v1683 = vand.u32 %v1531, 2147483648
      %v1684 = vsel %vm1682, %v1683, %v1681
      %v1685 = vrsqrt.pop %v1532
      %v1686 = vmul.f32 %v1685, %v1532
      %v1687 = vmul.f32 %v1686, %v1685
      %v1688 = vmul.f32 0.5, %v1687
      %v1689 = vsub.f32 1.5, %v1688
      %v1690 = vmul.f32 %v1685, %v1689
      %v1691 = vmul.f32 %v1532, %v1690
      %vm1692 = vcmp.eq.f32.partialorder %v1532, inf
      %v1693 = vsel %vm1692, %v1532, %v1691
      %vm1694 = vcmp.eq.f32.partialorder %v1532, 0.0
      %v1695 = vand.u32 %v1532, 2147483648
      %v1696 = vsel %vm1694, %v1695, %v1693
      %v1697 = vrsqrt.pop %v1533
      %v1698 = vmul.f32 %v1697, %v1533
      %v1699 = vmul.f32 %v1698, %v1697
      %v1700 = vmul.f32 0.5, %v1699
      %v1701 = vsub.f32 1.5, %v1700
      %v1702 = vmul.f32 %v1697, %v1701
      %v1703 = vmul.f32 %v1533, %v1702
      %vm1704 = vcmp.eq.f32.partialorder %v1533, inf
      %v1705 = vsel %vm1704, %v1533, %v1703
      %vm1706 = vcmp.eq.f32.partialorder %v1533, 0.0
      %v1707 = vand.u32 %v1533, 2147483648
      %v1708 = vsel %vm1706, %v1707, %v1705
      %v1709 = vrsqrt.pop %v1534
      %v1710 = vmul.f32 %v1709, %v1534
      %v1711 = vmul.f32 %v1710, %v1709
      %v1712 = vmul.f32 0.5, %v1711
      %v1713 = vsub.f32 1.5, %v1712
      %v1714 = vmul.f32 %v1709, %v1713
      %v1715 = vmul.f32 %v1534, %v1714
      %vm1716 = vcmp.eq.f32.partialorder %v1534, inf
      %v1717 = vsel %vm1716, %v1534, %v1715
      %vm1718 = vcmp.eq.f32.partialorder %v1534, 0.0
      %v1719 = vand.u32 %v1534, 2147483648
      %v1720 = vsel %vm1718, %v1719, %v1717
      %v1721 = vrsqrt.pop %v1535
      %v1722 = vmul.f32 %v1721, %v1535
      %v1723 = vmul.f32 %v1722, %v1721
      %v1724 = vmul.f32 0.5, %v1723
      %v1725 = vsub.f32 1.5, %v1724
      %v1726 = vmul.f32 %v1721, %v1725
      %v1727 = vmul.f32 %v1535, %v1726
      %vm1728 = vcmp.eq.f32.partialorder %v1535, inf
      %v1729 = vsel %vm1728, %v1535, %v1727
      %vm1730 = vcmp.eq.f32.partialorder %v1535, 0.0
      %v1731 = vand.u32 %v1535, 2147483648
      %v1732 = vsel %vm1730, %v1731, %v1729
      %v1733 = vrsqrt.pop %v1536
      %v1734 = vmul.f32 %v1733, %v1536
      %v1735 = vmul.f32 %v1734, %v1733
      %v1736 = vmul.f32 0.5, %v1735
      %v1737 = vsub.f32 1.5, %v1736
      %v1738 = vmul.f32 %v1733, %v1737
      %v1739 = vmul.f32 %v1536, %v1738
      %vm1740 = vcmp.eq.f32.partialorder %v1536, inf
      %v1741 = vsel %vm1740, %v1536, %v1739
      %vm1742 = vcmp.eq.f32.partialorder %v1536, 0.0
      %v1743 = vand.u32 %v1536, 2147483648
      %v1744 = vsel %vm1742, %v1743, %v1741
      %v1745 = vrsqrt.pop %v1537
      %v1746 = vmul.f32 %v1745, %v1537
      %v1747 = vmul.f32 %v1746, %v1745
      %v1748 = vmul.f32 0.5, %v1747
      %v1749 = vsub.f32 1.5, %v1748
      %v1750 = vmul.f32 %v1745, %v1749
      %v1751 = vmul.f32 %v1537, %v1750
      %vm1752 = vcmp.eq.f32.partialorder %v1537, inf
      %v1753 = vsel %vm1752, %v1537, %v1751
      %vm1754 = vcmp.eq.f32.partialorder %v1537, 0.0
      %v1755 = vand.u32 %v1537, 2147483648
      %v1756 = vsel %vm1754, %v1755, %v1753
      %v1757 = vrsqrt.pop %v1538
      %v1758 = vmul.f32 %v1757, %v1538
      %v1759 = vmul.f32 %v1758, %v1757
      %v1760 = vmul.f32 0.5, %v1759
      %v1761 = vsub.f32 1.5, %v1760
      %v1762 = vmul.f32 %v1757, %v1761
      %v1763 = vmul.f32 %v1538, %v1762
      %vm1764 = vcmp.eq.f32.partialorder %v1538, inf
      %v1765 = vsel %vm1764, %v1538, %v1763
      %vm1766 = vcmp.eq.f32.partialorder %v1538, 0.0
      %v1767 = vand.u32 %v1538, 2147483648
      %v1768 = vsel %vm1766, %v1767, %v1765
      %v1769 = vrsqrt.pop %v1539
      %v1770 = vmul.f32 %v1769, %v1539
      %v1771 = vmul.f32 %v1770, %v1769
      %v1772 = vmul.f32 0.5, %v1771
      %v1773 = vsub.f32 1.5, %v1772
      %v1774 = vmul.f32 %v1769, %v1773
      %v1775 = vmul.f32 %v1539, %v1774
      %vm1776 = vcmp.eq.f32.partialorder %v1539, inf
      %v1777 = vsel %vm1776, %v1539, %v1775
      %vm1778 = vcmp.eq.f32.partialorder %v1539, 0.0
      %v1779 = vand.u32 %v1539, 2147483648
      %v1780 = vsel %vm1778, %v1779, %v1777
      %v1781 = vrsqrt.pop %v1540
      %v1782 = vmul.f32 %v1781, %v1540
      %v1783 = vmul.f32 %v1782, %v1781
      %v1784 = vmul.f32 0.5, %v1783
      %v1785 = vsub.f32 1.5, %v1784
      %v1786 = vmul.f32 %v1781, %v1785
      %v1787 = vmul.f32 %v1540, %v1786
      %vm1788 = vcmp.eq.f32.partialorder %v1540, inf
      %v1789 = vsel %vm1788, %v1540, %v1787
      %vm1790 = vcmp.eq.f32.partialorder %v1540, 0.0
      %v1791 = vand.u32 %v1540, 2147483648
      %v1792 = vsel %vm1790, %v1791, %v1789
      %v1793 = vrsqrt.pop %v1541
      %v1794 = vmul.f32 %v1793, %v1541
      %v1795 = vmul.f32 %v1794, %v1793
      %v1796 = vmul.f32 0.5, %v1795
      %v1797 = vsub.f32 1.5, %v1796
      %v1798 = vmul.f32 %v1793, %v1797
      %v1799 = vmul.f32 %v1541, %v1798
      %vm1800 = vcmp.eq.f32.partialorder %v1541, inf
      %v1801 = vsel %vm1800, %v1541, %v1799
      %vm1802 = vcmp.eq.f32.partialorder %v1541, 0.0
      %v1803 = vand.u32 %v1541, 2147483648
      %v1804 = vsel %vm1802, %v1803, %v1801
      %v1805 = vrsqrt.pop %v1542
      %v1806 = vmul.f32 %v1805, %v1542
      %v1807 = vmul.f32 %v1806, %v1805
      %v1808 = vmul.f32 0.5, %v1807
      %v1809 = vsub.f32 1.5, %v1808
      %v1810 = vmul.f32 %v1805, %v1809
      %v1811 = vmul.f32 %v1542, %v1810
      %vm1812 = vcmp.eq.f32.partialorder %v1542, inf
      %v1813 = vsel %vm1812, %v1542, %v1811
      %vm1814 = vcmp.eq.f32.partialorder %v1542, 0.0
      %v1815 = vand.u32 %v1542, 2147483648
      %v1816 = vsel %vm1814, %v1815, %v1813
      %v1817 = vrsqrt.pop %v1543
      %v1818 = vmul.f32 %v1817, %v1543
      %v1819 = vmul.f32 %v1818, %v1817
      %v1820 = vmul.f32 0.5, %v1819
      %v1821 = vsub.f32 1.5, %v1820
      %v1822 = vmul.f32 %v1817, %v1821
      %v1823 = vmul.f32 %v1543, %v1822
      %vm1824 = vcmp.eq.f32.partialorder %v1543, inf
      %v1825 = vsel %vm1824, %v1543, %v1823
      %vm1826 = vcmp.eq.f32.partialorder %v1543, 0.0
      %v1827 = vand.u32 %v1543, 2147483648
      %v1828 = vsel %vm1826, %v1827, %v1825
      %v1829 = vrsqrt.pop %v1544
      %v1830 = vmul.f32 %v1829, %v1544
      %v1831 = vmul.f32 %v1830, %v1829
      %v1832 = vmul.f32 0.5, %v1831
      %v1833 = vsub.f32 1.5, %v1832
      %v1834 = vmul.f32 %v1829, %v1833
      %v1835 = vmul.f32 %v1544, %v1834
      %vm1836 = vcmp.eq.f32.partialorder %v1544, inf
      %v1837 = vsel %vm1836, %v1544, %v1835
      %vm1838 = vcmp.eq.f32.partialorder %v1544, 0.0
      %v1839 = vand.u32 %v1544, 2147483648
      %v1840 = vsel %vm1838, %v1839, %v1837
      %v1841 = vrsqrt.pop %v1545
      %v1842 = vmul.f32 %v1841, %v1545
      %v1843 = vmul.f32 %v1842, %v1841
      %v1844 = vmul.f32 0.5, %v1843
      %v1845 = vsub.f32 1.5, %v1844
      %v1846 = vmul.f32 %v1841, %v1845
      %v1847 = vmul.f32 %v1545, %v1846
      %vm1848 = vcmp.eq.f32.partialorder %v1545, inf
      %v1849 = vsel %vm1848, %v1545, %v1847
      %vm1850 = vcmp.eq.f32.partialorder %v1545, 0.0
      %v1851 = vand.u32 %v1545, 2147483648
      %v1852 = vsel %vm1850, %v1851, %v1849
      %v1853 = vrsqrt.pop %v1546
      %v1854 = vmul.f32 %v1853, %v1546
      %v1855 = vmul.f32 %v1854, %v1853
      %v1856 = vmul.f32 0.5, %v1855
      %v1857 = vsub.f32 1.5, %v1856
      %v1858 = vmul.f32 %v1853, %v1857
      %v1859 = vmul.f32 %v1546, %v1858
      %vm1860 = vcmp.eq.f32.partialorder %v1546, inf
      %v1861 = vsel %vm1860, %v1546, %v1859
      %vm1862 = vcmp.eq.f32.partialorder %v1546, 0.0
      %v1863 = vand.u32 %v1546, 2147483648
      %v1864 = vsel %vm1862, %v1863, %v1861
      %v1865 = vrsqrt.pop %v1547
      %v1866 = vmul.f32 %v1865, %v1547
      %v1867 = vmul.f32 %v1866, %v1865
      %v1868 = vmul.f32 0.5, %v1867
      %v1869 = vsub.f32 1.5, %v1868
      %v1870 = vmul.f32 %v1865, %v1869
      %v1871 = vmul.f32 %v1547, %v1870
      %vm1872 = vcmp.eq.f32.partialorder %v1547, inf
      %v1873 = vsel %vm1872, %v1547, %v1871
      %vm1874 = vcmp.eq.f32.partialorder %v1547, 0.0
      %v1875 = vand.u32 %v1547, 2147483648
      %v1876 = vsel %vm1874, %v1875, %v1873
      %v1877 = vrsqrt.pop %v1548
      %v1878 = vmul.f32 %v1877, %v1548
      %v1879 = vmul.f32 %v1878, %v1877
      %v1880 = vmul.f32 0.5, %v1879
      %v1881 = vsub.f32 1.5, %v1880
      %v1882 = vmul.f32 %v1877, %v1881
      %v1883 = vmul.f32 %v1548, %v1882
      %vm1884 = vcmp.eq.f32.partialorder %v1548, inf
      %v1885 = vsel %vm1884, %v1548, %v1883
      %vm1886 = vcmp.eq.f32.partialorder %v1548, 0.0
      %v1887 = vand.u32 %v1548, 2147483648
      %v1888 = vsel %vm1886, %v1887, %v1885
      %v1889 = vrsqrt.pop %v1549
      %v1890 = vmul.f32 %v1889, %v1549
      %v1891 = vmul.f32 %v1890, %v1889
      %v1892 = vmul.f32 0.5, %v1891
      %v1893 = vsub.f32 1.5, %v1892
      %v1894 = vmul.f32 %v1889, %v1893
      %v1895 = vmul.f32 %v1549, %v1894
      %vm1896 = vcmp.eq.f32.partialorder %v1549, inf
      %v1897 = vsel %vm1896, %v1549, %v1895
      %vm1898 = vcmp.eq.f32.partialorder %v1549, 0.0
      %v1899 = vand.u32 %v1549, 2147483648
      %v1900 = vsel %vm1898, %v1899, %v1897
      %v1901 = vrsqrt.pop %v1550
      %v1902 = vmul.f32 %v1901, %v1550
      %v1903 = vmul.f32 %v1902, %v1901
      %v1904 = vmul.f32 0.5, %v1903
      %v1905 = vsub.f32 1.5, %v1904
      %v1906 = vmul.f32 %v1901, %v1905
      %v1907 = vmul.f32 %v1550, %v1906
      %vm1908 = vcmp.eq.f32.partialorder %v1550, inf
      %v1909 = vsel %vm1908, %v1550, %v1907
      %vm1910 = vcmp.eq.f32.partialorder %v1550, 0.0
      %v1911 = vand.u32 %v1550, 2147483648
      %v1912 = vsel %vm1910, %v1911, %v1909
      %v1913 = vrsqrt.pop %v1551
      %v1914 = vmul.f32 %v1913, %v1551
      %v1915 = vmul.f32 %v1914, %v1913
      %v1916 = vmul.f32 0.5, %v1915
      %v1917 = vsub.f32 1.5, %v1916
      %v1918 = vmul.f32 %v1913, %v1917
      %v1919 = vmul.f32 %v1551, %v1918
      %vm1920 = vcmp.eq.f32.partialorder %v1551, inf
      %v1921 = vsel %vm1920, %v1551, %v1919
      %vm1922 = vcmp.eq.f32.partialorder %v1551, 0.0
      %v1923 = vand.u32 %v1551, 2147483648
      %v1924 = vsel %vm1922, %v1923, %v1921
      %v1925 = vrsqrt.pop %v1552
      %v1926 = vmul.f32 %v1925, %v1552
      %v1927 = vmul.f32 %v1926, %v1925
      %v1928 = vmul.f32 0.5, %v1927
      %v1929 = vsub.f32 1.5, %v1928
      %v1930 = vmul.f32 %v1925, %v1929
      %v1931 = vmul.f32 %v1552, %v1930
      %vm1932 = vcmp.eq.f32.partialorder %v1552, inf
      %v1933 = vsel %vm1932, %v1552, %v1931
      %vm1934 = vcmp.eq.f32.partialorder %v1552, 0.0
      %v1935 = vand.u32 %v1552, 2147483648
      %v1936 = vsel %vm1934, %v1935, %v1933
      %v1937 = vmul.f32 %v686, %v1564
      %v1938 = vmul.f32 %v687, %v1576
      %v1939 = vmul.f32 %v688, %v1588
      %v1940 = vmul.f32 %v689, %v1600
      %v1941 = vmul.f32 %v690, %v1612
      %v1942 = vmul.f32 %v691, %v1624
      %v1943 = vmul.f32 %v692, %v1636
      %v1944 = vmul.f32 %v693, %v1648
      %v1945 = vmul.f32 %v694, %v1660
      %v1946 = vmul.f32 %v695, %v1672
      %v1947 = vmul.f32 %v696, %v1684
      %v1948 = vmul.f32 %v697, %v1696
      %v1949 = vmul.f32 %v698, %v1708
      %v1950 = vmul.f32 %v699, %v1720
      %v1951 = vmul.f32 %v700, %v1732
      %v1952 = vmul.f32 %v701, %v1744
      %v1953 = vmul.f32 %v702, %v1756
      %v1954 = vmul.f32 %v703, %v1768
      %v1955 = vmul.f32 %v704, %v1780
      %v1956 = vmul.f32 %v705, %v1792
      %v1957 = vmul.f32 %v706, %v1804
      %v1958 = vmul.f32 %v707, %v1816
      %v1959 = vmul.f32 %v708, %v1828
      %v1960 = vmul.f32 %v709, %v1840
      %v1961 = vmul.f32 %v710, %v1852
      %v1962 = vmul.f32 %v711, %v1864
      %v1963 = vmul.f32 %v712, %v1876
      %v1964 = vmul.f32 %v713, %v1888
      %v1965 = vmul.f32 %v714, %v1900
      %v1966 = vmul.f32 %v715, %v1912
      %v1967 = vmul.f32 %v716, %v1924
      %v1968 = vmul.f32 %v717, %v1936
      %v1969 = vadd.f32 %v1457, %v1937
      %v1970 = vadd.f32 %v1458, %v1938
      %v1971 = vadd.f32 %v1459, %v1939
      %v1972 = vadd.f32 %v1460, %v1940
      %v1973 = vadd.f32 %v1461, %v1941
      %v1974 = vadd.f32 %v1462, %v1942
      %v1975 = vadd.f32 %v1463, %v1943
      %v1976 = vadd.f32 %v1464, %v1944
      %v1977 = vadd.f32 %v1465, %v1945
      %v1978 = vadd.f32 %v1466, %v1946
      %v1979 = vadd.f32 %v1467, %v1947
      %v1980 = vadd.f32 %v1468, %v1948
      %v1981 = vadd.f32 %v1469, %v1949
      %v1982 = vadd.f32 %v1470, %v1950
      %v1983 = vadd.f32 %v1471, %v1951
      %v1984 = vadd.f32 %v1472, %v1952
      %v1985 = vadd.f32 %v1473, %v1953
      %v1986 = vadd.f32 %v1474, %v1954
      %v1987 = vadd.f32 %v1475, %v1955
      %v1988 = vadd.f32 %v1476, %v1956
      %v1989 = vadd.f32 %v1477, %v1957
      %v1990 = vadd.f32 %v1478, %v1958
      %v1991 = vadd.f32 %v1479, %v1959
      %v1992 = vadd.f32 %v1480, %v1960
      %v1993 = vadd.f32 %v1481, %v1961
      %v1994 = vadd.f32 %v1482, %v1962
      %v1995 = vadd.f32 %v1483, %v1963
      %v1996 = vadd.f32 %v1484, %v1964
      %v1997 = vadd.f32 %v1485, %v1965
      %v1998 = vadd.f32 %v1486, %v1966
      %v1999 = vadd.f32 %v1487, %v1967
      %v2000 = vadd.f32 %v1488, %v1968
      %v2001 = vsub.f32 %v1969, 0.07
      %v2002 = vsub.f32 %v1970, 0.07
      %v2003 = vsub.f32 %v1971, 0.07
      %v2004 = vsub.f32 %v1972, 0.07
      %v2005 = vsub.f32 %v1973, 0.07
      %v2006 = vsub.f32 %v1974, 0.07
      %v2007 = vsub.f32 %v1975, 0.07
      %v2008 = vsub.f32 %v1976, 0.07
      %v2009 = vsub.f32 %v1977, 0.07
      %v2010 = vsub.f32 %v1978, 0.07
      %v2011 = vsub.f32 %v1979, 0.07
      %v2012 = vsub.f32 %v1980, 0.07
      %v2013 = vsub.f32 %v1981, 0.07
      %v2014 = vsub.f32 %v1982, 0.07
      %v2015 = vsub.f32 %v1983, 0.07
      %v2016 = vsub.f32 %v1984, 0.07
      %v2017 = vsub.f32 %v1985, 0.07
      %v2018 = vsub.f32 %v1986, 0.07
      %v2019 = vsub.f32 %v1987, 0.07
      %v2020 = vsub.f32 %v1988, 0.07
      %v2021 = vsub.f32 %v1989, 0.07
      %v2022 = vsub.f32 %v1990, 0.07
      %v2023 = vsub.f32 %v1991, 0.07
      %v2024 = vsub.f32 %v1992, 0.07
      %v2025 = vsub.f32 %v1993, 0.07
      %v2026 = vsub.f32 %v1994, 0.07
      %v2027 = vsub.f32 %v1995, 0.07
      %v2028 = vsub.f32 %v1996, 0.07
      %v2029 = vsub.f32 %v1997, 0.07
      %v2030 = vsub.f32 %v1998, 0.07
      %v2031 = vsub.f32 %v1999, 0.07
      %v2032 = vsub.f32 %v2000, 0.07
      %v2033 = vmul.f32 %v2001, 2.857143
      %v2034 = vmul.f32 %v2002, 2.857143
      %v2035 = vmul.f32 %v2003, 2.857143
      %v2036 = vmul.f32 %v2004, 2.857143
      %v2037 = vmul.f32 %v2005, 2.857143
      %v2038 = vmul.f32 %v2006, 2.857143
      %v2039 = vmul.f32 %v2007, 2.857143
      %v2040 = vmul.f32 %v2008, 2.857143
      %v2041 = vmul.f32 %v2009, 2.857143
      %v2042 = vmul.f32 %v2010, 2.857143
      %v2043 = vmul.f32 %v2011, 2.857143
      %v2044 = vmul.f32 %v2012, 2.857143
      %v2045 = vmul.f32 %v2013, 2.857143
      %v2046 = vmul.f32 %v2014, 2.857143
      %v2047 = vmul.f32 %v2015, 2.857143
      %v2048 = vmul.f32 %v2016, 2.857143
      %v2049 = vmul.f32 %v2017, 2.857143
      %v2050 = vmul.f32 %v2018, 2.857143
      %v2051 = vmul.f32 %v2019, 2.857143
      %v2052 = vmul.f32 %v2020, 2.857143
      %v2053 = vmul.f32 %v2021, 2.857143
      %v2054 = vmul.f32 %v2022, 2.857143
      %v2055 = vmul.f32 %v2023, 2.857143
      %v2056 = vmul.f32 %v2024, 2.857143
      %v2057 = vmul.f32 %v2025, 2.857143
      %v2058 = vmul.f32 %v2026, 2.857143
      %v2059 = vmul.f32 %v2027, 2.857143
      %v2060 = vmul.f32 %v2028, 2.857143
      %v2061 = vmul.f32 %v2029, 2.857143
      %v2062 = vmul.f32 %v2030, 2.857143
      %v2063 = vmul.f32 %v2031, 2.857143
      %v2064 = vmul.f32 %v2032, 2.857143
      %v2065 = vmax.f32 %v2033, 0.0
      %v2066 = vmax.f32 %v2034, 0.0
      %v2067 = vmax.f32 %v2035, 0.0
      %v2068 = vmax.f32 %v2036, 0.0
      %v2069 = vmax.f32 %v2037, 0.0
      %v2070 = vmax.f32 %v2038, 0.0
      %v2071 = vmax.f32 %v2039, 0.0
      %v2072 = vmax.f32 %v2040, 0.0
      %v2073 = vmax.f32 %v2041, 0.0
      %v2074 = vmax.f32 %v2042, 0.0
      %v2075 = vmax.f32 %v2043, 0.0
      %v2076 = vmax.f32 %v2044, 0.0
      %v2077 = vmax.f32 %v2045, 0.0
      %v2078 = vmax.f32 %v2046, 0.0
      %v2079 = vmax.f32 %v2047, 0.0
      %v2080 = vmax.f32 %v2048, 0.0
      %v2081 = vmax.f32 %v2049, 0.0
      %v2082 = vmax.f32 %v2050, 0.0
      %v2083 = vmax.f32 %v2051, 0.0
      %v2084 = vmax.f32 %v2052, 0.0
      %v2085 = vmax.f32 %v2053, 0.0
      %v2086 = vmax.f32 %v2054, 0.0
      %v2087 = vmax.f32 %v2055, 0.0
      %v2088 = vmax.f32 %v2056, 0.0
      %v2089 = vmax.f32 %v2057, 0.0
      %v2090 = vmax.f32 %v2058, 0.0
      %v2091 = vmax.f32 %v2059, 0.0
      %v2092 = vmax.f32 %v2060, 0.0
      %v2093 = vmax.f32 %v2061, 0.0
      %v2094 = vmax.f32 %v2062, 0.0
      %v2095 = vmax.f32 %v2063, 0.0
      %v2096 = vmax.f32 %v2064, 0.0
      %v2097 = vpack.c.bf16 %v2065, %v2065
      %v2098 = vpack.c.bf16 %v2066, %v2066
      %v2099 = vpack.c.bf16 %v2067, %v2067
      %v2100 = vpack.c.bf16 %v2068, %v2068
      %v2101 = vpack.c.bf16 %v2069, %v2069
      %v2102 = vpack.c.bf16 %v2070, %v2070
      %v2103 = vpack.c.bf16 %v2071, %v2071
      %v2104 = vpack.c.bf16 %v2072, %v2072
      %v2105 = vpack.c.bf16 %v2073, %v2073
      %v2106 = vpack.c.bf16 %v2074, %v2074
      %v2107 = vpack.c.bf16 %v2075, %v2075
      %v2108 = vpack.c.bf16 %v2076, %v2076
      %v2109 = vpack.c.bf16 %v2077, %v2077
      %v2110 = vpack.c.bf16 %v2078, %v2078
      %v2111 = vpack.c.bf16 %v2079, %v2079
      %v2112 = vpack.c.bf16 %v2080, %v2080
      %v2113 = vpack.c.bf16 %v2081, %v2081
      %v2114 = vpack.c.bf16 %v2082, %v2082
      %v2115 = vpack.c.bf16 %v2083, %v2083
      %v2116 = vpack.c.bf16 %v2084, %v2084
      %v2117 = vpack.c.bf16 %v2085, %v2085
      %v2118 = vpack.c.bf16 %v2086, %v2086
      %v2119 = vpack.c.bf16 %v2087, %v2087
      %v2120 = vpack.c.bf16 %v2088, %v2088
      %v2121 = vpack.c.bf16 %v2089, %v2089
      %v2122 = vpack.c.bf16 %v2090, %v2090
      %v2123 = vpack.c.bf16 %v2091, %v2091
      %v2124 = vpack.c.bf16 %v2092, %v2092
      %v2125 = vpack.c.bf16 %v2093, %v2093
      %v2126 = vpack.c.bf16 %v2094, %v2094
      %v2127 = vpack.c.bf16 %v2095, %v2095
      %v2128 = vpack.c.bf16 %v2096, %v2096
      %vm2129 = vcmask 125952
      %2130 = vst.msk [vmem:[%s197] sm:$0xf] %vm2129, %v2097
      %2131 = vst.msk [vmem:[%s197 + $0x4] sm:$0xf] %vm2129, %v2098
      %2132 = vst.msk [vmem:[%s197 + $0x8] sm:$0xf] %vm2129, %v2099
      %2133 = vst.msk [vmem:[%s197 + $0xc] sm:$0xf] %vm2129, %v2100
      %2134 = vst.msk [vmem:[%s197 + $0x10] sm:$0xf] %vm2129, %v2101
      %2135 = vst.msk [vmem:[%s197 + $0x14] sm:$0xf] %vm2129, %v2102
      %2136 = vst.msk [vmem:[%s197 + $0x18] sm:$0xf] %vm2129, %v2103
      %2137 = vst.msk [vmem:[%s197 + $0x1c] sm:$0xf] %vm2129, %v2104
      %2138 = vst.msk [vmem:[%s197 + $0x20] sm:$0xf] %vm2129, %v2105
      %2139 = vst.msk [vmem:[%s197 + $0x24] sm:$0xf] %vm2129, %v2106
      %2140 = vst.msk [vmem:[%s197 + $0x28] sm:$0xf] %vm2129, %v2107
      %2141 = vst.msk [vmem:[%s197 + $0x2c] sm:$0xf] %vm2129, %v2108
      %2142 = vst.msk [vmem:[%s197 + $0x30] sm:$0xf] %vm2129, %v2109
      %2143 = vst.msk [vmem:[%s197 + $0x34] sm:$0xf] %vm2129, %v2110
      %2144 = vst.msk [vmem:[%s197 + $0x38] sm:$0xf] %vm2129, %v2111
      %2145 = vst.msk [vmem:[%s197 + $0x3c] sm:$0xf] %vm2129, %v2112
      %2146 = vst.msk [vmem:[%s197 + $0x40] sm:$0xf] %vm2129, %v2113
      %2147 = vst.msk [vmem:[%s197 + $0x44] sm:$0xf] %vm2129, %v2114
      %2148 = vst.msk [vmem:[%s197 + $0x48] sm:$0xf] %vm2129, %v2115
      %2149 = vst.msk [vmem:[%s197 + $0x4c] sm:$0xf] %vm2129, %v2116
      %2150 = vst.msk [vmem:[%s197 + $0x50] sm:$0xf] %vm2129, %v2117
      %2151 = vst.msk [vmem:[%s197 + $0x54] sm:$0xf] %vm2129, %v2118
      %2152 = vst.msk [vmem:[%s197 + $0x58] sm:$0xf] %vm2129, %v2119
      %2153 = vst.msk [vmem:[%s197 + $0x5c] sm:$0xf] %vm2129, %v2120
      %2154 = vst.msk [vmem:[%s197 + $0x60] sm:$0xf] %vm2129, %v2121
      %2155 = vst.msk [vmem:[%s197 + $0x64] sm:$0xf] %vm2129, %v2122
      %2156 = vst.msk [vmem:[%s197 + $0x68] sm:$0xf] %vm2129, %v2123
      %2157 = vst.msk [vmem:[%s197 + $0x6c] sm:$0xf] %vm2129, %v2124
      %2158 = vst.msk [vmem:[%s197 + $0x70] sm:$0xf] %vm2129, %v2125
      %2159 = vst.msk [vmem:[%s197 + $0x74] sm:$0xf] %vm2129, %v2126
      %2160 = vst.msk [vmem:[%s197 + $0x78] sm:$0xf] %vm2129, %v2127
      %2161 = vst.msk [vmem:[%s197 + $0x7c] sm:$0xf] %vm2129, %v2128
      %s2162 = smul.u32 32, %s14
      %p2163 = scmp.lt.s32.totalorder %s2162, 63
      %s2164 = scalar_select %p2163, %s2162, 63
      %s2165 = smul.addr %s2164, 4
      %s2166 = scalar_lea.vmem %s3, %s2165
      // Predicated region
      $region33: #{_lambda_.12} parent=31 // pred_check
        %p2167 = pneg %p105
      $region34: #{_lambda_.12} parent=31 // pred_check_branch
        %2169 = sbr.rel (%p2167) target = $region36
      $region35: #{_lambda_.12} parent=31 // pred_region
        %s2170 = smul.u32 32, %s14
      $region36: #{_lambda_.12} parent=31 // pred_fallthru
        _
    $region32: #{_lambda_.12} parent=5 // pred_fallthru
      _
    %p2171 = scmp.le.s32.totalorder 2, %s9
    // Predicated region
    $region37: #{_lambda_.12} parent=5 // pred_check
      %p2172 = pneg %p2171
    $region38: #{_lambda_.12} parent=5 // pred_check_branch
      %2174 = sbr.rel (%p2172) target = $region40
    $region39: #{_lambda_.12} parent=5 // pred_region
      %s2175 = ssub.s32 %s9, 2
      // Predicated region
      $region41: #{_lambda_.12} parent=39 // pred_check
        %p2176 = pneg %p111
      $region42: #{_lambda_.12} parent=39 // pred_check_branch
        %2178 = sbr.rel (%p2176) target = $region44
      $region43: #{_lambda_.12} parent=39 // pred_region
        %s2179 = smul.u32 32, %s15
        %p2180 = scmp.lt.s32.totalorder %s2179, 63
        %s2181 = scalar_select %p2180, %s2179, 63
        %s2182 = smul.addr %s2181, 4
        %s2183 = scalar_lea.vmem %s3, %s2182
      $region44: #{_lambda_.12} parent=39 // pred_fallthru
        _
    $region40: #{_lambda_.12} parent=5 // pred_fallthru
      _
  $region6: #{_lambda_.12} parent=0 // loop_footer
    %s13 = sadd.s32 1, %s9
  $region7: #{_lambda_.12} parent=0 // loop_footer_branch
    %8 = sbr.rel target = $region3
  $region8: #{_lambda_.12} parent=0 // loop_exit
    _

// kernel: _lambda_.15
$region0: #{_lambda_.15}
  #allocation0 [shape = 'u32[]', space=smem, size = 0x4, offset = 0x4, fixed_abs, tag = 'smem constant byte address 0x4 - core index']
  #allocation1 [shape = 'u32[72,128]{1,0:T(1,128)}', space=vmem, size = 0x9000, scoped, tag = 'internal scratch']
  %s0 = inlined_call_operand.vmem [shape: bf16[128,8], index: 0, kind: input, shape index: {}]
  %s1 = inlined_call_operand.vmem [shape: bf16[8,40], index: 1, kind: input, shape index: {}]
  %s2 = inlined_call_operand.vmem [shape: f32[1,40], index: 2, kind: input, shape index: {}]
  %s3 = inlined_call_operand.vmem [shape: f32[1,40], index: 3, kind: input, shape index: {}]
  %s4 = inlined_call_operand.vmem [shape: bf16[128,40], index: 4, kind: output, shape index: {}]
  %s5 = sld [smem:[#allocation0]]
  $region49: #{_lambda_.15} parent=0
    _
  %s7 = ssub.s32 1, %s5
  %s8 = scalar_select 0, %s7, %s5
  loop: start=0, step=1, limit=4
  $region2: #{_lambda_.15} parent=0 // loop_pre_header
    _
  $region3: #{_lambda_.15} parent=0 // loop_header
    %s10 = sphi 0, %s14
    %p11 = scmp.ge.s32.totalorder %s10, 4
    %s20 = sphi 0, %s22
    %s23 = sphi 0, %s20
    %s24 = sphi 0, %s23
    %s40 = sphi 0, %s24
    %s44 = sphi 0, %s44
    %s46 = sphi 0, %s44
    %s47 = sphi 0, %s46
    %s61 = sphi 0, %s47
    %s65 = sphi 0, %s65
    %s67 = sphi 0, %s65
    %s68 = sphi 0, %s67
    %s82 = sphi 0, %s68
    %s86 = sphi 0, %s86
    %s88 = sphi 0, %s86
    %s89 = sphi 0, %s88
    %s103 = sphi 0, %s89
    %s109 = sphi 0, %s111
    %s112 = sphi 0, %s109
    %s113 = sphi 0, %s112
    %s129 = sphi 0, %s113
  $region4: #{_lambda_.15} parent=0 // loop_header_branch
    %13 = sbr.rel (%p11) target = $region8
  $region5: #{_lambda_.15} parent=0 // loop_body
    %s15 = ssub.s32 %s10, 1
    %s16 = ssub.s32 %s10, 2
    %s17 = sadd.s32 %s10, 1
    %s18 = ssub.s32 %s10, %s17
    %p19 = scmp.eq.s32.totalorder %s18, 0
    %s21 = sadd.s32 %s20, 1
    %s22 = scalar_select %p19, %s20, %s21
    %p25 = pneg %p19
    %p26 = scmp.eq.s32.totalorder %s10, 1
    %p27 = por %p25, %p26
    %p28 = scmp.ne.s32.totalorder %s20, %s23
    %p29 = scmp.eq.s32.totalorder %s10, 0
    %p30 = por %p28, %p29
    %p31 = scmp.ne.s32.totalorder %s20, %s23
    %p32 = scmp.eq.s32.totalorder %s15, 1
    %p33 = por %p31, %p32
    %p34 = scmp.ne.s32.totalorder %s23, %s24
    %p35 = scmp.eq.s32.totalorder %s15, 0
    %p36 = por %p34, %p35
    %p37 = scmp.ne.s32.totalorder %s23, %s24
    %p38 = scmp.eq.s32.totalorder %s16, 1
    %p39 = por %p37, %p38
    %p41 = scmp.ne.s32.totalorder %s24, %s40
    %p42 = scmp.eq.s32.totalorder %s16, 0
    %p43 = por %p41, %p42
    %s45 = sadd.s32 %s44, 1
    %p48 = scmp.eq.s32.totalorder %s10, 1
    %p49 = scmp.ne.s32.totalorder %s44, %s46
    %p50 = scmp.eq.s32.totalorder %s10, 0
    %p51 = por %p49, %p50
    %p52 = scmp.ne.s32.totalorder %s44, %s46
    %p53 = scmp.eq.s32.totalorder %s15, 1
    %p54 = por %p52, %p53
    %p55 = scmp.ne.s32.totalorder %s46, %s47
    %p56 = scmp.eq.s32.totalorder %s15, 0
    %p57 = por %p55, %p56
    %p58 = scmp.ne.s32.totalorder %s46, %s47
    %p59 = scmp.eq.s32.totalorder %s16, 1
    %p60 = por %p58, %p59
    %p62 = scmp.ne.s32.totalorder %s47, %s61
    %p63 = scmp.eq.s32.totalorder %s16, 0
    %p64 = por %p62, %p63
    %s66 = sadd.s32 %s65, 1
    %p69 = scmp.eq.s32.totalorder %s10, 1
    %p70 = scmp.ne.s32.totalorder %s65, %s67
    %p71 = scmp.eq.s32.totalorder %s10, 0
    %p72 = por %p70, %p71
    %p73 = scmp.ne.s32.totalorder %s65, %s67
    %p74 = scmp.eq.s32.totalorder %s15, 1
    %p75 = por %p73, %p74
    %p76 = scmp.ne.s32.totalorder %s67, %s68
    %p77 = scmp.eq.s32.totalorder %s15, 0
    %p78 = por %p76, %p77
    %p79 = scmp.ne.s32.totalorder %s67, %s68
    %p80 = scmp.eq.s32.totalorder %s16, 1
    %p81 = por %p79, %p80
    %p83 = scmp.ne.s32.totalorder %s68, %s82
    %p84 = scmp.eq.s32.totalorder %s16, 0
    %p85 = por %p83, %p84
    %s87 = sadd.s32 %s86, 1
    %p90 = scmp.eq.s32.totalorder %s10, 1
    %p91 = scmp.ne.s32.totalorder %s86, %s88
    %p92 = scmp.eq.s32.totalorder %s10, 0
    %p93 = por %p91, %p92
    %p94 = scmp.ne.s32.totalorder %s86, %s88
    %p95 = scmp.eq.s32.totalorder %s15, 1
    %p96 = por %p94, %p95
    %p97 = scmp.ne.s32.totalorder %s88, %s89
    %p98 = scmp.eq.s32.totalorder %s15, 0
    %p99 = por %p97, %p98
    %p100 = scmp.ne.s32.totalorder %s88, %s89
    %p101 = scmp.eq.s32.totalorder %s16, 1
    %p102 = por %p100, %p101
    %p104 = scmp.ne.s32.totalorder %s89, %s103
    %p105 = scmp.eq.s32.totalorder %s16, 0
    %p106 = por %p104, %p105
    %s107 = ssub.s32 %s10, %s17
    %p108 = scmp.eq.s32.totalorder %s107, 0
    %s110 = sadd.s32 %s109, 1
    %s111 = scalar_select %p108, %s109, %s110
    %p114 = pneg %p108
    %p115 = scmp.eq.s32.totalorder %s10, 1
    %p116 = por %p114, %p115
    %p117 = scmp.ne.s32.totalorder %s109, %s112
    %p118 = scmp.eq.s32.totalorder %s10, 0
    %p119 = por %p117, %p118
    %p120 = scmp.ne.s32.totalorder %s109, %s112
    %p121 = scmp.eq.s32.totalorder %s15, 1
    %p122 = por %p120, %p121
    %p123 = scmp.ne.s32.totalorder %s112, %s113
    %p124 = scmp.eq.s32.totalorder %s15, 0
    %p125 = por %p123, %p124
    %p126 = scmp.ne.s32.totalorder %s112, %s113
    %p127 = scmp.eq.s32.totalorder %s16, 1
    %p128 = por %p126, %p127
    %p130 = scmp.ne.s32.totalorder %s113, %s129
    %p131 = scmp.eq.s32.totalorder %s16, 0
    %p132 = por %p130, %p131
    %p133 = scmp.le.s32.totalorder 1, %s10
    %p134 = scmp.lt.s32.totalorder %s10, 3
    %p135 = pnand %p133, %p134
    %p136 = pneg %p135
    // Predicated region
    $region9: #{_lambda_.15} parent=5 // pred_check
      _
    $region10: #{_lambda_.15} parent=5 // pred_check_branch
      %138 = sbr.rel (%p135) target = $region12
    $region11: #{_lambda_.15} parent=5 // pred_region
      %s139 = ssub.s32 %s10, 1
      // Predicated region
      $region13: #{_lambda_.15} parent=11 // pred_check
        %p140 = pneg %p57
      $region14: #{_lambda_.15} parent=11 // pred_check_branch
        %142 = sbr.rel (%p140) target = $region16
      $region15: #{_lambda_.15} parent=11 // pred_region
        _
      $region16: #{_lambda_.15} parent=11 // pred_fallthru
        _
      // Predicated region
      $region17: #{_lambda_.15} parent=11 // pred_check
        %p143 = pneg %p78
      $region18: #{_lambda_.15} parent=11 // pred_check_branch
        %145 = sbr.rel (%p143) target = $region20
      $region19: #{_lambda_.15} parent=11 // pred_region
        _
      $region20: #{_lambda_.15} parent=11 // pred_fallthru
        _
      // Predicated region
      $region21: #{_lambda_.15} parent=11 // pred_check
        %p146 = pneg %p99
      $region22: #{_lambda_.15} parent=11 // pred_check_branch
        %148 = sbr.rel (%p146) target = $region24
      $region23: #{_lambda_.15} parent=11 // pred_region
        _
      $region24: #{_lambda_.15} parent=11 // pred_fallthru
        _
    $region12: #{_lambda_.15} parent=5 // pred_fallthru
      _
    %p149 = scmp.lt.s32.totalorder %s10, 2
    // Predicated region
    $region25: #{_lambda_.15} parent=5 // pred_check
      %p150 = pneg %p149
    $region26: #{_lambda_.15} parent=5 // pred_check_branch
      %152 = sbr.rel (%p150) target = $region28
    $region27: #{_lambda_.15} parent=5 // pred_region
      // Predicated region
      $region29: #{_lambda_.15} parent=27 // pred_check
        %p153 = pneg %p30
      $region30: #{_lambda_.15} parent=27 // pred_check_branch
        %155 = sbr.rel (%p153) target = $region32
      $region31: #{_lambda_.15} parent=27 // pred_region
        %s156 = smul.u32 8, %s10
        %p157 = scmp.lt.s32.totalorder %s156, 15
        %s158 = scalar_select %p157, %s156, 15
        %s159 = smul.addr %s158, 4
        %s160 = scalar_lea.vmem %s0, %s159
        %s161 = smul.u32 8, %s10
      $region32: #{_lambda_.15} parent=27 // pred_fallthru
        _
    $region28: #{_lambda_.15} parent=5 // pred_fallthru
      _
    %p162 = scmp.le.s32.totalorder 1, %s10
    %p163 = scmp.lt.s32.totalorder %s10, 3
    %p164 = pnand %p162, %p163
    %p165 = pneg %p164
    // Predicated region
    $region33: #{_lambda_.15} parent=5 // pred_check
      _
    $region34: #{_lambda_.15} parent=5 // pred_check_branch
      %167 = sbr.rel (%p164) target = $region36
    $region35: #{_lambda_.15} parent=5 // pred_region
      %s168 = ssub.s32 %s10, 1
      %s169 = smul.u32 8, %s15
      %p170 = scmp.lt.s32.totalorder %s169, 15
      %s171 = scalar_select %p170, %s169, 15
      %s172 = smul.addr %s171, 4
      %s173 = scalar_lea.vmem %s0, %s172
      %p174 = pneg %p36
      %p175 = pneg %p33
      %p176 = pneg %p57
      %p177 = pneg %p54
      %p178 = pneg %p78
      %p179 = pneg %p75
      %p180 = pneg %p99
      %p181 = pneg %p96
      %p182 = pneg %p125
      %p183 = pneg %p122
      %s184 = smul.u32 8, %s15
      %p185 = scmp.lt.s32.totalorder %s184, 15
      %s186 = scalar_select %p185, %s184, 15
      %s187 = smul.addr %s186, 4
      %s188 = scalar_lea.vmem %s4, %s187
      %s189 = smul.u32 8, %s15
      %p190 = scmp.lt.s32.totalorder %s189, 15
      %s191 = scalar_select %p190, %s189, 15
      %s192 = smul.addr %s191, 4
      %s193 = scalar_lea.vmem %s0, %s192
      %s194 = smul.u32 8, %s15
      %s195 = smul.u32 8, %s15
      %p196 = scmp.lt.s32.totalorder %s195, 15
      %s197 = scalar_select %p196, %s195, 15
      %s198 = smul.addr %s197, 4
      %s199 = scalar_lea.vmem %s4, %s198
      %s200 = smul.u32 8, %s15
      %v202 = vld [vmem:[%s193] sm:$0xf]
      %v203 = vld [vmem:[%s193 + $0x4] sm:$0xf]
      %v204 = vld [vmem:[%s193 + $0x8] sm:$0xf]
      %v205 = vld [vmem:[%s193 + $0xc] sm:$0xf]
      %v206 = vld [vmem:[%s193 + $0x10] sm:$0xf]
      %v207 = vld [vmem:[%s193 + $0x14] sm:$0xf]
      %v208 = vld [vmem:[%s193 + $0x18] sm:$0xf]
      %v209 = vld [vmem:[%s193 + $0x1c] sm:$0xf]
      %v210 = vld [vmem:[%s1] sm:$0xf]
      %v211 = vld [vmem:[%s2] sm:$0x1]
      %v213 = vperm.slane %v211, 0
      %v223 = vunpack.c.l.b16 %v202
      %v224 = vunpack.c.l.b16 %v203
      %v225 = vunpack.c.l.b16 %v204
      %v226 = vunpack.c.l.b16 %v205
      %v227 = vunpack.c.l.b16 %v206
      %v228 = vunpack.c.l.b16 %v207
      %v229 = vunpack.c.l.b16 %v208
      %v230 = vunpack.c.l.b16 %v209
      %v231 = vpack.c.b16 %v224, %v223
      %v232 = vpack.c.b16 %v226, %v225
      %v233 = vpack.c.b16 %v228, %v227
      %v234 = vpack.c.b16 %v230, %v229
      %vm235 = vcmask 64512
      %v237 = vsel %vm235, %v231, 0
      %v240 = vsel %vm235, %v232, 0
      %v243 = vsel %vm235, %v233, 0
      %v246 = vsel %vm235, %v234, 0
      %vm248 = vcmask 1043456
      %v250 = vsel %vm248, %v210, 0
      %252 = vmatpush.bf16.msra.mxu0 0
      %253 = vmatpush.bf16.msra.mxu0 0
      %254 = vmatpush.bf16.msra.mxu0 0
      %255 = vmatpush.bf16.msra.mxu0 0
      %256 = vmatpush.bf16.msra.mxu0 0
      %257 = vmatpush.bf16.msra.mxu0 0
      %258 = vmatpush.bf16.msra.mxu0 0
      %259 = vmatpush.bf16.msra.mxu0 %v250
      %260 = vmatmul.bf16.gmra.mxu0 %v237
      %v261 = vpop.f32.mrf.mxu0
      %v262 = vadd.f32 %v213, %v261
      %v263 = vpop.f32.mrf.mxu0
      %v264 = vadd.f32 %v213, %v263
      %265 = vmatmul.bf16.gmra.mxu0 %v240
      %v266 = vpop.f32.mrf.mxu0
      %v267 = vadd.f32 %v213, %v266
      %v268 = vpop.f32.mrf.mxu0
      %v269 = vadd.f32 %v213, %v268
      %270 = vmatmul.bf16.gmra.mxu0 %v243
      %v271 = vpop.f32.mrf.mxu0
      %v272 = vadd.f32 %v213, %v271
      %v273 = vpop.f32.mrf.mxu0
      %v274 = vadd.f32 %v213, %v273
      %275 = vmatmul.bf16.gmra.mxu0 %v246
      %v276 = vpop.f32.mrf.mxu0
      %v277 = vadd.f32 %v213, %v276
      %v278 = vpop.f32.mrf.mxu0
      %v279 = vadd.f32 %v213, %v278
      %280 = vdwg.mxu0
      %v281 = vld [vmem:[%s3] sm:$0x1]
      %vm282 = vcmp.gt.f32.partialorder %v281, 0.5
      %v283 = vmax.f32 %v262, 0.0
      %v284 = vmax.f32 %v264, 0.0
      %v285 = vmax.f32 %v267, 0.0
      %v286 = vmax.f32 %v269, 0.0
      %v287 = vmax.f32 %v272, 0.0
      %v288 = vmax.f32 %v274, 0.0
      %v289 = vmax.f32 %v277, 0.0
      %v290 = vmax.f32 %v279, 0.0
      %v291 = vsel %vm282, 1, 0
      %v292 = vperm.slane %v291, 0
      %vm293 = vcmp.eq.s32.totalorder %v292, 1
      %v294 = vsel %vm293, %v283, %v262
      %v295 = vsel %vm293, %v284, %v264
      %v296 = vsel %vm293, %v285, %v267
      %v297 = vsel %vm293, %v286, %v269
      %v298 = vsel %vm293, %v287, %v272
      %v299 = vsel %vm293, %v288, %v274
      %v300 = vsel %vm293, %v289, %v277
      %v301 = vsel %vm293, %v290, %v279
      %v302 = vpack.c.bf16 %v294, %v294
      %v303 = vpack.c.bf16 %v295, %v295
      %v304 = vpack.c.bf16 %v296, %v296
      %v305 = vpack.c.bf16 %v297, %v297
      %v306 = vpack.c.bf16 %v298, %v298
      %v307 = vpack.c.bf16 %v299, %v299
      %v308 = vpack.c.bf16 %v300, %v300
      %v309 = vpack.c.bf16 %v301, %v301
      %vm310 = vcmask 322560
      %311 = vst.msk [vmem:[%s199] sm:$0xf] %vm310, %v302
      %312 = vst.msk [vmem:[%s199 + $0x4] sm:$0xf] %vm310, %v303
      %313 = vst.msk [vmem:[%s199 + $0x8] sm:$0xf] %vm310, %v304
      %314 = vst.msk [vmem:[%s199 + $0xc] sm:$0xf] %vm310, %v305
      %315 = vst.msk [vmem:[%s199 + $0x10] sm:$0xf] %vm310, %v306
      %316 = vst.msk [vmem:[%s199 + $0x14] sm:$0xf] %vm310, %v307
      %317 = vst.msk [vmem:[%s199 + $0x18] sm:$0xf] %vm310, %v308
      %318 = vst.msk [vmem:[%s199 + $0x1c] sm:$0xf] %vm310, %v309
      %s319 = smul.u32 8, %s15
      %p320 = scmp.lt.s32.totalorder %s319, 15
      %s321 = scalar_select %p320, %s319, 15
      %s322 = smul.addr %s321, 4
      %s323 = scalar_lea.vmem %s4, %s322
      // Predicated region
      $region37: #{_lambda_.15} parent=35 // pred_check
        %p324 = pneg %p122
      $region38: #{_lambda_.15} parent=35 // pred_check_branch
        %326 = sbr.rel (%p324) target = $region40
      $region39: #{_lambda_.15} parent=35 // pred_region
        %s327 = smul.u32 8, %s15
      $region40: #{_lambda_.15} parent=35 // pred_fallthru
        _
    $region36: #{_lambda_.15} parent=5 // pred_fallthru
      _
    %p328 = scmp.le.s32.totalorder 2, %s10
    // Predicated region
    $region41: #{_lambda_.15} parent=5 // pred_check
      %p329 = pneg %p328
    $region42: #{_lambda_.15} parent=5 // pred_check_branch
      %331 = sbr.rel (%p329) target = $region44
    $region43: #{_lambda_.15} parent=5 // pred_region
      %s332 = ssub.s32 %s10, 2
      // Predicated region
      $region45: #{_lambda_.15} parent=43 // pred_check
        %p333 = pneg %p128
      $region46: #{_lambda_.15} parent=43 // pred_check_branch
        %335 = sbr.rel (%p333) target = $region48
      $region47: #{_lambda_.15} parent=43 // pred_region
        %s336 = smul.u32 8, %s16
        %p337 = scmp.lt.s32.totalorder %s336, 15
        %s338 = scalar_select %p337, %s336, 15
        %s339 = smul.addr %s338, 4
        %s340 = scalar_lea.vmem %s4, %s339
      $region48: #{_lambda_.15} parent=43 // pred_fallthru
        _
    $region44: #{_lambda_.15} parent=5 // pred_fallthru
      _
  $region6: #{_lambda_.15} parent=0 // loop_footer
    %s14 = sadd.s32 1, %s10
  $region7: #{_lambda_.15} parent=0 // loop_footer_branch
    %9 = sbr.rel target = $region3
  $region8: #{_lambda_.15} parent=0 // loop_exit
    _

// kernel: _lambda_.14
$region0: #{_lambda_.14}
  #allocation0 [shape = 'u32[]', space=smem, size = 0x4, offset = 0x4, fixed_abs, tag = 'smem constant byte address 0x4 - core index']
  #allocation1 [shape = 'u32[72,128]{1,0:T(1,128)}', space=vmem, size = 0x9000, scoped, tag = 'internal scratch']
  %s0 = inlined_call_operand.vmem [shape: bf16[2,18,18,8], index: 0, kind: input, shape index: {}]
  %s1 = inlined_call_operand.vmem [shape: bf16[2,8,8,8], index: 1, kind: output, shape index: {}]
  %s2 = sld [smem:[#allocation0]]
  $region37: #{_lambda_.14} parent=0
    _
  %s4 = ssub.s32 1, %s2
  %s5 = scalar_select 0, %s4, %s2
  loop: start=0, step=1, limit=4
  $region2: #{_lambda_.14} parent=0 // loop_pre_header
    _
  $region3: #{_lambda_.14} parent=0 // loop_header
    %s7 = sphi 0, %s11
    %p8 = scmp.ge.s32.totalorder %s7, 4
    %s17 = sphi 0, %s19
    %s20 = sphi 0, %s17
    %s21 = sphi 0, %s20
    %s37 = sphi 0, %s21
    %s43 = sphi 0, %s45
    %s46 = sphi 0, %s43
    %s47 = sphi 0, %s46
    %s63 = sphi 0, %s47
  $region4: #{_lambda_.14} parent=0 // loop_header_branch
    %10 = sbr.rel (%p8) target = $region8
  $region5: #{_lambda_.14} parent=0 // loop_body
    %s12 = ssub.s32 %s7, 1
    %s13 = ssub.s32 %s7, 2
    %s14 = sadd.s32 %s7, 1
    %s15 = ssub.s32 %s7, %s14
    %p16 = scmp.eq.s32.totalorder %s15, 0
    %s18 = sadd.s32 %s17, 1
    %s19 = scalar_select %p16, %s17, %s18
    %p22 = pneg %p16
    %p23 = scmp.eq.s32.totalorder %s7, 1
    %p24 = por %p22, %p23
    %p25 = scmp.ne.s32.totalorder %s17, %s20
    %p26 = scmp.eq.s32.totalorder %s7, 0
    %p27 = por %p25, %p26
    %p28 = scmp.ne.s32.totalorder %s17, %s20
    %p29 = scmp.eq.s32.totalorder %s12, 1
    %p30 = por %p28, %p29
    %p31 = scmp.ne.s32.totalorder %s20, %s21
    %p32 = scmp.eq.s32.totalorder %s12, 0
    %p33 = por %p31, %p32
    %p34 = scmp.ne.s32.totalorder %s20, %s21
    %p35 = scmp.eq.s32.totalorder %s13, 1
    %p36 = por %p34, %p35
    %p38 = scmp.ne.s32.totalorder %s21, %s37
    %p39 = scmp.eq.s32.totalorder %s13, 0
    %p40 = por %p38, %p39
    %s41 = ssub.s32 %s7, %s14
    %p42 = scmp.eq.s32.totalorder %s41, 0
    %s44 = sadd.s32 %s43, 1
    %s45 = scalar_select %p42, %s43, %s44
    %p48 = pneg %p42
    %p49 = scmp.eq.s32.totalorder %s7, 1
    %p50 = por %p48, %p49
    %p51 = scmp.ne.s32.totalorder %s43, %s46
    %p52 = scmp.eq.s32.totalorder %s7, 0
    %p53 = por %p51, %p52
    %p54 = scmp.ne.s32.totalorder %s43, %s46
    %p55 = scmp.eq.s32.totalorder %s12, 1
    %p56 = por %p54, %p55
    %p57 = scmp.ne.s32.totalorder %s46, %s47
    %p58 = scmp.eq.s32.totalorder %s12, 0
    %p59 = por %p57, %p58
    %p60 = scmp.ne.s32.totalorder %s46, %s47
    %p61 = scmp.eq.s32.totalorder %s13, 1
    %p62 = por %p60, %p61
    %p64 = scmp.ne.s32.totalorder %s47, %s63
    %p65 = scmp.eq.s32.totalorder %s13, 0
    %p66 = por %p64, %p65
    %p67 = scmp.le.s32.totalorder 1, %s7
    %p68 = scmp.lt.s32.totalorder %s7, 3
    %p69 = pnand %p67, %p68
    %p70 = pneg %p69
    // Predicated region
    $region9: #{_lambda_.14} parent=5 // pred_check
      _
    $region10: #{_lambda_.14} parent=5 // pred_check_branch
      %72 = sbr.rel (%p69) target = $region12
    $region11: #{_lambda_.14} parent=5 // pred_region
      %s73 = ssub.s32 %s7, 1
    $region12: #{_lambda_.14} parent=5 // pred_fallthru
      _
    %p74 = scmp.lt.s32.totalorder %s7, 2
    // Predicated region
    $region13: #{_lambda_.14} parent=5 // pred_check
      %p75 = pneg %p74
    $region14: #{_lambda_.14} parent=5 // pred_check_branch
      %77 = sbr.rel (%p75) target = $region16
    $region15: #{_lambda_.14} parent=5 // pred_region
      // Predicated region
      $region17: #{_lambda_.14} parent=15 // pred_check
        %p78 = pneg %p27
      $region18: #{_lambda_.14} parent=15 // pred_check_branch
        %80 = sbr.rel (%p78) target = $region20
      $region19: #{_lambda_.14} parent=15 // pred_region
        %p81 = scmp.lt.s32.totalorder %s7, 1
        %s82 = scalar_select %p81, %s7, 1
        %s83 = smul.addr %s82, 54
        %s84 = smul.addr %s83, 4
        %s85 = scalar_lea.vmem %s0, %s84
      $region20: #{_lambda_.14} parent=15 // pred_fallthru
        _
    $region16: #{_lambda_.14} parent=5 // pred_fallthru
      _
    %p86 = scmp.le.s32.totalorder 1, %s7
    %p87 = scmp.lt.s32.totalorder %s7, 3
    %p88 = pnand %p86, %p87
    %p89 = pneg %p88
    // Predicated region
    $region21: #{_lambda_.14} parent=5 // pred_check
      _
    $region22: #{_lambda_.14} parent=5 // pred_check_branch
      %91 = sbr.rel (%p88) target = $region24
    $region23: #{_lambda_.14} parent=5 // pred_region
      %s92 = ssub.s32 %s7, 1
      %p93 = scmp.lt.s32.totalorder %s12, 1
      %s94 = scalar_select %p93, %s12, 1
      %s95 = smul.addr %s94, 54
      %s96 = smul.addr %s95, 4
      %s97 = scalar_lea.vmem %s0, %s96
      %p98 = pneg %p33
      %p99 = pneg %p30
      %p100 = pneg %p59
      %p101 = pneg %p56
      %p102 = scmp.lt.s32.totalorder %s12, 1
      %s103 = scalar_select %p102, %s12, 1
      %s104 = smul.addr %s103, 8
      %s105 = smul.addr %s104, 4
      %s106 = scalar_lea.vmem %s1, %s105
      %p107 = scmp.lt.s32.totalorder %s12, 1
      %s108 = scalar_select %p107, %s12, 1
      %s109 = smul.addr %s108, 54
      %s110 = smul.addr %s109, 4
      %s111 = scalar_lea.vmem %s0, %s110
      %p112 = scmp.lt.s32.totalorder %s12, 1
      %s113 = scalar_select %p112, %s12, 1
      %s114 = smul.addr %s113, 8
      %s115 = smul.addr %s114, 4
      %s116 = scalar_lea.vmem %s1, %s115
      %v117 = vld [vmem:[%s111] sm:$0xf]
      %v118 = vld [vmem:[%s111 + $0x4] sm:$0xf]
      %v119 = vld [vmem:[%s111 + $0x8] sm:$0x1]
      %v120 = vld [vmem:[%s111 + $0xc] sm:$0xf]
      %v121 = vld [vmem:[%s111 + $0x10] sm:$0xf]
      %v122 = vld [vmem:[%s111 + $0x14] sm:$0x1]
      %v123 = vld [vmem:[%s111 + $0x18] sm:$0xf]
      %v124 = vld [vmem:[%s111 + $0x1c] sm:$0xf]
      %v125 = vld [vmem:[%s111 + $0x20] sm:$0x1]
      %v126 = vld [vmem:[%s111 + $0x24] sm:$0xf]
      %v127 = vld [vmem:[%s111 + $0x28] sm:$0xf]
      %v128 = vld [vmem:[%s111 + $0x2c] sm:$0x1]
      %v129 = vld [vmem:[%s111 + $0x30] sm:$0xf]
      %v130 = vld [vmem:[%s111 + $0x34] sm:$0xf]
      %v131 = vld [vmem:[%s111 + $0x38] sm:$0x1]
      %v132 = vld [vmem:[%s111 + $0x3c] sm:$0xf]
      %v133 = vld [vmem:[%s111 + $0x40] sm:$0xf]
      %v134 = vld [vmem:[%s111 + $0x44] sm:$0x1]
      %v135 = vld [vmem:[%s111 + $0x48] sm:$0xf]
      %v136 = vld [vmem:[%s111 + $0x4c] sm:$0xf]
      %v137 = vld [vmem:[%s111 + $0x50] sm:$0x1]
      %v138 = vld [vmem:[%s111 + $0x54] sm:$0xf]
      %v139 = vld [vmem:[%s111 + $0x58] sm:$0xf]
      %v140 = vld [vmem:[%s111 + $0x5c] sm:$0x1]
      %v141 = vld [vmem:[%s111 + $0x60] sm:$0xf]
      %v142 = vld [vmem:[%s111 + $0x64] sm:$0xf]
      %v143 = vld [vmem:[%s111 + $0x68] sm:$0x1]
      %v144 = vld [vmem:[%s111 + $0x6c] sm:$0xf]
      %v145 = vld [vmem:[%s111 + $0x70] sm:$0xf]
      %v146 = vld [vmem:[%s111 + $0x74] sm:$0x1]
      %v147 = vld [vmem:[%s111 + $0x78] sm:$0xf]
      %v148 = vld [vmem:[%s111 + $0x7c] sm:$0xf]
      %v149 = vld [vmem:[%s111 + $0x80] sm:$0x1]
      %v150 = vld [vmem:[%s111 + $0x84] sm:$0xf]
      %v151 = vld [vmem:[%s111 + $0x88] sm:$0xf]
      %v152 = vld [vmem:[%s111 + $0x8c] sm:$0x1]
      %v153 = vld [vmem:[%s111 + $0x90] sm:$0xf]
      %v154 = vld [vmem:[%s111 + $0x94] sm:$0xf]
      %v155 = vld [vmem:[%s111 + $0x98] sm:$0x1]
      %v156 = vld [vmem:[%s111 + $0x9c] sm:$0xf]
      %v157 = vld [vmem:[%s111 + $0xa0] sm:$0xf]
      %v158 = vld [vmem:[%s111 + $0xa4] sm:$0x1]
      %v159 = vld [vmem:[%s111 + $0xa8] sm:$0xf]
      %v160 = vld [vmem:[%s111 + $0xac] sm:$0xf]
      %v161 = vld [vmem:[%s111 + $0xb0] sm:$0x1]
      %v162 = vld [vmem:[%s111 + $0xb4] sm:$0xf]
      %v163 = vld [vmem:[%s111 + $0xb8] sm:$0xf]
      %v164 = vld [vmem:[%s111 + $0xbc] sm:$0x1]
      %v165 = vld [vmem:[%s111 + $0xc0] sm:$0xf]
      %v166 = vld [vmem:[%s111 + $0xc4] sm:$0xf]
      %v167 = vld [vmem:[%s111 + $0xc8] sm:$0x1]
      %v168 = vunpack.c.l.bf16 %v117
      %v169 = vunpack.c.l.bf16 %v118
      %v170 = vunpack.c.l.bf16 %v120
      %v171 = vunpack.c.l.bf16 %v121
      %v172 = vunpack.c.l.bf16 %v123
      %v173 = vunpack.c.l.bf16 %v124
      %v174 = vunpack.c.l.bf16 %v126
      %v175 = vunpack.c.l.bf16 %v127
      %v176 = vunpack.c.l.bf16 %v129
      %v177 = vunpack.c.l.bf16 %v130
      %v178 = vunpack.c.l.bf16 %v132
      %v179 = vunpack.c.l.bf16 %v133
      %v180 = vunpack.c.l.bf16 %v135
      %v181 = vunpack.c.l.bf16 %v136
      %v182 = vunpack.c.l.bf16 %v138
      %v183 = vunpack.c.l.bf16 %v139
      %v184 = vunpack.c.l.bf16 %v141
      %v185 = vunpack.c.l.bf16 %v142
      %v186 = vunpack.c.l.bf16 %v144
      %v187 = vunpack.c.l.bf16 %v145
      %v188 = vunpack.c.l.bf16 %v147
      %v189 = vunpack.c.l.bf16 %v148
      %v190 = vunpack.c.l.bf16 %v150
      %v191 = vunpack.c.l.bf16 %v151
      %v192 = vunpack.c.l.bf16 %v153
      %v193 = vunpack.c.l.bf16 %v154
      %v194 = vunpack.c.l.bf16 %v156
      %v195 = vunpack.c.l.bf16 %v157
      %v196 = vunpack.c.l.bf16 %v159
      %v197 = vunpack.c.l.bf16 %v160
      %v198 = vunpack.c.l.bf16 %v162
      %v199 = vunpack.c.l.bf16 %v163
      %v200 = vunpack.c.l.bf16 %v165
      %v201 = vunpack.c.l.bf16 %v166
      %v202 = vunpack.c.l.bf16 %v119
      %v203 = vunpack.c.l.bf16 %v122
      %v204 = vunpack.c.l.bf16 %v125
      %v205 = vunpack.c.l.bf16 %v128
      %v206 = vunpack.c.l.bf16 %v131
      %v207 = vunpack.c.l.bf16 %v134
      %v208 = vunpack.c.l.bf16 %v137
      %v209 = vunpack.c.l.bf16 %v140
      %v210 = vunpack.c.l.bf16 %v143
      %v211 = vunpack.c.l.bf16 %v146
      %v212 = vunpack.c.l.bf16 %v149
      %v213 = vunpack.c.l.bf16 %v152
      %v214 = vunpack.c.l.bf16 %v155
      %v215 = vunpack.c.l.bf16 %v158
      %v216 = vunpack.c.l.bf16 %v161
      %v217 = vunpack.c.l.bf16 %v164
      %v218 = vunpack.c.l.bf16 %v167
      %vm270 = vcmask 1046528
      %v271 = vrot.slane %v168, 1
      %v272 = vrot.slane %v169, 1
      %v273 = vsel %vm270, %v271, %v272
      %v274 = vrot.slane %v202, 1
      %v275 = vsel %vm270, %v272, %v274
      %v276 = vrot.slane %v170, 1
      %v277 = vrot.slane %v171, 1
      %v278 = vsel %vm270, %v276, %v277
      %v279 = vrot.slane %v203, 1
      %v280 = vsel %vm270, %v277, %v279
      %v281 = vrot.slane %v172, 1
      %v282 = vrot.slane %v173, 1
      %v283 = vsel %vm270, %v281, %v282
      %v284 = vrot.slane %v204, 1
      %v285 = vsel %vm270, %v282, %v284
      %v286 = vrot.slane %v174, 1
      %v287 = vrot.slane %v175, 1
      %v288 = vsel %vm270, %v286, %v287
      %v289 = vrot.slane %v205, 1
      %v290 = vsel %vm270, %v287, %v289
      %v291 = vrot.slane %v176, 1
      %v292 = vrot.slane %v177, 1
      %v293 = vsel %vm270, %v291, %v292
      %v294 = vrot.slane %v206, 1
      %v295 = vsel %vm270, %v292, %v294
      %v296 = vrot.slane %v178, 1
      %v297 = vrot.slane %v179, 1
      %v298 = vsel %vm270, %v296, %v297
      %v299 = vrot.slane %v207, 1
      %v300 = vsel %vm270, %v297, %v299
      %v301 = vrot.slane %v180, 1
      %v302 = vrot.slane %v181, 1
      %v303 = vsel %vm270, %v301, %v302
      %v304 = vrot.slane %v208, 1
      %v305 = vsel %vm270, %v302, %v304
      %v306 = vrot.slane %v182, 1
      %v307 = vrot.slane %v183, 1
      %v308 = vsel %vm270, %v306, %v307
      %v309 = vrot.slane %v209, 1
      %v310 = vsel %vm270, %v307, %v309
      %v311 = vrot.slane %v184, 1
      %v312 = vrot.slane %v185, 1
      %v313 = vsel %vm270, %v311, %v312
      %v314 = vrot.slane %v210, 1
      %v315 = vsel %vm270, %v312, %v314
      %v316 = vrot.slane %v186, 1
      %v317 = vrot.slane %v187, 1
      %v318 = vsel %vm270, %v316, %v317
      %v319 = vrot.slane %v211, 1
      %v320 = vsel %vm270, %v317, %v319
      %v321 = vrot.slane %v188, 1
      %v322 = vrot.slane %v189, 1
      %v323 = vsel %vm270, %v321, %v322
      %v324 = vrot.slane %v212, 1
      %v325 = vsel %vm270, %v322, %v324
      %v326 = vrot.slane %v190, 1
      %v327 = vrot.slane %v191, 1
      %v328 = vsel %vm270, %v326, %v327
      %v329 = vrot.slane %v213, 1
      %v330 = vsel %vm270, %v327, %v329
      %v331 = vrot.slane %v192, 1
      %v332 = vrot.slane %v193, 1
      %v333 = vsel %vm270, %v331, %v332
      %v334 = vrot.slane %v214, 1
      %v335 = vsel %vm270, %v332, %v334
      %v336 = vrot.slane %v194, 1
      %v337 = vrot.slane %v195, 1
      %v338 = vsel %vm270, %v336, %v337
      %v339 = vrot.slane %v215, 1
      %v340 = vsel %vm270, %v337, %v339
      %v341 = vrot.slane %v196, 1
      %v342 = vrot.slane %v197, 1
      %v343 = vsel %vm270, %v341, %v342
      %v344 = vrot.slane %v216, 1
      %v345 = vsel %vm270, %v342, %v344
      %v346 = vrot.slane %v198, 1
      %v347 = vrot.slane %v199, 1
      %v348 = vsel %vm270, %v346, %v347
      %v349 = vrot.slane %v217, 1
      %v350 = vsel %vm270, %v347, %v349
      %v351 = vrot.slane %v200, 1
      %v352 = vrot.slane %v201, 1
      %v353 = vsel %vm270, %v351, %v352
      %v354 = vrot.slane %v218, 1
      %v355 = vsel %vm270, %v352, %v354
      %v390 = vmax.f32 %v168, %v273
      %v391 = vmax.f32 %v169, %v275
      %v392 = vmax.f32 %v170, %v278
      %v393 = vmax.f32 %v171, %v280
      %v394 = vmax.f32 %v172, %v283
      %v395 = vmax.f32 %v173, %v285
      %v396 = vmax.f32 %v174, %v288
      %v397 = vmax.f32 %v175, %v290
      %v398 = vmax.f32 %v176, %v293
      %v399 = vmax.f32 %v177, %v295
      %v400 = vmax.f32 %v178, %v298
      %v401 = vmax.f32 %v179, %v300
      %v402 = vmax.f32 %v180, %v303
      %v403 = vmax.f32 %v181, %v305
      %v404 = vmax.f32 %v182, %v308
      %v405 = vmax.f32 %v183, %v310
      %v406 = vmax.f32 %v184, %v313
      %v407 = vmax.f32 %v185, %v315
      %v408 = vmax.f32 %v186, %v318
      %v409 = vmax.f32 %v187, %v320
      %v410 = vmax.f32 %v188, %v323
      %v411 = vmax.f32 %v189, %v325
      %v412 = vmax.f32 %v190, %v328
      %v413 = vmax.f32 %v191, %v330
      %v414 = vmax.f32 %v192, %v333
      %v415 = vmax.f32 %v193, %v335
      %v416 = vmax.f32 %v194, %v338
      %v417 = vmax.f32 %v195, %v340
      %v418 = vmax.f32 %v196, %v343
      %v419 = vmax.f32 %v197, %v345
      %v420 = vmax.f32 %v198, %v348
      %v421 = vmax.f32 %v199, %v350
      %v422 = vmax.f32 %v200, %v353
      %v423 = vmax.f32 %v201, %v355
      %v424 = vpack.c.bf16 %v390, %v390
      %v425 = vpack.c.bf16 %v391, %v391
      %v426 = vpack.c.bf16 %v392, %v392
      %v427 = vpack.c.bf16 %v393, %v393
      %v428 = vpack.c.bf16 %v394, %v394
      %v429 = vpack.c.bf16 %v395, %v395
      %v430 = vpack.c.bf16 %v396, %v396
      %v431 = vpack.c.bf16 %v397, %v397
      %v432 = vpack.c.bf16 %v398, %v398
      %v433 = vpack.c.bf16 %v399, %v399
      %v434 = vpack.c.bf16 %v400, %v400
      %v435 = vpack.c.bf16 %v401, %v401
      %v436 = vpack.c.bf16 %v402, %v402
      %v437 = vpack.c.bf16 %v403, %v403
      %v438 = vpack.c.bf16 %v404, %v404
      %v439 = vpack.c.bf16 %v405, %v405
      %v440 = vpack.c.bf16 %v406, %v406
      %v441 = vpack.c.bf16 %v407, %v407
      %v442 = vpack.c.bf16 %v408, %v408
      %v443 = vpack.c.bf16 %v409, %v409
      %v444 = vpack.c.bf16 %v410, %v410
      %v445 = vpack.c.bf16 %v411, %v411
      %v446 = vpack.c.bf16 %v412, %v412
      %v447 = vpack.c.bf16 %v413, %v413
      %v448 = vpack.c.bf16 %v414, %v414
      %v449 = vpack.c.bf16 %v415, %v415
      %v450 = vpack.c.bf16 %v416, %v416
      %v451 = vpack.c.bf16 %v417, %v417
      %v452 = vpack.c.bf16 %v418, %v418
      %v453 = vpack.c.bf16 %v419, %v419
      %v454 = vpack.c.bf16 %v420, %v420
      %v455 = vpack.c.bf16 %v421, %v421
      %v456 = vpack.c.bf16 %v422, %v422
      %v457 = vpack.c.bf16 %v423, %v423
      %v458 = vunpack.c.l.bf16 %v424
      %v459 = vunpack.c.l.bf16 %v425
      %v460 = vunpack.c.l.bf16 %v426
      %v461 = vunpack.c.l.bf16 %v427
      %v462 = vunpack.c.l.bf16 %v428
      %v463 = vunpack.c.l.bf16 %v429
      %v464 = vunpack.c.l.bf16 %v430
      %v465 = vunpack.c.l.bf16 %v431
      %v466 = vunpack.c.l.bf16 %v432
      %v467 = vunpack.c.l.bf16 %v433
      %v468 = vunpack.c.l.bf16 %v434
      %v469 = vunpack.c.l.bf16 %v435
      %v470 = vunpack.c.l.bf16 %v436
      %v471 = vunpack.c.l.bf16 %v437
      %v472 = vunpack.c.l.bf16 %v438
      %v473 = vunpack.c.l.bf16 %v439
      %v474 = vunpack.c.l.bf16 %v440
      %v475 = vunpack.c.l.bf16 %v441
      %v476 = vunpack.c.l.bf16 %v442
      %v477 = vunpack.c.l.bf16 %v443
      %v478 = vunpack.c.l.bf16 %v444
      %v479 = vunpack.c.l.bf16 %v445
      %v480 = vunpack.c.l.bf16 %v446
      %v481 = vunpack.c.l.bf16 %v447
      %v482 = vunpack.c.l.bf16 %v448
      %v483 = vunpack.c.l.bf16 %v449
      %v484 = vunpack.c.l.bf16 %v450
      %v485 = vunpack.c.l.bf16 %v451
      %v486 = vunpack.c.l.bf16 %v452
      %v487 = vunpack.c.l.bf16 %v453
      %v488 = vunpack.c.l.bf16 %v454
      %v489 = vunpack.c.l.bf16 %v455
      %v490 = vunpack.c.l.bf16 %v456
      %v491 = vunpack.c.l.bf16 %v457
      %vm492 = vcmask 1045504
      %v493 = vrot.slane %v168, 2
      %v494 = vrot.slane %v169, 2
      %v495 = vsel %vm492, %v493, %v494
      %v496 = vrot.slane %v202, 2
      %v497 = vsel %vm492, %v494, %v496
      %v498 = vrot.slane %v170, 2
      %v499 = vrot.slane %v171, 2
      %v500 = vsel %vm492, %v498, %v499
      %v501 = vrot.slane %v203, 2
      %v502 = vsel %vm492, %v499, %v501
      %v503 = vrot.slane %v172, 2
      %v504 = vrot.slane %v173, 2
      %v505 = vsel %vm492, %v503, %v504
      %v506 = vrot.slane %v204, 2
      %v507 = vsel %vm492, %v504, %v506
      %v508 = vrot.slane %v174, 2
      %v509 = vrot.slane %v175, 2
      %v510 = vsel %vm492, %v508, %v509
      %v511 = vrot.slane %v205, 2
      %v512 = vsel %vm492, %v509, %v511
      %v513 = vrot.slane %v176, 2
      %v514 = vrot.slane %v177, 2
      %v515 = vsel %vm492, %v513, %v514
      %v516 = vrot.slane %v206, 2
      %v517 = vsel %vm492, %v514, %v516
      %v518 = vrot.slane %v178, 2
      %v519 = vrot.slane %v179, 2
      %v520 = vsel %vm492, %v518, %v519
      %v521 = vrot.slane %v207, 2
      %v522 = vsel %vm492, %v519, %v521
      %v523 = vrot.slane %v180, 2
      %v524 = vrot.slane %v181, 2
      %v525 = vsel %vm492, %v523, %v524
      %v526 = vrot.slane %v208, 2
      %v527 = vsel %vm492, %v524, %v526
      %v528 = vrot.slane %v182, 2
      %v529 = vrot.slane %v183, 2
      %v530 = vsel %vm492, %v528, %v529
      %v531 = vrot.slane %v209, 2
      %v532 = vsel %vm492, %v529, %v531
      %v533 = vrot.slane %v184, 2
      %v534 = vrot.slane %v185, 2
      %v535 = vsel %vm492, %v533, %v534
      %v536 = vrot.slane %v210, 2
      %v537 = vsel %vm492, %v534, %v536
      %v538 = vrot.slane %v186, 2
      %v539 = vrot.slane %v187, 2
      %v540 = vsel %vm492, %v538, %v539
      %v541 = vrot.slane %v211, 2
      %v542 = vsel %vm492, %v539, %v541
      %v543 = vrot.slane %v188, 2
      %v544 = vrot.slane %v189, 2
      %v545 = vsel %vm492, %v543, %v544
      %v546 = vrot.slane %v212, 2
      %v547 = vsel %vm492, %v544, %v546
      %v548 = vrot.slane %v190, 2
      %v549 = vrot.slane %v191, 2
      %v550 = vsel %vm492, %v548, %v549
      %v551 = vrot.slane %v213, 2
      %v552 = vsel %vm492, %v549, %v551
      %v553 = vrot.slane %v192, 2
      %v554 = vrot.slane %v193, 2
      %v555 = vsel %vm492, %v553, %v554
      %v556 = vrot.slane %v214, 2
      %v557 = vsel %vm492, %v554, %v556
      %v558 = vrot.slane %v194, 2
      %v559 = vrot.slane %v195, 2
      %v560 = vsel %vm492, %v558, %v559
      %v561 = vrot.slane %v215, 2
      %v562 = vsel %vm492, %v559, %v561
      %v563 = vrot.slane %v196, 2
      %v564 = vrot.slane %v197, 2
      %v565 = vsel %vm492, %v563, %v564
      %v566 = vrot.slane %v216, 2
      %v567 = vsel %vm492, %v564, %v566
      %v568 = vrot.slane %v198, 2
      %v569 = vrot.slane %v199, 2
      %v570 = vsel %vm492, %v568, %v569
      %v571 = vrot.slane %v217, 2
      %v572 = vsel %vm492, %v569, %v571
      %v573 = vrot.slane %v200, 2
      %v574 = vrot.slane %v201, 2
      %v575 = vsel %vm492, %v573, %v574
      %v576 = vrot.slane %v218, 2
      %v577 = vsel %vm492, %v574, %v576
      %v612 = vmax.f32 %v458, %v495
      %v613 = vmax.f32 %v459, %v497
      %v614 = vmax.f32 %v460, %v500
      %v615 = vmax.f32 %v461, %v502
      %v616 = vmax.f32 %v462, %v505
      %v617 = vmax.f32 %v463, %v507
      %v618 = vmax.f32 %v464, %v510
      %v619 = vmax.f32 %v465, %v512
      %v620 = vmax.f32 %v466, %v515
      %v621 = vmax.f32 %v467, %v517
      %v622 = vmax.f32 %v468, %v520
      %v623 = vmax.f32 %v469, %v522
      %v624 = vmax.f32 %v470, %v525
      %v625 = vmax.f32 %v471, %v527
      %v626 = vmax.f32 %v472, %v530
      %v627 = vmax.f32 %v473, %v532
      %v628 = vmax.f32 %v474, %v535
      %v629 = vmax.f32 %v475, %v537
      %v630 = vmax.f32 %v476, %v540
      %v631 = vmax.f32 %v477, %v542
      %v632 = vmax.f32 %v478, %v545
      %v633 = vmax.f32 %v479, %v547
      %v634 = vmax.f32 %v480, %v550
      %v635 = vmax.f32 %v481, %v552
      %v636 = vmax.f32 %v482, %v555
      %v637 = vmax.f32 %v483, %v557
      %v638 = vmax.f32 %v484, %v560
      %v639 = vmax.f32 %v485, %v562
      %v640 = vmax.f32 %v486, %v565
      %v641 = vmax.f32 %v487, %v567
      %v642 = vmax.f32 %v488, %v570
      %v643 = vmax.f32 %v489, %v572
      %v644 = vmax.f32 %v490, %v575
      %v645 = vmax.f32 %v491, %v577
      %v646 = vpack.c.bf16 %v612, %v612
      %v647 = vpack.c.bf16 %v613, %v613
      %v648 = vpack.c.bf16 %v614, %v614
      %v649 = vpack.c.bf16 %v615, %v615
      %v650 = vpack.c.bf16 %v616, %v616
      %v651 = vpack.c.bf16 %v617, %v617
      %v652 = vpack.c.bf16 %v618, %v618
      %v653 = vpack.c.bf16 %v619, %v619
      %v654 = vpack.c.bf16 %v620, %v620
      %v655 = vpack.c.bf16 %v621, %v621
      %v656 = vpack.c.bf16 %v622, %v622
      %v657 = vpack.c.bf16 %v623, %v623
      %v658 = vpack.c.bf16 %v624, %v624
      %v659 = vpack.c.bf16 %v625, %v625
      %v660 = vpack.c.bf16 %v626, %v626
      %v661 = vpack.c.bf16 %v627, %v627
      %v662 = vpack.c.bf16 %v628, %v628
      %v663 = vpack.c.bf16 %v629, %v629
      %v664 = vpack.c.bf16 %v630, %v630
      %v665 = vpack.c.bf16 %v631, %v631
      %v666 = vpack.c.bf16 %v632, %v632
      %v667 = vpack.c.bf16 %v633, %v633
      %v668 = vpack.c.bf16 %v634, %v634
      %v669 = vpack.c.bf16 %v635, %v635
      %v670 = vpack.c.bf16 %v636, %v636
      %v671 = vpack.c.bf16 %v637, %v637
      %v672 = vpack.c.bf16 %v638, %v638
      %v673 = vpack.c.bf16 %v639, %v639
      %v674 = vpack.c.bf16 %v640, %v640
      %v675 = vpack.c.bf16 %v641, %v641
      %v676 = vpack.c.bf16 %v642, %v642
      %v677 = vpack.c.bf16 %v643, %v643
      %v678 = vpack.c.bf16 %v644, %v644
      %v679 = vpack.c.bf16 %v645, %v645
      %v680 = vunpack.c.l.bf16 %v646
      %v681 = vunpack.c.l.bf16 %v647
      %v682 = vunpack.c.l.bf16 %v650
      %v683 = vunpack.c.l.bf16 %v651
      %v684 = vunpack.c.l.bf16 %v654
      %v685 = vunpack.c.l.bf16 %v655
      %v686 = vunpack.c.l.bf16 %v658
      %v687 = vunpack.c.l.bf16 %v659
      %v688 = vunpack.c.l.bf16 %v662
      %v689 = vunpack.c.l.bf16 %v663
      %v690 = vunpack.c.l.bf16 %v666
      %v691 = vunpack.c.l.bf16 %v667
      %v692 = vunpack.c.l.bf16 %v670
      %v693 = vunpack.c.l.bf16 %v671
      %v694 = vunpack.c.l.bf16 %v674
      %v695 = vunpack.c.l.bf16 %v675
      %v696 = vunpack.c.l.bf16 %v648
      %v697 = vunpack.c.l.bf16 %v649
      %v698 = vunpack.c.l.bf16 %v652
      %v699 = vunpack.c.l.bf16 %v653
      %v700 = vunpack.c.l.bf16 %v656
      %v701 = vunpack.c.l.bf16 %v657
      %v702 = vunpack.c.l.bf16 %v660
      %v703 = vunpack.c.l.bf16 %v661
      %v704 = vunpack.c.l.bf16 %v664
      %v705 = vunpack.c.l.bf16 %v665
      %v706 = vunpack.c.l.bf16 %v668
      %v707 = vunpack.c.l.bf16 %v669
      %v708 = vunpack.c.l.bf16 %v672
      %v709 = vunpack.c.l.bf16 %v673
      %v710 = vunpack.c.l.bf16 %v676
      %v711 = vunpack.c.l.bf16 %v677
      %v712 = vmax.f32 %v680, %v696
      %v713 = vmax.f32 %v681, %v697
      %v714 = vmax.f32 %v682, %v698
      %v715 = vmax.f32 %v683, %v699
      %v716 = vmax.f32 %v684, %v700
      %v717 = vmax.f32 %v685, %v701
      %v718 = vmax.f32 %v686, %v702
      %v719 = vmax.f32 %v687, %v703
      %v720 = vmax.f32 %v688, %v704
      %v721 = vmax.f32 %v689, %v705
      %v722 = vmax.f32 %v690, %v706
      %v723 = vmax.f32 %v691, %v707
      %v724 = vmax.f32 %v692, %v708
      %v725 = vmax.f32 %v693, %v709
      %v726 = vmax.f32 %v694, %v710
      %v727 = vmax.f32 %v695, %v711
      %v728 = vpack.c.bf16 %v712, %v712
      %v729 = vpack.c.bf16 %v713, %v713
      %v730 = vpack.c.bf16 %v714, %v714
      %v731 = vpack.c.bf16 %v715, %v715
      %v732 = vpack.c.bf16 %v716, %v716
      %v733 = vpack.c.bf16 %v717, %v717
      %v734 = vpack.c.bf16 %v718, %v718
      %v735 = vpack.c.bf16 %v719, %v719
      %v736 = vpack.c.bf16 %v720, %v720
      %v737 = vpack.c.bf16 %v721, %v721
      %v738 = vpack.c.bf16 %v722, %v722
      %v739 = vpack.c.bf16 %v723, %v723
      %v740 = vpack.c.bf16 %v724, %v724
      %v741 = vpack.c.bf16 %v725, %v725
      %v742 = vpack.c.bf16 %v726, %v726
      %v743 = vpack.c.bf16 %v727, %v727
      %v744 = vunpack.c.l.bf16 %v728
      %v745 = vunpack.c.l.bf16 %v729
      %v746 = vunpack.c.l.bf16 %v730
      %v747 = vunpack.c.l.bf16 %v731
      %v748 = vunpack.c.l.bf16 %v732
      %v749 = vunpack.c.l.bf16 %v733
      %v750 = vunpack.c.l.bf16 %v734
      %v751 = vunpack.c.l.bf16 %v735
      %v752 = vunpack.c.l.bf16 %v736
      %v753 = vunpack.c.l.bf16 %v737
      %v754 = vunpack.c.l.bf16 %v738
      %v755 = vunpack.c.l.bf16 %v739
      %v756 = vunpack.c.l.bf16 %v740
      %v757 = vunpack.c.l.bf16 %v741
      %v758 = vunpack.c.l.bf16 %v742
      %v759 = vunpack.c.l.bf16 %v743
      %v760 = vunpack.c.l.bf16 %v678
      %v761 = vunpack.c.l.bf16 %v679
      %v762 = vmax.f32 %v744, %v682
      %v763 = vmax.f32 %v745, %v683
      %v764 = vmax.f32 %v746, %v684
      %v765 = vmax.f32 %v747, %v685
      %v766 = vmax.f32 %v748, %v686
      %v767 = vmax.f32 %v749, %v687
      %v768 = vmax.f32 %v750, %v688
      %v769 = vmax.f32 %v751, %v689
      %v770 = vmax.f32 %v752, %v690
      %v771 = vmax.f32 %v753, %v691
      %v772 = vmax.f32 %v754, %v692
      %v773 = vmax.f32 %v755, %v693
      %v774 = vmax.f32 %v756, %v694
      %v775 = vmax.f32 %v757, %v695
      %v776 = vmax.f32 %v758, %v760
      %v777 = vmax.f32 %v759, %v761
      %v778 = vpack.c.bf16 %v762, %v762
      %v779 = vpack.c.bf16 %v763, %v763
      %v780 = vpack.c.bf16 %v764, %v764
      %v781 = vpack.c.bf16 %v765, %v765
      %v782 = vpack.c.bf16 %v766, %v766
      %v783 = vpack.c.bf16 %v767, %v767
      %v784 = vpack.c.bf16 %v768, %v768
      %v785 = vpack.c.bf16 %v769, %v769
      %v786 = vpack.c.bf16 %v770, %v770
      %v787 = vpack.c.bf16 %v771, %v771
      %v788 = vpack.c.bf16 %v772, %v772
      %v789 = vpack.c.bf16 %v773, %v773
      %v790 = vpack.c.bf16 %v774, %v774
      %v791 = vpack.c.bf16 %v775, %v775
      %v792 = vpack.c.bf16 %v776, %v776
      %v793 = vpack.c.bf16 %v777, %v777
      %v810 = vrot.slane %v778, 3
      %v811 = vrot.slane %v779, 3
      %v812 = vrot.slane %v780, 3
      %v813 = vrot.slane %v781, 3
      %v814 = vrot.slane %v782, 3
      %v815 = vrot.slane %v783, 3
      %v816 = vrot.slane %v784, 3
      %v817 = vrot.slane %v785, 3
      %v818 = vrot.slane %v786, 3
      %v819 = vrot.slane %v787, 3
      %v820 = vrot.slane %v788, 3
      %v821 = vrot.slane %v789, 3
      %v822 = vrot.slane %v790, 3
      %v823 = vrot.slane %v791, 3
      %v824 = vrot.slane %v792, 3
      %v825 = vrot.slane %v793, 3
      %vm826 = vcmask 1040384
      %v829 = vsel %vm826, %v778, %v810
      %vm830 = vcmask 1041409
      %v831 = vsel %vm830, %v778, %v810
      %v833 = vrot.slane %v831, 1
      %vm834 = vcmask 1042434
      %v835 = vsel %vm834, %v778, %v810
      %v837 = vrot.slane %v835, 2
      %vm838 = vcmask 1043459
      %v839 = vsel %vm838, %v778, %v810
      %v841 = vrot.slane %v839, 3
      %v844 = vsel %vm826, %v779, %v811
      %v845 = vsel %vm830, %v779, %v811
      %v847 = vrot.slane %v845, 1
      %v848 = vsel %vm834, %v779, %v811
      %v850 = vrot.slane %v848, 2
      %v851 = vsel %vm838, %v779, %v811
      %v853 = vrot.slane %v851, 3
      %v856 = vsel %vm826, %v780, %v812
      %v857 = vsel %vm830, %v780, %v812
      %v859 = vrot.slane %v857, 1
      %v860 = vsel %vm834, %v780, %v812
      %v862 = vrot.slane %v860, 2
      %v863 = vsel %vm838, %v780, %v812
      %v865 = vrot.slane %v863, 3
      %v868 = vsel %vm826, %v781, %v813
      %v869 = vsel %vm830, %v781, %v813
      %v871 = vrot.slane %v869, 1
      %v872 = vsel %vm834, %v781, %v813
      %v874 = vrot.slane %v872, 2
      %v875 = vsel %vm838, %v781, %v813
      %v877 = vrot.slane %v875, 3
      %v880 = vsel %vm826, %v782, %v814
      %v881 = vsel %vm830, %v782, %v814
      %v883 = vrot.slane %v881, 1
      %v884 = vsel %vm834, %v782, %v814
      %v886 = vrot.slane %v884, 2
      %v887 = vsel %vm838, %v782, %v814
      %v889 = vrot.slane %v887, 3
      %v892 = vsel %vm826, %v783, %v815
      %v893 = vsel %vm830, %v783, %v815
      %v895 = vrot.slane %v893, 1
      %v896 = vsel %vm834, %v783, %v815
      %v898 = vrot.slane %v896, 2
      %v899 = vsel %vm838, %v783, %v815
      %v901 = vrot.slane %v899, 3
      %v904 = vsel %vm826, %v784, %v816
      %v905 = vsel %vm830, %v784, %v816
      %v907 = vrot.slane %v905, 1
      %v908 = vsel %vm834, %v784, %v816
      %v910 = vrot.slane %v908, 2
      %v911 = vsel %vm838, %v784, %v816
      %v913 = vrot.slane %v911, 3
      %v916 = vsel %vm826, %v785, %v817
      %v917 = vsel %vm830, %v785, %v817
      %v919 = vrot.slane %v917, 1
      %v920 = vsel %vm834, %v785, %v817
      %v922 = vrot.slane %v920, 2
      %v923 = vsel %vm838, %v785, %v817
      %v925 = vrot.slane %v923, 3
      %v928 = vsel %vm826, %v786, %v818
      %v929 = vsel %vm830, %v786, %v818
      %v931 = vrot.slane %v929, 1
      %v932 = vsel %vm834, %v786, %v818
      %v934 = vrot.slane %v932, 2
      %v935 = vsel %vm838, %v786, %v818
      %v937 = vrot.slane %v935, 3
      %v940 = vsel %vm826, %v787, %v819
      %v941 = vsel %vm830, %v787, %v819
      %v943 = vrot.slane %v941, 1
      %v944 = vsel %vm834, %v787, %v819
      %v946 = vrot.slane %v944, 2
      %v947 = vsel %vm838, %v787, %v819
      %v949 = vrot.slane %v947, 3
      %v952 = vsel %vm826, %v788, %v820
      %v953 = vsel %vm830, %v788, %v820
      %v955 = vrot.slane %v953, 1
      %v956 = vsel %vm834, %v788, %v820
      %v958 = vrot.slane %v956, 2
      %v959 = vsel %vm838, %v788, %v820
      %v961 = vrot.slane %v959, 3
      %v964 = vsel %vm826, %v789, %v821
      %v965 = vsel %vm830, %v789, %v821
      %v967 = vrot.slane %v965, 1
      %v968 = vsel %vm834, %v789, %v821
      %v970 = vrot.slane %v968, 2
      %v971 = vsel %vm838, %v789, %v821
      %v973 = vrot.slane %v971, 3
      %v976 = vsel %vm826, %v790, %v822
      %v977 = vsel %vm830, %v790, %v822
      %v979 = vrot.slane %v977, 1
      %v980 = vsel %vm834, %v790, %v822
      %v982 = vrot.slane %v980, 2
      %v983 = vsel %vm838, %v790, %v822
      %v985 = vrot.slane %v983, 3
      %v988 = vsel %vm826, %v791, %v823
      %v989 = vsel %vm830, %v791, %v823
      %v991 = vrot.slane %v989, 1
      %v992 = vsel %vm834, %v791, %v823
      %v994 = vrot.slane %v992, 2
      %v995 = vsel %vm838, %v791, %v823
      %v997 = vrot.slane %v995, 3
      %v1000 = vsel %vm826, %v792, %v824
      %v1001 = vsel %vm830, %v792, %v824
      %v1003 = vrot.slane %v1001, 1
      %v1004 = vsel %vm834, %v792, %v824
      %v1006 = vrot.slane %v1004, 2
      %v1007 = vsel %vm838, %v792, %v824
      %v1009 = vrot.slane %v1007, 3
      %v1012 = vsel %vm826, %v793, %v825
      %v1013 = vsel %vm830, %v793, %v825
      %v1015 = vrot.slane %v1013, 1
      %v1016 = vsel %vm834, %v793, %v825
      %v1018 = vrot.slane %v1016, 2
      %v1019 = vsel %vm838, %v793, %v825
      %v1021 = vrot.slane %v1019, 3
      %1022 = vst [vmem:[#allocation1] ss:$4 sm:$0xff] %v829
      %v1023 = vld [vmem:[#allocation1] sm:$0xff]
      %s1026 = scalar_lea.vmem [#allocation1], 32
      %1027 = vst [vmem:[%s1026] ss:$4 sm:$0xff] %v833
      %v1028 = vld [vmem:[#allocation1 + $0x20] sm:$0xff]
      %1031 = vst [vmem:[#allocation1] ss:$4 sm:$0xff] %v837
      %v1032 = vld [vmem:[#allocation1] sm:$0xff]
      %1035 = vst [vmem:[%s1026] ss:$4 sm:$0xff] %v841
      %v1036 = vld [vmem:[#allocation1 + $0x20] sm:$0xff]
      %1038 = vst [vmem:[#allocation1] ss:$4 sm:$0xff] %v844
      %v1039 = vld [vmem:[#allocation1] sm:$0xff]
      %1042 = vst [vmem:[%s1026] ss:$4 sm:$0xff] %v847
      %v1043 = vld [vmem:[#allocation1 + $0x20] sm:$0xff]
      %1046 = vst [vmem:[#allocation1] ss:$4 sm:$0xff] %v850
      %v1047 = vld [vmem:[#allocation1] sm:$0xff]
      %1050 = vst [vmem:[%s1026] ss:$4 sm:$0xff] %v853
      %v1051 = vld [vmem:[#allocation1 + $0x20] sm:$0xff]
      %1053 = vst [vmem:[#allocation1] ss:$4 sm:$0xff] %v856
      %v1054 = vld [vmem:[#allocation1] sm:$0xff]
      %1057 = vst [vmem:[%s1026] ss:$4 sm:$0xff] %v859
      %v1058 = vld [vmem:[#allocation1 + $0x20] sm:$0xff]
      %1061 = vst [vmem:[#allocation1] ss:$4 sm:$0xff] %v862
      %v1062 = vld [vmem:[#allocation1] sm:$0xff]
      %1065 = vst [vmem:[%s1026] ss:$4 sm:$0xff] %v865
      %v1066 = vld [vmem:[#allocation1 + $0x20] sm:$0xff]
      %1068 = vst [vmem:[#allocation1] ss:$4 sm:$0xff] %v868
      %v1069 = vld [vmem:[#allocation1] sm:$0xff]
      %1072 = vst [vmem:[%s1026] ss:$4 sm:$0xff] %v871
      %v1073 = vld [vmem:[#allocation1 + $0x20] sm:$0xff]
      %1076 = vst [vmem:[#allocation1] ss:$4 sm:$0xff] %v874
      %v1077 = vld [vmem:[#allocation1] sm:$0xff]
      %1080 = vst [vmem:[%s1026] ss:$4 sm:$0xff] %v877
      %v1081 = vld [vmem:[#allocation1 + $0x20] sm:$0xff]
      %1083 = vst [vmem:[#allocation1] ss:$4 sm:$0xff] %v880
      %v1084 = vld [vmem:[#allocation1] sm:$0xff]
      %1087 = vst [vmem:[%s1026] ss:$4 sm:$0xff] %v883
      %v1088 = vld [vmem:[#allocation1 + $0x20] sm:$0xff]
      %1091 = vst [vmem:[#allocation1] ss:$4 sm:$0xff] %v886
      %v1092 = vld [vmem:[#allocation1] sm:$0xff]
      %1095 = vst [vmem:[%s1026] ss:$4 sm:$0xff] %v889
      %v1096 = vld [vmem:[#allocation1 + $0x20] sm:$0xff]
      %1098 = vst [vmem:[#allocation1] ss:$4 sm:$0xff] %v892
      %v1099 = vld [vmem:[#allocation1] sm:$0xff]
      %1102 = vst [vmem:[%s1026] ss:$4 sm:$0xff] %v895
      %v1103 = vld [vmem:[#allocation1 + $0x20] sm:$0xff]
      %1106 = vst [vmem:[#allocation1] ss:$4 sm:$0xff] %v898
      %v1107 = vld [vmem:[#allocation1] sm:$0xff]
      %1110 = vst [vmem:[%s1026] ss:$4 sm:$0xff] %v901
      %v1111 = vld [vmem:[#allocation1 + $0x20] sm:$0xff]
      %1113 = vst [vmem:[#allocation1] ss:$4 sm:$0xff] %v904
      %v1114 = vld [vmem:[#allocation1] sm:$0xff]
      %1117 = vst [vmem:[%s1026] ss:$4 sm:$0xff] %v907
      %v1118 = vld [vmem:[#allocation1 + $0x20] sm:$0xff]
      %1121 = vst [vmem:[#allocation1] ss:$4 sm:$0xff] %v910
      %v1122 = vld [vmem:[#allocation1] sm:$0xff]
      %1125 = vst [vmem:[%s1026] ss:$4 sm:$0xff] %v913
      %v1126 = vld [vmem:[#allocation1 + $0x20] sm:$0xff]
      %1128 = vst [vmem:[#allocation1] ss:$4 sm:$0xff] %v916
      %v1129 = vld [vmem:[#allocation1] sm:$0xff]
      %1132 = vst [vmem:[%s1026] ss:$4 sm:$0xff] %v919
      %v1133 = vld [vmem:[#allocation1 + $0x20] sm:$0xff]
      %1136 = vst [vmem:[#allocation1] ss:$4 sm:$0xff] %v922
      %v1137 = vld [vmem:[#allocation1] sm:$0xff]
      %1140 = vst [vmem:[%s1026] ss:$4 sm:$0xff] %v925
      %v1141 = vld [vmem:[#allocation1 + $0x20] sm:$0xff]
      %1143 = vst [vmem:[#allocation1] ss:$4 sm:$0xff] %v928
      %v1144 = vld [vmem:[#allocation1] sm:$0xff]
      %1147 = vst [vmem:[%s1026] ss:$4 sm:$0xff] %v931
      %v1148 = vld [vmem:[#allocation1 + $0x20] sm:$0xff]
      %1151 = vst [vmem:[#allocation1] ss:$4 sm:$0xff] %v934
      %v1152 = vld [vmem:[#allocation1] sm:$0xff]
      %1155 = vst [vmem:[%s1026] ss:$4 sm:$0xff] %v937
      %v1156 = vld [vmem:[#allocation1 + $0x20] sm:$0xff]
      %1158 = vst [vmem:[#allocation1] ss:$4 sm:$0xff] %v940
      %v1159 = vld [vmem:[#allocation1] sm:$0xff]
      %1162 = vst [vmem:[%s1026] ss:$4 sm:$0xff] %v943
      %v1163 = vld [vmem:[#allocation1 + $0x20] sm:$0xff]
      %1166 = vst [vmem:[#allocation1] ss:$4 sm:$0xff] %v946
      %v1167 = vld [vmem:[#allocation1] sm:$0xff]
      %1170 = vst [vmem:[%s1026] ss:$4 sm:$0xff] %v949
      %v1171 = vld [vmem:[#allocation1 + $0x20] sm:$0xff]
      %1173 = vst [vmem:[#allocation1] ss:$4 sm:$0xff] %v952
      %v1174 = vld [vmem:[#allocation1] sm:$0xff]
      %1177 = vst [vmem:[%s1026] ss:$4 sm:$0xff] %v955
      %v1178 = vld [vmem:[#allocation1 + $0x20] sm:$0xff]
      %1181 = vst [vmem:[#allocation1] ss:$4 sm:$0xff] %v958
      %v1182 = vld [vmem:[#allocation1] sm:$0xff]
      %1185 = vst [vmem:[%s1026] ss:$4 sm:$0xff] %v961
      %v1186 = vld [vmem:[#allocation1 + $0x20] sm:$0xff]
      %1188 = vst [vmem:[#allocation1] ss:$4 sm:$0xff] %v964
      %v1189 = vld [vmem:[#allocation1] sm:$0xff]
      %1192 = vst [vmem:[%s1026] ss:$4 sm:$0xff] %v967
      %v1193 = vld [vmem:[#allocation1 + $0x20] sm:$0xff]
      %1196 = vst [vmem:[#allocation1] ss:$4 sm:$0xff] %v970
      %v1197 = vld [vmem:[#allocation1] sm:$0xff]
      %1200 = vst [vmem:[%s1026] ss:$4 sm:$0xff] %v973
      %v1201 = vld [vmem:[#allocation1 + $0x20] sm:$0xff]
      %1203 = vst [vmem:[#allocation1] ss:$4 sm:$0xff] %v976
      %v1204 = vld [vmem:[#allocation1] sm:$0xff]
      %1207 = vst [vmem:[%s1026] ss:$4 sm:$0xff] %v979
      %v1208 = vld [vmem:[#allocation1 + $0x20] sm:$0xff]
      %1211 = vst [vmem:[#allocation1] ss:$4 sm:$0xff] %v982
      %v1212 = vld [vmem:[#allocation1] sm:$0xff]
      %1215 = vst [vmem:[%s1026] ss:$4 sm:$0xff] %v985
      %v1216 = vld [vmem:[#allocation1 + $0x20] sm:$0xff]
      %1218 = vst [vmem:[#allocation1] ss:$4 sm:$0xff] %v988
      %v1219 = vld [vmem:[#allocation1] sm:$0xff]
      %1222 = vst [vmem:[%s1026] ss:$4 sm:$0xff] %v991
      %v1223 = vld [vmem:[#allocation1 + $0x20] sm:$0xff]
      %1226 = vst [vmem:[#allocation1] ss:$4 sm:$0xff] %v994
      %v1227 = vld [vmem:[#allocation1] sm:$0xff]
      %1230 = vst [vmem:[%s1026] ss:$4 sm:$0xff] %v997
      %v1231 = vld [vmem:[#allocation1 + $0x20] sm:$0xff]
      %1233 = vst [vmem:[#allocation1] ss:$4 sm:$0xff] %v1000
      %v1234 = vld [vmem:[#allocation1] sm:$0xff]
      %1237 = vst [vmem:[%s1026] ss:$4 sm:$0xff] %v1003
      %v1238 = vld [vmem:[#allocation1 + $0x20] sm:$0xff]
      %1241 = vst [vmem:[#allocation1] ss:$4 sm:$0xff] %v1006
      %v1242 = vld [vmem:[#allocation1] sm:$0xff]
      %1245 = vst [vmem:[%s1026] ss:$4 sm:$0xff] %v1009
      %v1246 = vld [vmem:[#allocation1 + $0x20] sm:$0xff]
      %1248 = vst [vmem:[#allocation1] ss:$4 sm:$0xff] %v1012
      %v1249 = vld [vmem:[#allocation1] sm:$0xff]
      %1252 = vst [vmem:[%s1026] ss:$4 sm:$0xff] %v1015
      %v1253 = vld [vmem:[#allocation1 + $0x20] sm:$0xff]
      %1256 = vst [vmem:[#allocation1] ss:$4 sm:$0xff] %v1018
      %v1257 = vld [vmem:[#allocation1] sm:$0xff]
      %1260 = vst [vmem:[%s1026] ss:$4 sm:$0xff] %v1021
      %v1261 = vld [vmem:[#allocation1 + $0x20] sm:$0xff]
      %v1263 = vunpack.c.l.b16 %v1023
      %v1264 = vunpack.c.l.b16 %v1028
      %v1265 = vunpack.c.l.b16 %v1032
      %v1266 = vunpack.c.l.b16 %v1036
      %v1267 = vunpack.c.l.b16 %v1039
      %v1268 = vunpack.c.l.b16 %v1043
      %v1269 = vunpack.c.l.b16 %v1047
      %v1270 = vunpack.c.l.b16 %v1051
      %v1271 = vunpack.c.l.b16 %v1054
      %v1272 = vunpack.c.l.b16 %v1058
      %v1273 = vunpack.c.l.b16 %v1062
      %v1274 = vunpack.c.l.b16 %v1066
      %v1275 = vunpack.c.l.b16 %v1069
      %v1276 = vunpack.c.l.b16 %v1073
      %v1277 = vunpack.c.l.b16 %v1077
      %v1278 = vunpack.c.l.b16 %v1081
      %v1279 = vunpack.c.l.b16 %v1084
      %v1280 = vunpack.c.l.b16 %v1088
      %v1281 = vunpack.c.l.b16 %v1092
      %v1282 = vunpack.c.l.b16 %v1096
      %v1283 = vunpack.c.l.b16 %v1099
      %v1284 = vunpack.c.l.b16 %v1103
      %v1285 = vunpack.c.l.b16 %v1107
      %v1286 = vunpack.c.l.b16 %v1111
      %v1287 = vunpack.c.l.b16 %v1114
      %v1288 = vunpack.c.l.b16 %v1118
      %v1289 = vunpack.c.l.b16 %v1122
      %v1290 = vunpack.c.l.b16 %v1126
      %v1291 = vunpack.c.l.b16 %v1129
      %v1292 = vunpack.c.l.b16 %v1133
      %v1293 = vunpack.c.l.b16 %v1137
      %v1294 = vunpack.c.l.b16 %v1141
      %v1295 = vunpack.c.l.b16 %v1144
      %v1296 = vunpack.c.l.b16 %v1148
      %v1297 = vunpack.c.l.b16 %v1152
      %v1298 = vunpack.c.l.b16 %v1156
      %v1299 = vunpack.c.l.b16 %v1159
      %v1300 = vunpack.c.l.b16 %v1163
      %v1301 = vunpack.c.l.b16 %v1167
      %v1302 = vunpack.c.l.b16 %v1171
      %v1303 = vunpack.c.l.b16 %v1174
      %v1304 = vunpack.c.l.b16 %v1178
      %v1305 = vunpack.c.l.b16 %v1182
      %v1306 = vunpack.c.l.b16 %v1186
      %v1307 = vunpack.c.l.b16 %v1189
      %v1308 = vunpack.c.l.b16 %v1193
      %v1309 = vunpack.c.l.b16 %v1197
      %v1310 = vunpack.c.l.b16 %v1201
      %v1311 = vunpack.c.l.b16 %v1204
      %v1312 = vunpack.c.l.b16 %v1208
      %v1313 = vunpack.c.l.b16 %v1212
      %v1314 = vunpack.c.l.b16 %v1216
      %v1315 = vunpack.c.l.b16 %v1219
      %v1316 = vunpack.c.l.b16 %v1223
      %v1317 = vunpack.c.l.b16 %v1227
      %v1318 = vunpack.c.l.b16 %v1231
      %v1319 = vunpack.c.l.b16 %v1234
      %v1320 = vunpack.c.l.b16 %v1238
      %v1321 = vunpack.c.l.b16 %v1242
      %v1322 = vunpack.c.l.b16 %v1246
      %v1323 = vunpack.c.l.b16 %v1249
      %v1324 = vunpack.c.l.b16 %v1253
      %v1325 = vunpack.c.l.b16 %v1257
      %v1326 = vunpack.c.l.b16 %v1261
      %v1327 = vrot.slane %v1264, 7
      %v1328 = vsel %vm830, %v1327, %v1263
      %v1329 = vrot.slane %v1265, 6
      %v1330 = vsel %vm834, %v1329, %v1328
      %v1331 = vrot.slane %v1266, 5
      %v1332 = vsel %vm838, %v1331, %v1330
      %v1333 = vrot.slane %v1267, 4
      %vm1334 = vcmask 1044484
      %v1335 = vsel %vm1334, %v1333, %v1332
      %v1336 = vrot.slane %v1268, 3
      %vm1337 = vcmask 1045509
      %v1338 = vsel %vm1337, %v1336, %v1335
      %v1339 = vrot.slane %v1269, 2
      %vm1340 = vcmask 1046534
      %v1341 = vsel %vm1340, %v1339, %v1338
      %v1342 = vrot.slane %v1270, 1
      %vm1343 = vcmask 1047559
      %v1344 = vsel %vm1343, %v1342, %v1341
      %v1345 = vrot.slane %v1272, 7
      %v1346 = vsel %vm830, %v1345, %v1271
      %v1347 = vrot.slane %v1273, 6
      %v1348 = vsel %vm834, %v1347, %v1346
      %v1349 = vrot.slane %v1274, 5
      %v1350 = vsel %vm838, %v1349, %v1348
      %v1351 = vrot.slane %v1275, 4
      %v1352 = vsel %vm1334, %v1351, %v1350
      %v1353 = vrot.slane %v1276, 3
      %v1354 = vsel %vm1337, %v1353, %v1352
      %v1355 = vrot.slane %v1277, 2
      %v1356 = vsel %vm1340, %v1355, %v1354
      %v1357 = vrot.slane %v1278, 1
      %v1358 = vsel %vm1343, %v1357, %v1356
      %v1359 = vrot.slane %v1280, 7
      %v1360 = vsel %vm830, %v1359, %v1279
      %v1361 = vrot.slane %v1281, 6
      %v1362 = vsel %vm834, %v1361, %v1360
      %v1363 = vrot.slane %v1282, 5
      %v1364 = vsel %vm838, %v1363, %v1362
      %v1365 = vrot.slane %v1283, 4
      %v1366 = vsel %vm1334, %v1365, %v1364
      %v1367 = vrot.slane %v1284, 3
      %v1368 = vsel %vm1337, %v1367, %v1366
      %v1369 = vrot.slane %v1285, 2
      %v1370 = vsel %vm1340, %v1369, %v1368
      %v1371 = vrot.slane %v1286, 1
      %v1372 = vsel %vm1343, %v1371, %v1370
      %v1373 = vrot.slane %v1288, 7
      %v1374 = vsel %vm830, %v1373, %v1287
      %v1375 = vrot.slane %v1289, 6
      %v1376 = vsel %vm834, %v1375, %v1374
      %v1377 = vrot.slane %v1290, 5
      %v1378 = vsel %vm838, %v1377, %v1376
      %v1379 = vrot.slane %v1291, 4
      %v1380 = vsel %vm1334, %v1379, %v1378
      %v1381 = vrot.slane %v1292, 3
      %v1382 = vsel %vm1337, %v1381, %v1380
      %v1383 = vrot.slane %v1293, 2
      %v1384 = vsel %vm1340, %v1383, %v1382
      %v1385 = vrot.slane %v1294, 1
      %v1386 = vsel %vm1343, %v1385, %v1384
      %v1387 = vrot.slane %v1296, 7
      %v1388 = vsel %vm830, %v1387, %v1295
      %v1389 = vrot.slane %v1297, 6
      %v1390 = vsel %vm834, %v1389, %v1388
      %v1391 = vrot.slane %v1298, 5
      %v1392 = vsel %vm838, %v1391, %v1390
      %v1393 = vrot.slane %v1299, 4
      %v1394 = vsel %vm1334, %v1393, %v1392
      %v1395 = vrot.slane %v1300, 3
      %v1396 = vsel %vm1337, %v1395, %v1394
      %v1397 = vrot.slane %v1301, 2
      %v1398 = vsel %vm1340, %v1397, %v1396
      %v1399 = vrot.slane %v1302, 1
      %v1400 = vsel %vm1343, %v1399, %v1398
      %v1401 = vrot.slane %v1304, 7
      %v1402 = vsel %vm830, %v1401, %v1303
      %v1403 = vrot.slane %v1305, 6
      %v1404 = vsel %vm834, %v1403, %v1402
      %v1405 = vrot.slane %v1306, 5
      %v1406 = vsel %vm838, %v1405, %v1404
      %v1407 = vrot.slane %v1307, 4
      %v1408 = vsel %vm1334, %v1407, %v1406
      %v1409 = vrot.slane %v1308, 3
      %v1410 = vsel %vm1337, %v1409, %v1408
      %v1411 = vrot.slane %v1309, 2
      %v1412 = vsel %vm1340, %v1411, %v1410
      %v1413 = vrot.slane %v1310, 1
      %v1414 = vsel %vm1343, %v1413, %v1412
      %v1415 = vrot.slane %v1312, 7
      %v1416 = vsel %vm830, %v1415, %v1311
      %v1417 = vrot.slane %v1313, 6
      %v1418 = vsel %vm834, %v1417, %v1416
      %v1419 = vrot.slane %v1314, 5
      %v1420 = vsel %vm838, %v1419, %v1418
      %v1421 = vrot.slane %v1315, 4
      %v1422 = vsel %vm1334, %v1421, %v1420
      %v1423 = vrot.slane %v1316, 3
      %v1424 = vsel %vm1337, %v1423, %v1422
      %v1425 = vrot.slane %v1317, 2
      %v1426 = vsel %vm1340, %v1425, %v1424
      %v1427 = vrot.slane %v1318, 1
      %v1428 = vsel %vm1343, %v1427, %v1426
      %v1429 = vrot.slane %v1320, 7
      %v1430 = vsel %vm830, %v1429, %v1319
      %v1431 = vrot.slane %v1321, 6
      %v1432 = vsel %vm834, %v1431, %v1430
      %v1433 = vrot.slane %v1322, 5
      %v1434 = vsel %vm838, %v1433, %v1432
      %v1435 = vrot.slane %v1323, 4
      %v1436 = vsel %vm1334, %v1435, %v1434
      %v1437 = vrot.slane %v1324, 3
      %v1438 = vsel %vm1337, %v1437, %v1436
      %v1439 = vrot.slane %v1325, 2
      %v1440 = vsel %vm1340, %v1439, %v1438
      %v1441 = vrot.slane %v1326, 1
      %v1442 = vsel %vm1343, %v1441, %v1440
      %v1443 = vpack.c.b16 %v1344, %v1344
      %v1444 = vpack.c.b16 %v1358, %v1358
      %v1445 = vpack.c.b16 %v1372, %v1372
      %v1446 = vpack.c.b16 %v1386, %v1386
      %v1447 = vpack.c.b16 %v1400, %v1400
      %v1448 = vpack.c.b16 %v1414, %v1414
      %v1449 = vpack.c.b16 %v1428, %v1428
      %v1450 = vpack.c.b16 %v1442, %v1442
      %vm1459 = vcmask 60416
      %1460 = vst.msk [vmem:[%s116] sm:$0xf] %vm1459, %v1443
      %1461 = vst.msk [vmem:[%s116 + $0x4] sm:$0xf] %vm1459, %v1444
      %1462 = vst.msk [vmem:[%s116 + $0x8] sm:$0xf] %vm1459, %v1445
      %1463 = vst.msk [vmem:[%s116 + $0xc] sm:$0xf] %vm1459, %v1446
      %1464 = vst.msk [vmem:[%s116 + $0x10] sm:$0xf] %vm1459, %v1447
      %1465 = vst.msk [vmem:[%s116 + $0x14] sm:$0xf] %vm1459, %v1448
      %1466 = vst.msk [vmem:[%s116 + $0x18] sm:$0xf] %vm1459, %v1449
      %1467 = vst.msk [vmem:[%s116 + $0x1c] sm:$0xf] %vm1459, %v1450
      %p1468 = scmp.lt.s32.totalorder %s12, 1
      %s1469 = scalar_select %p1468, %s12, 1
      %s1470 = smul.addr %s1469, 8
      %s1471 = smul.addr %s1470, 4
      %s1472 = scalar_lea.vmem %s1, %s1471
      // Predicated region
      $region25: #{_lambda_.14} parent=23 // pred_check
        %p1473 = pneg %p56
      $region26: #{_lambda_.14} parent=23 // pred_check_branch
        %1475 = sbr.rel (%p1473) target = $region28
      $region27: #{_lambda_.14} parent=23 // pred_region
        _
      $region28: #{_lambda_.14} parent=23 // pred_fallthru
        _
    $region24: #{_lambda_.14} parent=5 // pred_fallthru
      _
    %p1476 = scmp.le.s32.totalorder 2, %s7
    // Predicated region
    $region29: #{_lambda_.14} parent=5 // pred_check
      %p1477 = pneg %p1476
    $region30: #{_lambda_.14} parent=5 // pred_check_branch
      %1479 = sbr.rel (%p1477) target = $region32
    $region31: #{_lambda_.14} parent=5 // pred_region
      %s1480 = ssub.s32 %s7, 2
      // Predicated region
      $region33: #{_lambda_.14} parent=31 // pred_check
        %p1481 = pneg %p62
      $region34: #{_lambda_.14} parent=31 // pred_check_branch
        %1483 = sbr.rel (%p1481) target = $region36
      $region35: #{_lambda_.14} parent=31 // pred_region
        %p1484 = scmp.lt.s32.totalorder %s13, 1
        %s1485 = scalar_select %p1484, %s13, 1
        %s1486 = smul.addr %s1485, 8
        %s1487 = smul.addr %s1486, 4
        %s1488 = scalar_lea.vmem %s1, %s1487
      $region36: #{_lambda_.14} parent=31 // pred_fallthru
        _
    $region32: #{_lambda_.14} parent=5 // pred_fallthru
      _
  $region6: #{_lambda_.14} parent=0 // loop_footer
    %s11 = sadd.s32 1, %s7
  $region7: #{_lambda_.14} parent=0 // loop_footer_branch
    %6 = sbr.rel target = $region3
  $region8: #{_lambda_.14} parent=0 // loop_exit
    _

// kernel: _lambda_.16
$region0: #{_lambda_.16}
  #allocation0 [shape = 'u32[]', space=smem, size = 0x4, offset = 0x4, fixed_abs, tag = 'smem constant byte address 0x4 - core index']
  #allocation1 [shape = 'u32[72,128]{1,0:T(1,128)}', space=vmem, size = 0x9000, scoped, tag = 'internal scratch']
  %s0 = inlined_call_operand.vmem [shape: bf16[128,72], index: 0, kind: input, shape index: {}]
  %s1 = inlined_call_operand.vmem [shape: bf16[72,8], index: 1, kind: input, shape index: {}]
  %s2 = inlined_call_operand.vmem [shape: f32[1,8], index: 2, kind: input, shape index: {}]
  %s3 = inlined_call_operand.vmem [shape: bf16[128,8], index: 3, kind: output, shape index: {}]
  %s4 = sld [smem:[#allocation0]]
  $region45: #{_lambda_.16} parent=0
    _
  %s6 = ssub.s32 1, %s4
  %s7 = scalar_select 0, %s6, %s4
  loop: start=0, step=1, limit=4
  $region2: #{_lambda_.16} parent=0 // loop_pre_header
    _
  $region3: #{_lambda_.16} parent=0 // loop_header
    %s9 = sphi 0, %s13
    %p10 = scmp.ge.s32.totalorder %s9, 4
    %s19 = sphi 0, %s21
    %s22 = sphi 0, %s19
    %s23 = sphi 0, %s22
    %s39 = sphi 0, %s23
    %s43 = sphi 0, %s43
    %s45 = sphi 0, %s43
    %s46 = sphi 0, %s45
    %s60 = sphi 0, %s46
    %s64 = sphi 0, %s64
    %s66 = sphi 0, %s64
    %s67 = sphi 0, %s66
    %s81 = sphi 0, %s67
    %s87 = sphi 0, %s89
    %s90 = sphi 0, %s87
    %s91 = sphi 0, %s90
    %s107 = sphi 0, %s91
  $region4: #{_lambda_.16} parent=0 // loop_header_branch
    %12 = sbr.rel (%p10) target = $region8
  $region5: #{_lambda_.16} parent=0 // loop_body
    %s14 = ssub.s32 %s9, 1
    %s15 = ssub.s32 %s9, 2
    %s16 = sadd.s32 %s9, 1
    %s17 = ssub.s32 %s9, %s16
    %p18 = scmp.eq.s32.totalorder %s17, 0
    %s20 = sadd.s32 %s19, 1
    %s21 = scalar_select %p18, %s19, %s20
    %p24 = pneg %p18
    %p25 = scmp.eq.s32.totalorder %s9, 1
    %p26 = por %p24, %p25
    %p27 = scmp.ne.s32.totalorder %s19, %s22
    %p28 = scmp.eq.s32.totalorder %s9, 0
    %p29 = por %p27, %p28
    %p30 = scmp.ne.s32.totalorder %s19, %s22
    %p31 = scmp.eq.s32.totalorder %s14, 1
    %p32 = por %p30, %p31
    %p33 = scmp.ne.s32.totalorder %s22, %s23
    %p34 = scmp.eq.s32.totalorder %s14, 0
    %p35 = por %p33, %p34
    %p36 = scmp.ne.s32.totalorder %s22, %s23
    %p37 = scmp.eq.s32.totalorder %s15, 1
    %p38 = por %p36, %p37
    %p40 = scmp.ne.s32.totalorder %s23, %s39
    %p41 = scmp.eq.s32.totalorder %s15, 0
    %p42 = por %p40, %p41
    %s44 = sadd.s32 %s43, 1
    %p47 = scmp.eq.s32.totalorder %s9, 1
    %p48 = scmp.ne.s32.totalorder %s43, %s45
    %p49 = scmp.eq.s32.totalorder %s9, 0
    %p50 = por %p48, %p49
    %p51 = scmp.ne.s32.totalorder %s43, %s45
    %p52 = scmp.eq.s32.totalorder %s14, 1
    %p53 = por %p51, %p52
    %p54 = scmp.ne.s32.totalorder %s45, %s46
    %p55 = scmp.eq.s32.totalorder %s14, 0
    %p56 = por %p54, %p55
    %p57 = scmp.ne.s32.totalorder %s45, %s46
    %p58 = scmp.eq.s32.totalorder %s15, 1
    %p59 = por %p57, %p58
    %p61 = scmp.ne.s32.totalorder %s46, %s60
    %p62 = scmp.eq.s32.totalorder %s15, 0
    %p63 = por %p61, %p62
    %s65 = sadd.s32 %s64, 1
    %p68 = scmp.eq.s32.totalorder %s9, 1
    %p69 = scmp.ne.s32.totalorder %s64, %s66
    %p70 = scmp.eq.s32.totalorder %s9, 0
    %p71 = por %p69, %p70
    %p72 = scmp.ne.s32.totalorder %s64, %s66
    %p73 = scmp.eq.s32.totalorder %s14, 1
    %p74 = por %p72, %p73
    %p75 = scmp.ne.s32.totalorder %s66, %s67
    %p76 = scmp.eq.s32.totalorder %s14, 0
    %p77 = por %p75, %p76
    %p78 = scmp.ne.s32.totalorder %s66, %s67
    %p79 = scmp.eq.s32.totalorder %s15, 1
    %p80 = por %p78, %p79
    %p82 = scmp.ne.s32.totalorder %s67, %s81
    %p83 = scmp.eq.s32.totalorder %s15, 0
    %p84 = por %p82, %p83
    %s85 = ssub.s32 %s9, %s16
    %p86 = scmp.eq.s32.totalorder %s85, 0
    %s88 = sadd.s32 %s87, 1
    %s89 = scalar_select %p86, %s87, %s88
    %p92 = pneg %p86
    %p93 = scmp.eq.s32.totalorder %s9, 1
    %p94 = por %p92, %p93
    %p95 = scmp.ne.s32.totalorder %s87, %s90
    %p96 = scmp.eq.s32.totalorder %s9, 0
    %p97 = por %p95, %p96
    %p98 = scmp.ne.s32.totalorder %s87, %s90
    %p99 = scmp.eq.s32.totalorder %s14, 1
    %p100 = por %p98, %p99
    %p101 = scmp.ne.s32.totalorder %s90, %s91
    %p102 = scmp.eq.s32.totalorder %s14, 0
    %p103 = por %p101, %p102
    %p104 = scmp.ne.s32.totalorder %s90, %s91
    %p105 = scmp.eq.s32.totalorder %s15, 1
    %p106 = por %p104, %p105
    %p108 = scmp.ne.s32.totalorder %s91, %s107
    %p109 = scmp.eq.s32.totalorder %s15, 0
    %p110 = por %p108, %p109
    %p111 = scmp.le.s32.totalorder 1, %s9
    %p112 = scmp.lt.s32.totalorder %s9, 3
    %p113 = pnand %p111, %p112
    %p114 = pneg %p113
    // Predicated region
    $region9: #{_lambda_.16} parent=5 // pred_check
      _
    $region10: #{_lambda_.16} parent=5 // pred_check_branch
      %116 = sbr.rel (%p113) target = $region12
    $region11: #{_lambda_.16} parent=5 // pred_region
      %s117 = ssub.s32 %s9, 1
      // Predicated region
      $region13: #{_lambda_.16} parent=11 // pred_check
        %p118 = pneg %p56
      $region14: #{_lambda_.16} parent=11 // pred_check_branch
        %120 = sbr.rel (%p118) target = $region16
      $region15: #{_lambda_.16} parent=11 // pred_region
        _
      $region16: #{_lambda_.16} parent=11 // pred_fallthru
        _
      // Predicated region
      $region17: #{_lambda_.16} parent=11 // pred_check
        %p121 = pneg %p77
      $region18: #{_lambda_.16} parent=11 // pred_check_branch
        %123 = sbr.rel (%p121) target = $region20
      $region19: #{_lambda_.16} parent=11 // pred_region
        _
      $region20: #{_lambda_.16} parent=11 // pred_fallthru
        _
    $region12: #{_lambda_.16} parent=5 // pred_fallthru
      _
    %p124 = scmp.lt.s32.totalorder %s9, 2
    // Predicated region
    $region21: #{_lambda_.16} parent=5 // pred_check
      %p125 = pneg %p124
    $region22: #{_lambda_.16} parent=5 // pred_check_branch
      %127 = sbr.rel (%p125) target = $region24
    $region23: #{_lambda_.16} parent=5 // pred_region
      // Predicated region
      $region25: #{_lambda_.16} parent=23 // pred_check
        %p128 = pneg %p29
      $region26: #{_lambda_.16} parent=23 // pred_check_branch
        %130 = sbr.rel (%p128) target = $region28
      $region27: #{_lambda_.16} parent=23 // pred_region
        %s131 = smul.u32 8, %s9
        %p132 = scmp.lt.s32.totalorder %s131, 15
        %s133 = scalar_select %p132, %s131, 15
        %s134 = smul.addr %s133, 4
        %s135 = scalar_lea.vmem %s0, %s134
        %s136 = smul.u32 8, %s9
      $region28: #{_lambda_.16} parent=23 // pred_fallthru
        _
    $region24: #{_lambda_.16} parent=5 // pred_fallthru
      _
    %p137 = scmp.le.s32.totalorder 1, %s9
    %p138 = scmp.lt.s32.totalorder %s9, 3
    %p139 = pnand %p137, %p138
    %p140 = pneg %p139
    // Predicated region
    $region29: #{_lambda_.16} parent=5 // pred_check
      _
    $region30: #{_lambda_.16} parent=5 // pred_check_branch
      %142 = sbr.rel (%p139) target = $region32
    $region31: #{_lambda_.16} parent=5 // pred_region
      %s143 = ssub.s32 %s9, 1
      %s144 = smul.u32 8, %s14
      %p145 = scmp.lt.s32.totalorder %s144, 15
      %s146 = scalar_select %p145, %s144, 15
      %s147 = smul.addr %s146, 4
      %s148 = scalar_lea.vmem %s0, %s147
      %p149 = pneg %p35
      %p150 = pneg %p32
      %p151 = pneg %p56
      %p152 = pneg %p53
      %p153 = pneg %p77
      %p154 = pneg %p74
      %p155 = pneg %p103
      %p156 = pneg %p100
      %s157 = smul.u32 8, %s14
      %p158 = scmp.lt.s32.totalorder %s157, 15
      %s159 = scalar_select %p158, %s157, 15
      %s160 = smul.addr %s159, 4
      %s161 = scalar_lea.vmem %s3, %s160
      %s162 = smul.u32 8, %s14
      %p163 = scmp.lt.s32.totalorder %s162, 15
      %s164 = scalar_select %p163, %s162, 15
      %s165 = smul.addr %s164, 4
      %s166 = scalar_lea.vmem %s0, %s165
      %s167 = smul.u32 8, %s14
      %s168 = smul.u32 8, %s14
      %p169 = scmp.lt.s32.totalorder %s168, 15
      %s170 = scalar_select %p169, %s168, 15
      %s171 = smul.addr %s170, 4
      %s172 = scalar_lea.vmem %s3, %s171
      %s173 = smul.u32 8, %s14
      %v175 = vld [vmem:[%s166] sm:$0xf]
      %v176 = vld [vmem:[%s166 + $0x4] sm:$0xf]
      %v177 = vld [vmem:[%s166 + $0x8] sm:$0xf]
      %v178 = vld [vmem:[%s166 + $0xc] sm:$0xf]
      %v179 = vld [vmem:[%s166 + $0x10] sm:$0xf]
      %v180 = vld [vmem:[%s166 + $0x14] sm:$0xf]
      %v181 = vld [vmem:[%s166 + $0x18] sm:$0xf]
      %v182 = vld [vmem:[%s166 + $0x1c] sm:$0xf]
      %v183 = vld [vmem:[%s1] sm:$0xf]
      %v184 = vld [vmem:[%s1 + $0x4] sm:$0xf]
      %v185 = vld [vmem:[%s1 + $0x8] sm:$0xf]
      %v186 = vld [vmem:[%s1 + $0xc] sm:$0xf]
      %v187 = vld [vmem:[%s1 + $0x10] sm:$0xf]
      %v188 = vld [vmem:[%s1 + $0x14] sm:$0xf]
      %v189 = vld [vmem:[%s1 + $0x18] sm:$0xf]
      %v190 = vld [vmem:[%s1 + $0x1c] sm:$0xf]
      %v191 = vld [vmem:[%s1 + $0x20] sm:$0xf]
      %v192 = vld [vmem:[%s2] sm:$0x1]
      %v194 = vperm.slane %v192, 0
      %v204 = vunpack.c.l.b16 %v175
      %v205 = vunpack.c.l.b16 %v176
      %v206 = vunpack.c.l.b16 %v177
      %v207 = vunpack.c.l.b16 %v178
      %v208 = vunpack.c.l.b16 %v179
      %v209 = vunpack.c.l.b16 %v180
      %v210 = vunpack.c.l.b16 %v181
      %v211 = vunpack.c.l.b16 %v182
      %v212 = vpack.c.b16 %v205, %v204
      %v213 = vpack.c.b16 %v207, %v206
      %v214 = vpack.c.b16 %v209, %v208
      %v215 = vpack.c.b16 %v211, %v210
      %v225 = vunpack.c.l.b16 %v183
      %v226 = vunpack.c.l.b16 %v184
      %v227 = vunpack.c.l.b16 %v185
      %v228 = vunpack.c.l.b16 %v186
      %v229 = vunpack.c.l.b16 %v187
      %v230 = vunpack.c.l.b16 %v188
      %v231 = vunpack.c.l.b16 %v189
      %v232 = vunpack.c.l.b16 %v190
      %v233 = vunpack.c.l.b16 %v191
      %v234 = vpack.c.b16 %v226, %v225
      %v235 = vpack.c.b16 %v228, %v227
      %v236 = vpack.c.b16 %v230, %v229
      %v237 = vpack.c.b16 %v232, %v231
      %v238 = vpack.c.b16 %v233, %v233
      %vm243 = vcmask 588800
      %v245 = vsel %vm243, %v212, 0
      %v248 = vsel %vm243, %v213, 0
      %v251 = vsel %vm243, %v214, 0
      %v254 = vsel %vm243, %v215, 0
      %vm256 = vcmask 1043456
      %v258 = vsel %vm256, %v238, 0
      %260 = vmatpush.bf16.msra.mxu0 0
      %261 = vmatpush.bf16.msra.mxu0 0
      %262 = vmatpush.bf16.msra.mxu0 0
      %263 = vmatpush.bf16.msra.mxu0 %v258
      %264 = vmatpush.bf16.msra.mxu0 %v237
      %265 = vmatpush.bf16.msra.mxu0 %v236
      %266 = vmatpush.bf16.msra.mxu0 %v235
      %267 = vmatpush.bf16.msra.mxu0 %v234
      %268 = vmatmul.bf16.gmra.mxu0 %v245
      %v269 = vpop.f32.mrf.mxu0
      %v270 = vadd.f32 %v194, %v269
      %v271 = vpop.f32.mrf.mxu0
      %v272 = vadd.f32 %v194, %v271
      %273 = vmatmul.bf16.gmra.mxu0 %v248
      %v274 = vpop.f32.mrf.mxu0
      %v275 = vadd.f32 %v194, %v274
      %v276 = vpop.f32.mrf.mxu0
      %v277 = vadd.f32 %v194, %v276
      %278 = vmatmul.bf16.gmra.mxu0 %v251
      %v279 = vpop.f32.mrf.mxu0
      %v280 = vadd.f32 %v194, %v279
      %v281 = vpop.f32.mrf.mxu0
      %v282 = vadd.f32 %v194, %v281
      %283 = vmatmul.bf16.gmra.mxu0 %v254
      %v284 = vpop.f32.mrf.mxu0
      %v285 = vadd.f32 %v194, %v284
      %v286 = vpop.f32.mrf.mxu0
      %v287 = vadd.f32 %v194, %v286
      %288 = vdwg.mxu0
      %v289 = vmax.f32 %v270, 0.0
      %v290 = vmax.f32 %v272, 0.0
      %v291 = vmax.f32 %v275, 0.0
      %v292 = vmax.f32 %v277, 0.0
      %v293 = vmax.f32 %v280, 0.0
      %v294 = vmax.f32 %v282, 0.0
      %v295 = vmax.f32 %v285, 0.0
      %v296 = vmax.f32 %v287, 0.0
      %v297 = vpack.c.bf16 %v289, %v289
      %v298 = vpack.c.bf16 %v290, %v290
      %v299 = vpack.c.bf16 %v291, %v291
      %v300 = vpack.c.bf16 %v292, %v292
      %v301 = vpack.c.bf16 %v293, %v293
      %v302 = vpack.c.bf16 %v294, %v294
      %v303 = vpack.c.bf16 %v295, %v295
      %v304 = vpack.c.bf16 %v296, %v296
      %vm305 = vcmask 60416
      %306 = vst.msk [vmem:[%s172] sm:$0xf] %vm305, %v297
      %307 = vst.msk [vmem:[%s172 + $0x4] sm:$0xf] %vm305, %v298
      %308 = vst.msk [vmem:[%s172 + $0x8] sm:$0xf] %vm305, %v299
      %309 = vst.msk [vmem:[%s172 + $0xc] sm:$0xf] %vm305, %v300
      %310 = vst.msk [vmem:[%s172 + $0x10] sm:$0xf] %vm305, %v301
      %311 = vst.msk [vmem:[%s172 + $0x14] sm:$0xf] %vm305, %v302
      %312 = vst.msk [vmem:[%s172 + $0x18] sm:$0xf] %vm305, %v303
      %313 = vst.msk [vmem:[%s172 + $0x1c] sm:$0xf] %vm305, %v304
      %s314 = smul.u32 8, %s14
      %p315 = scmp.lt.s32.totalorder %s314, 15
      %s316 = scalar_select %p315, %s314, 15
      %s317 = smul.addr %s316, 4
      %s318 = scalar_lea.vmem %s3, %s317
      // Predicated region
      $region33: #{_lambda_.16} parent=31 // pred_check
        %p319 = pneg %p100
      $region34: #{_lambda_.16} parent=31 // pred_check_branch
        %321 = sbr.rel (%p319) target = $region36
      $region35: #{_lambda_.16} parent=31 // pred_region
        %s322 = smul.u32 8, %s14
      $region36: #{_lambda_.16} parent=31 // pred_fallthru
        _
    $region32: #{_lambda_.16} parent=5 // pred_fallthru
      _
    %p323 = scmp.le.s32.totalorder 2, %s9
    // Predicated region
    $region37: #{_lambda_.16} parent=5 // pred_check
      %p324 = pneg %p323
    $region38: #{_lambda_.16} parent=5 // pred_check_branch
      %326 = sbr.rel (%p324) target = $region40
    $region39: #{_lambda_.16} parent=5 // pred_region
      %s327 = ssub.s32 %s9, 2
      // Predicated region
      $region41: #{_lambda_.16} parent=39 // pred_check
        %p328 = pneg %p106
      $region42: #{_lambda_.16} parent=39 // pred_check_branch
        %330 = sbr.rel (%p328) target = $region44
      $region43: #{_lambda_.16} parent=39 // pred_region
        %s331 = smul.u32 8, %s15
        %p332 = scmp.lt.s32.totalorder %s331, 15
        %s333 = scalar_select %p332, %s331, 15
        %s334 = smul.addr %s333, 4
        %s335 = scalar_lea.vmem %s3, %s334
      $region44: #{_lambda_.16} parent=39 // pred_fallthru
        _
    $region40: #{_lambda_.16} parent=5 // pred_fallthru
      _
  $region6: #{_lambda_.16} parent=0 // loop_footer
    %s13 = sadd.s32 1, %s9
  $region7: #{_lambda_.16} parent=0 // loop_footer_branch
    %8 = sbr.rel target = $region3
  $region8: #{_lambda_.16} parent=0 // loop_exit
    _

// kernel: _lambda_.17
$region0: #{_lambda_.17}
  #allocation0 [shape = 'u32[]', space=smem, size = 0x4, offset = 0x4, fixed_abs, tag = 'smem constant byte address 0x4 - core index']
  #allocation1 [shape = 'u32[72,128]{1,0:T(1,128)}', space=vmem, size = 0x9000, scoped, tag = 'internal scratch']
  %s0 = inlined_call_operand.vmem [shape: bf16[128,8], index: 0, kind: input, shape index: {}]
  %s1 = inlined_call_operand.vmem [shape: bf16[8,32], index: 1, kind: input, shape index: {}]
  %s2 = inlined_call_operand.vmem [shape: f32[1,32], index: 2, kind: input, shape index: {}]
  %s3 = inlined_call_operand.vmem [shape: bf16[128,32], index: 3, kind: input, shape index: {}]
  %s4 = inlined_call_operand.vmem [shape: bf16[128,32], index: 4, kind: output, shape index: {}]
  %s5 = sld [smem:[#allocation0]]
  $region49: #{_lambda_.17} parent=0
    _
  %s7 = ssub.s32 1, %s5
  %s8 = scalar_select 0, %s7, %s5
  loop: start=0, step=1, limit=4
  $region2: #{_lambda_.17} parent=0 // loop_pre_header
    _
  $region3: #{_lambda_.17} parent=0 // loop_header
    %s10 = sphi 0, %s14
    %p11 = scmp.ge.s32.totalorder %s10, 4
    %s20 = sphi 0, %s22
    %s23 = sphi 0, %s20
    %s24 = sphi 0, %s23
    %s40 = sphi 0, %s24
    %s44 = sphi 0, %s44
    %s46 = sphi 0, %s44
    %s47 = sphi 0, %s46
    %s61 = sphi 0, %s47
    %s65 = sphi 0, %s65
    %s67 = sphi 0, %s65
    %s68 = sphi 0, %s67
    %s82 = sphi 0, %s68
    %s88 = sphi 0, %s90
    %s91 = sphi 0, %s88
    %s92 = sphi 0, %s91
    %s108 = sphi 0, %s92
    %s114 = sphi 0, %s116
    %s117 = sphi 0, %s114
    %s118 = sphi 0, %s117
    %s134 = sphi 0, %s118
  $region4: #{_lambda_.17} parent=0 // loop_header_branch
    %13 = sbr.rel (%p11) target = $region8
  $region5: #{_lambda_.17} parent=0 // loop_body
    %s15 = ssub.s32 %s10, 1
    %s16 = ssub.s32 %s10, 2
    %s17 = sadd.s32 %s10, 1
    %s18 = ssub.s32 %s10, %s17
    %p19 = scmp.eq.s32.totalorder %s18, 0
    %s21 = sadd.s32 %s20, 1
    %s22 = scalar_select %p19, %s20, %s21
    %p25 = pneg %p19
    %p26 = scmp.eq.s32.totalorder %s10, 1
    %p27 = por %p25, %p26
    %p28 = scmp.ne.s32.totalorder %s20, %s23
    %p29 = scmp.eq.s32.totalorder %s10, 0
    %p30 = por %p28, %p29
    %p31 = scmp.ne.s32.totalorder %s20, %s23
    %p32 = scmp.eq.s32.totalorder %s15, 1
    %p33 = por %p31, %p32
    %p34 = scmp.ne.s32.totalorder %s23, %s24
    %p35 = scmp.eq.s32.totalorder %s15, 0
    %p36 = por %p34, %p35
    %p37 = scmp.ne.s32.totalorder %s23, %s24
    %p38 = scmp.eq.s32.totalorder %s16, 1
    %p39 = por %p37, %p38
    %p41 = scmp.ne.s32.totalorder %s24, %s40
    %p42 = scmp.eq.s32.totalorder %s16, 0
    %p43 = por %p41, %p42
    %s45 = sadd.s32 %s44, 1
    %p48 = scmp.eq.s32.totalorder %s10, 1
    %p49 = scmp.ne.s32.totalorder %s44, %s46
    %p50 = scmp.eq.s32.totalorder %s10, 0
    %p51 = por %p49, %p50
    %p52 = scmp.ne.s32.totalorder %s44, %s46
    %p53 = scmp.eq.s32.totalorder %s15, 1
    %p54 = por %p52, %p53
    %p55 = scmp.ne.s32.totalorder %s46, %s47
    %p56 = scmp.eq.s32.totalorder %s15, 0
    %p57 = por %p55, %p56
    %p58 = scmp.ne.s32.totalorder %s46, %s47
    %p59 = scmp.eq.s32.totalorder %s16, 1
    %p60 = por %p58, %p59
    %p62 = scmp.ne.s32.totalorder %s47, %s61
    %p63 = scmp.eq.s32.totalorder %s16, 0
    %p64 = por %p62, %p63
    %s66 = sadd.s32 %s65, 1
    %p69 = scmp.eq.s32.totalorder %s10, 1
    %p70 = scmp.ne.s32.totalorder %s65, %s67
    %p71 = scmp.eq.s32.totalorder %s10, 0
    %p72 = por %p70, %p71
    %p73 = scmp.ne.s32.totalorder %s65, %s67
    %p74 = scmp.eq.s32.totalorder %s15, 1
    %p75 = por %p73, %p74
    %p76 = scmp.ne.s32.totalorder %s67, %s68
    %p77 = scmp.eq.s32.totalorder %s15, 0
    %p78 = por %p76, %p77
    %p79 = scmp.ne.s32.totalorder %s67, %s68
    %p80 = scmp.eq.s32.totalorder %s16, 1
    %p81 = por %p79, %p80
    %p83 = scmp.ne.s32.totalorder %s68, %s82
    %p84 = scmp.eq.s32.totalorder %s16, 0
    %p85 = por %p83, %p84
    %s86 = ssub.s32 %s10, %s17
    %p87 = scmp.eq.s32.totalorder %s86, 0
    %s89 = sadd.s32 %s88, 1
    %s90 = scalar_select %p87, %s88, %s89
    %p93 = pneg %p87
    %p94 = scmp.eq.s32.totalorder %s10, 1
    %p95 = por %p93, %p94
    %p96 = scmp.ne.s32.totalorder %s88, %s91
    %p97 = scmp.eq.s32.totalorder %s10, 0
    %p98 = por %p96, %p97
    %p99 = scmp.ne.s32.totalorder %s88, %s91
    %p100 = scmp.eq.s32.totalorder %s15, 1
    %p101 = por %p99, %p100
    %p102 = scmp.ne.s32.totalorder %s91, %s92
    %p103 = scmp.eq.s32.totalorder %s15, 0
    %p104 = por %p102, %p103
    %p105 = scmp.ne.s32.totalorder %s91, %s92
    %p106 = scmp.eq.s32.totalorder %s16, 1
    %p107 = por %p105, %p106
    %p109 = scmp.ne.s32.totalorder %s92, %s108
    %p110 = scmp.eq.s32.totalorder %s16, 0
    %p111 = por %p109, %p110
    %s112 = ssub.s32 %s10, %s17
    %p113 = scmp.eq.s32.totalorder %s112, 0
    %s115 = sadd.s32 %s114, 1
    %s116 = scalar_select %p113, %s114, %s115
    %p119 = pneg %p113
    %p120 = scmp.eq.s32.totalorder %s10, 1
    %p121 = por %p119, %p120
    %p122 = scmp.ne.s32.totalorder %s114, %s117
    %p123 = scmp.eq.s32.totalorder %s10, 0
    %p124 = por %p122, %p123
    %p125 = scmp.ne.s32.totalorder %s114, %s117
    %p126 = scmp.eq.s32.totalorder %s15, 1
    %p127 = por %p125, %p126
    %p128 = scmp.ne.s32.totalorder %s117, %s118
    %p129 = scmp.eq.s32.totalorder %s15, 0
    %p130 = por %p128, %p129
    %p131 = scmp.ne.s32.totalorder %s117, %s118
    %p132 = scmp.eq.s32.totalorder %s16, 1
    %p133 = por %p131, %p132
    %p135 = scmp.ne.s32.totalorder %s118, %s134
    %p136 = scmp.eq.s32.totalorder %s16, 0
    %p137 = por %p135, %p136
    %p138 = scmp.le.s32.totalorder 1, %s10
    %p139 = scmp.lt.s32.totalorder %s10, 3
    %p140 = pnand %p138, %p139
    %p141 = pneg %p140
    // Predicated region
    $region9: #{_lambda_.17} parent=5 // pred_check
      _
    $region10: #{_lambda_.17} parent=5 // pred_check_branch
      %143 = sbr.rel (%p140) target = $region12
    $region11: #{_lambda_.17} parent=5 // pred_region
      %s144 = ssub.s32 %s10, 1
      // Predicated region
      $region13: #{_lambda_.17} parent=11 // pred_check
        %p145 = pneg %p57
      $region14: #{_lambda_.17} parent=11 // pred_check_branch
        %147 = sbr.rel (%p145) target = $region16
      $region15: #{_lambda_.17} parent=11 // pred_region
        _
      $region16: #{_lambda_.17} parent=11 // pred_fallthru
        _
      // Predicated region
      $region17: #{_lambda_.17} parent=11 // pred_check
        %p148 = pneg %p78
      $region18: #{_lambda_.17} parent=11 // pred_check_branch
        %150 = sbr.rel (%p148) target = $region20
      $region19: #{_lambda_.17} parent=11 // pred_region
        _
      $region20: #{_lambda_.17} parent=11 // pred_fallthru
        _
    $region12: #{_lambda_.17} parent=5 // pred_fallthru
      _
    %p151 = scmp.lt.s32.totalorder %s10, 2
    // Predicated region
    $region21: #{_lambda_.17} parent=5 // pred_check
      %p152 = pneg %p151
    $region22: #{_lambda_.17} parent=5 // pred_check_branch
      %154 = sbr.rel (%p152) target = $region24
    $region23: #{_lambda_.17} parent=5 // pred_region
      // Predicated region
      $region25: #{_lambda_.17} parent=23 // pred_check
        %p155 = pneg %p30
      $region26: #{_lambda_.17} parent=23 // pred_check_branch
        %157 = sbr.rel (%p155) target = $region28
      $region27: #{_lambda_.17} parent=23 // pred_region
        %s158 = smul.u32 8, %s10
        %p159 = scmp.lt.s32.totalorder %s158, 15
        %s160 = scalar_select %p159, %s158, 15
        %s161 = smul.addr %s160, 4
        %s162 = scalar_lea.vmem %s0, %s161
        %s163 = smul.u32 8, %s10
      $region28: #{_lambda_.17} parent=23 // pred_fallthru
        _
      // Predicated region
      $region29: #{_lambda_.17} parent=23 // pred_check
        %p164 = pneg %p98
      $region30: #{_lambda_.17} parent=23 // pred_check_branch
        %166 = sbr.rel (%p164) target = $region32
      $region31: #{_lambda_.17} parent=23 // pred_region
        %s167 = smul.u32 8, %s10
        %p168 = scmp.lt.s32.totalorder %s167, 15
        %s169 = scalar_select %p168, %s167, 15
        %s170 = smul.addr %s169, 4
        %s171 = scalar_lea.vmem %s3, %s170
        %s172 = smul.u32 8, %s10
      $region32: #{_lambda_.17} parent=23 // pred_fallthru
        _
    $region24: #{_lambda_.17} parent=5 // pred_fallthru
      _
    %p173 = scmp.le.s32.totalorder 1, %s10
    %p174 = scmp.lt.s32.totalorder %s10, 3
    %p175 = pnand %p173, %p174
    %p176 = pneg %p175
    // Predicated region
    $region33: #{_lambda_.17} parent=5 // pred_check
      _
    $region34: #{_lambda_.17} parent=5 // pred_check_branch
      %178 = sbr.rel (%p175) target = $region36
    $region35: #{_lambda_.17} parent=5 // pred_region
      %s179 = ssub.s32 %s10, 1
      %s180 = smul.u32 8, %s15
      %p181 = scmp.lt.s32.totalorder %s180, 15
      %s182 = scalar_select %p181, %s180, 15
      %s183 = smul.addr %s182, 4
      %s184 = scalar_lea.vmem %s0, %s183
      %p185 = pneg %p36
      %p186 = pneg %p33
      %p187 = pneg %p57
      %p188 = pneg %p54
      %p189 = pneg %p78
      %p190 = pneg %p75
      %s191 = smul.u32 8, %s15
      %p192 = scmp.lt.s32.totalorder %s191, 15
      %s193 = scalar_select %p192, %s191, 15
      %s194 = smul.addr %s193, 4
      %s195 = scalar_lea.vmem %s3, %s194
      %p196 = pneg %p104
      %p197 = pneg %p101
      %p198 = pneg %p130
      %p199 = pneg %p127
      %s200 = smul.u32 8, %s15
      %p201 = scmp.lt.s32.totalorder %s200, 15
      %s202 = scalar_select %p201, %s200, 15
      %s203 = smul.addr %s202, 4
      %s204 = scalar_lea.vmem %s4, %s203
      %s205 = smul.u32 8, %s15
      %p206 = scmp.lt.s32.totalorder %s205, 15
      %s207 = scalar_select %p206, %s205, 15
      %s208 = smul.addr %s207, 4
      %s209 = scalar_lea.vmem %s0, %s208
      %s210 = smul.u32 8, %s15
      %s211 = smul.u32 8, %s15
      %p212 = scmp.lt.s32.totalorder %s211, 15
      %s213 = scalar_select %p212, %s211, 15
      %s214 = smul.addr %s213, 4
      %s215 = scalar_lea.vmem %s3, %s214
      %s216 = smul.u32 8, %s15
      %s217 = smul.u32 8, %s15
      %p218 = scmp.lt.s32.totalorder %s217, 15
      %s219 = scalar_select %p218, %s217, 15
      %s220 = smul.addr %s219, 4
      %s221 = scalar_lea.vmem %s4, %s220
      %s222 = smul.u32 8, %s15
      %v224 = vld [vmem:[%s209] sm:$0xf]
      %v225 = vld [vmem:[%s209 + $0x4] sm:$0xf]
      %v226 = vld [vmem:[%s209 + $0x8] sm:$0xf]
      %v227 = vld [vmem:[%s209 + $0xc] sm:$0xf]
      %v228 = vld [vmem:[%s209 + $0x10] sm:$0xf]
      %v229 = vld [vmem:[%s209 + $0x14] sm:$0xf]
      %v230 = vld [vmem:[%s209 + $0x18] sm:$0xf]
      %v231 = vld [vmem:[%s209 + $0x1c] sm:$0xf]
      %v232 = vld [vmem:[%s1] sm:$0xf]
      %v233 = vld [vmem:[%s2] sm:$0x1]
      %v235 = vperm.slane %v233, 0
      %v245 = vunpack.c.l.b16 %v224
      %v246 = vunpack.c.l.b16 %v225
      %v247 = vunpack.c.l.b16 %v226
      %v248 = vunpack.c.l.b16 %v227
      %v249 = vunpack.c.l.b16 %v228
      %v250 = vunpack.c.l.b16 %v229
      %v251 = vunpack.c.l.b16 %v230
      %v252 = vunpack.c.l.b16 %v231
      %v253 = vpack.c.b16 %v246, %v245
      %v254 = vpack.c.b16 %v248, %v247
      %v255 = vpack.c.b16 %v250, %v249
      %v256 = vpack.c.b16 %v252, %v251
      %vm257 = vcmask 64512
      %v259 = vsel %vm257, %v253, 0
      %v262 = vsel %vm257, %v254, 0
      %v265 = vsel %vm257, %v255, 0
      %v268 = vsel %vm257, %v256, 0
      %vm270 = vcmask 1043456
      %v272 = vsel %vm270, %v232, 0
      %274 = vmatpush.bf16.msra.mxu0 0
      %275 = vmatpush.bf16.msra.mxu0 0
      %276 = vmatpush.bf16.msra.mxu0 0
      %277 = vmatpush.bf16.msra.mxu0 0
      %278 = vmatpush.bf16.msra.mxu0 0
      %279 = vmatpush.bf16.msra.mxu0 0
      %280 = vmatpush.bf16.msra.mxu0 0
      %281 = vmatpush.bf16.msra.mxu0 %v272
      %282 = vmatmul.bf16.gmra.mxu0 %v259
      %v283 = vpop.f32.mrf.mxu0
      %v284 = vadd.f32 %v235, %v283
      %v285 = vpop.f32.mrf.mxu0
      %v286 = vadd.f32 %v235, %v285
      %287 = vmatmul.bf16.gmra.mxu0 %v262
      %v288 = vpop.f32.mrf.mxu0
      %v289 = vadd.f32 %v235, %v288
      %v290 = vpop.f32.mrf.mxu0
      %v291 = vadd.f32 %v235, %v290
      %292 = vmatmul.bf16.gmra.mxu0 %v265
      %v293 = vpop.f32.mrf.mxu0
      %v294 = vadd.f32 %v235, %v293
      %v295 = vpop.f32.mrf.mxu0
      %v296 = vadd.f32 %v235, %v295
      %297 = vmatmul.bf16.gmra.mxu0 %v268
      %v298 = vpop.f32.mrf.mxu0
      %v299 = vadd.f32 %v235, %v298
      %v300 = vpop.f32.mrf.mxu0
      %v301 = vadd.f32 %v235, %v300
      %302 = vdwg.mxu0
      %v303 = vld [vmem:[%s215] sm:$0xf]
      %v304 = vld [vmem:[%s215 + $0x4] sm:$0xf]
      %v305 = vld [vmem:[%s215 + $0x8] sm:$0xf]
      %v306 = vld [vmem:[%s215 + $0xc] sm:$0xf]
      %v307 = vld [vmem:[%s215 + $0x10] sm:$0xf]
      %v308 = vld [vmem:[%s215 + $0x14] sm:$0xf]
      %v309 = vld [vmem:[%s215 + $0x18] sm:$0xf]
      %v310 = vld [vmem:[%s215 + $0x1c] sm:$0xf]
      %v311 = vunpack.c.l.bf16 %v303
      %v312 = vunpack.c.l.bf16 %v304
      %v313 = vunpack.c.l.bf16 %v305
      %v314 = vunpack.c.l.bf16 %v306
      %v315 = vunpack.c.l.bf16 %v307
      %v316 = vunpack.c.l.bf16 %v308
      %v317 = vunpack.c.l.bf16 %v309
      %v318 = vunpack.c.l.bf16 %v310
      %v319 = vadd.f32 %v284, %v311
      %v320 = vadd.f32 %v286, %v312
      %v321 = vadd.f32 %v289, %v313
      %v322 = vadd.f32 %v291, %v314
      %v323 = vadd.f32 %v294, %v315
      %v324 = vadd.f32 %v296, %v316
      %v325 = vadd.f32 %v299, %v317
      %v326 = vadd.f32 %v301, %v318
      %v327 = vmax.f32 %v319, 0.0
      %v328 = vmax.f32 %v320, 0.0
      %v329 = vmax.f32 %v321, 0.0
      %v330 = vmax.f32 %v322, 0.0
      %v331 = vmax.f32 %v323, 0.0
      %v332 = vmax.f32 %v324, 0.0
      %v333 = vmax.f32 %v325, 0.0
      %v334 = vmax.f32 %v326, 0.0
      %v335 = vpack.c.bf16 %v327, %v327
      %v336 = vpack.c.bf16 %v328, %v328
      %v337 = vpack.c.bf16 %v329, %v329
      %v338 = vpack.c.bf16 %v330, %v330
      %v339 = vpack.c.bf16 %v331, %v331
      %v340 = vpack.c.bf16 %v332, %v332
      %v341 = vpack.c.bf16 %v333, %v333
      %v342 = vpack.c.bf16 %v334, %v334
      %vm343 = vcmask 257024
      %344 = vst.msk [vmem:[%s221] sm:$0xf] %vm343, %v335
      %345 = vst.msk [vmem:[%s221 + $0x4] sm:$0xf] %vm343, %v336
      %346 = vst.msk [vmem:[%s221 + $0x8] sm:$0xf] %vm343, %v337
      %347 = vst.msk [vmem:[%s221 + $0xc] sm:$0xf] %vm343, %v338
      %348 = vst.msk [vmem:[%s221 + $0x10] sm:$0xf] %vm343, %v339
      %349 = vst.msk [vmem:[%s221 + $0x14] sm:$0xf] %vm343, %v340
      %350 = vst.msk [vmem:[%s221 + $0x18] sm:$0xf] %vm343, %v341
      %351 = vst.msk [vmem:[%s221 + $0x1c] sm:$0xf] %vm343, %v342
      %s352 = smul.u32 8, %s15
      %p353 = scmp.lt.s32.totalorder %s352, 15
      %s354 = scalar_select %p353, %s352, 15
      %s355 = smul.addr %s354, 4
      %s356 = scalar_lea.vmem %s4, %s355
      // Predicated region
      $region37: #{_lambda_.17} parent=35 // pred_check
        %p357 = pneg %p127
      $region38: #{_lambda_.17} parent=35 // pred_check_branch
        %359 = sbr.rel (%p357) target = $region40
      $region39: #{_lambda_.17} parent=35 // pred_region
        %s360 = smul.u32 8, %s15
      $region40: #{_lambda_.17} parent=35 // pred_fallthru
        _
    $region36: #{_lambda_.17} parent=5 // pred_fallthru
      _
    %p361 = scmp.le.s32.totalorder 2, %s10
    // Predicated region
    $region41: #{_lambda_.17} parent=5 // pred_check
      %p362 = pneg %p361
    $region42: #{_lambda_.17} parent=5 // pred_check_branch
      %364 = sbr.rel (%p362) target = $region44
    $region43: #{_lambda_.17} parent=5 // pred_region
      %s365 = ssub.s32 %s10, 2
      // Predicated region
      $region45: #{_lambda_.17} parent=43 // pred_check
        %p366 = pneg %p133
      $region46: #{_lambda_.17} parent=43 // pred_check_branch
        %368 = sbr.rel (%p366) target = $region48
      $region47: #{_lambda_.17} parent=43 // pred_region
        %s369 = smul.u32 8, %s16
        %p370 = scmp.lt.s32.totalorder %s369, 15
        %s371 = scalar_select %p370, %s369, 15
        %s372 = smul.addr %s371, 4
        %s373 = scalar_lea.vmem %s4, %s372
      $region48: #{_lambda_.17} parent=43 // pred_fallthru
        _
    $region44: #{_lambda_.17} parent=5 // pred_fallthru
      _
  $region6: #{_lambda_.17} parent=0 // loop_footer
    %s14 = sadd.s32 1, %s10
  $region7: #{_lambda_.17} parent=0 // loop_footer_branch
    %9 = sbr.rel target = $region3
  $region8: #{_lambda_.17} parent=0 // loop_exit
    _

// kernel: _lambda_.18
$region0: #{_lambda_.18}
  #allocation0 [shape = 'u32[]', space=smem, size = 0x4, offset = 0x4, fixed_abs, tag = 'smem constant byte address 0x4 - core index']
  #allocation1 [shape = 'u32[72,128]{1,0:T(1,128)}', space=vmem, size = 0x9000, scoped, tag = 'internal scratch']
  %s0 = inlined_call_operand.vmem [shape: bf16[128,32], index: 0, kind: input, shape index: {}]
  %s1 = inlined_call_operand.vmem [shape: bf16[32,8], index: 1, kind: input, shape index: {}]
  %s2 = inlined_call_operand.vmem [shape: f32[1,8], index: 2, kind: input, shape index: {}]
  %s3 = inlined_call_operand.vmem [shape: bf16[128,8], index: 3, kind: output, shape index: {}]
  %s4 = sld [smem:[#allocation0]]
  $region45: #{_lambda_.18} parent=0
    _
  %s6 = ssub.s32 1, %s4
  %s7 = scalar_select 0, %s6, %s4
  loop: start=0, step=1, limit=4
  $region2: #{_lambda_.18} parent=0 // loop_pre_header
    _
  $region3: #{_lambda_.18} parent=0 // loop_header
    %s9 = sphi 0, %s13
    %p10 = scmp.ge.s32.totalorder %s9, 4
    %s19 = sphi 0, %s21
    %s22 = sphi 0, %s19
    %s23 = sphi 0, %s22
    %s39 = sphi 0, %s23
    %s43 = sphi 0, %s43
    %s45 = sphi 0, %s43
    %s46 = sphi 0, %s45
    %s60 = sphi 0, %s46
    %s64 = sphi 0, %s64
    %s66 = sphi 0, %s64
    %s67 = sphi 0, %s66
    %s81 = sphi 0, %s67
    %s87 = sphi 0, %s89
    %s90 = sphi 0, %s87
    %s91 = sphi 0, %s90
    %s107 = sphi 0, %s91
  $region4: #{_lambda_.18} parent=0 // loop_header_branch
    %12 = sbr.rel (%p10) target = $region8
  $region5: #{_lambda_.18} parent=0 // loop_body
    %s14 = ssub.s32 %s9, 1
    %s15 = ssub.s32 %s9, 2
    %s16 = sadd.s32 %s9, 1
    %s17 = ssub.s32 %s9, %s16
    %p18 = scmp.eq.s32.totalorder %s17, 0
    %s20 = sadd.s32 %s19, 1
    %s21 = scalar_select %p18, %s19, %s20
    %p24 = pneg %p18
    %p25 = scmp.eq.s32.totalorder %s9, 1
    %p26 = por %p24, %p25
    %p27 = scmp.ne.s32.totalorder %s19, %s22
    %p28 = scmp.eq.s32.totalorder %s9, 0
    %p29 = por %p27, %p28
    %p30 = scmp.ne.s32.totalorder %s19, %s22
    %p31 = scmp.eq.s32.totalorder %s14, 1
    %p32 = por %p30, %p31
    %p33 = scmp.ne.s32.totalorder %s22, %s23
    %p34 = scmp.eq.s32.totalorder %s14, 0
    %p35 = por %p33, %p34
    %p36 = scmp.ne.s32.totalorder %s22, %s23
    %p37 = scmp.eq.s32.totalorder %s15, 1
    %p38 = por %p36, %p37
    %p40 = scmp.ne.s32.totalorder %s23, %s39
    %p41 = scmp.eq.s32.totalorder %s15, 0
    %p42 = por %p40, %p41
    %s44 = sadd.s32 %s43, 1
    %p47 = scmp.eq.s32.totalorder %s9, 1
    %p48 = scmp.ne.s32.totalorder %s43, %s45
    %p49 = scmp.eq.s32.totalorder %s9, 0
    %p50 = por %p48, %p49
    %p51 = scmp.ne.s32.totalorder %s43, %s45
    %p52 = scmp.eq.s32.totalorder %s14, 1
    %p53 = por %p51, %p52
    %p54 = scmp.ne.s32.totalorder %s45, %s46
    %p55 = scmp.eq.s32.totalorder %s14, 0
    %p56 = por %p54, %p55
    %p57 = scmp.ne.s32.totalorder %s45, %s46
    %p58 = scmp.eq.s32.totalorder %s15, 1
    %p59 = por %p57, %p58
    %p61 = scmp.ne.s32.totalorder %s46, %s60
    %p62 = scmp.eq.s32.totalorder %s15, 0
    %p63 = por %p61, %p62
    %s65 = sadd.s32 %s64, 1
    %p68 = scmp.eq.s32.totalorder %s9, 1
    %p69 = scmp.ne.s32.totalorder %s64, %s66
    %p70 = scmp.eq.s32.totalorder %s9, 0
    %p71 = por %p69, %p70
    %p72 = scmp.ne.s32.totalorder %s64, %s66
    %p73 = scmp.eq.s32.totalorder %s14, 1
    %p74 = por %p72, %p73
    %p75 = scmp.ne.s32.totalorder %s66, %s67
    %p76 = scmp.eq.s32.totalorder %s14, 0
    %p77 = por %p75, %p76
    %p78 = scmp.ne.s32.totalorder %s66, %s67
    %p79 = scmp.eq.s32.totalorder %s15, 1
    %p80 = por %p78, %p79
    %p82 = scmp.ne.s32.totalorder %s67, %s81
    %p83 = scmp.eq.s32.totalorder %s15, 0
    %p84 = por %p82, %p83
    %s85 = ssub.s32 %s9, %s16
    %p86 = scmp.eq.s32.totalorder %s85, 0
    %s88 = sadd.s32 %s87, 1
    %s89 = scalar_select %p86, %s87, %s88
    %p92 = pneg %p86
    %p93 = scmp.eq.s32.totalorder %s9, 1
    %p94 = por %p92, %p93
    %p95 = scmp.ne.s32.totalorder %s87, %s90
    %p96 = scmp.eq.s32.totalorder %s9, 0
    %p97 = por %p95, %p96
    %p98 = scmp.ne.s32.totalorder %s87, %s90
    %p99 = scmp.eq.s32.totalorder %s14, 1
    %p100 = por %p98, %p99
    %p101 = scmp.ne.s32.totalorder %s90, %s91
    %p102 = scmp.eq.s32.totalorder %s14, 0
    %p103 = por %p101, %p102
    %p104 = scmp.ne.s32.totalorder %s90, %s91
    %p105 = scmp.eq.s32.totalorder %s15, 1
    %p106 = por %p104, %p105
    %p108 = scmp.ne.s32.totalorder %s91, %s107
    %p109 = scmp.eq.s32.totalorder %s15, 0
    %p110 = por %p108, %p109
    %p111 = scmp.le.s32.totalorder 1, %s9
    %p112 = scmp.lt.s32.totalorder %s9, 3
    %p113 = pnand %p111, %p112
    %p114 = pneg %p113
    // Predicated region
    $region9: #{_lambda_.18} parent=5 // pred_check
      _
    $region10: #{_lambda_.18} parent=5 // pred_check_branch
      %116 = sbr.rel (%p113) target = $region12
    $region11: #{_lambda_.18} parent=5 // pred_region
      %s117 = ssub.s32 %s9, 1
      // Predicated region
      $region13: #{_lambda_.18} parent=11 // pred_check
        %p118 = pneg %p56
      $region14: #{_lambda_.18} parent=11 // pred_check_branch
        %120 = sbr.rel (%p118) target = $region16
      $region15: #{_lambda_.18} parent=11 // pred_region
        _
      $region16: #{_lambda_.18} parent=11 // pred_fallthru
        _
      // Predicated region
      $region17: #{_lambda_.18} parent=11 // pred_check
        %p121 = pneg %p77
      $region18: #{_lambda_.18} parent=11 // pred_check_branch
        %123 = sbr.rel (%p121) target = $region20
      $region19: #{_lambda_.18} parent=11 // pred_region
        _
      $region20: #{_lambda_.18} parent=11 // pred_fallthru
        _
    $region12: #{_lambda_.18} parent=5 // pred_fallthru
      _
    %p124 = scmp.lt.s32.totalorder %s9, 2
    // Predicated region
    $region21: #{_lambda_.18} parent=5 // pred_check
      %p125 = pneg %p124
    $region22: #{_lambda_.18} parent=5 // pred_check_branch
      %127 = sbr.rel (%p125) target = $region24
    $region23: #{_lambda_.18} parent=5 // pred_region
      // Predicated region
      $region25: #{_lambda_.18} parent=23 // pred_check
        %p128 = pneg %p29
      $region26: #{_lambda_.18} parent=23 // pred_check_branch
        %130 = sbr.rel (%p128) target = $region28
      $region27: #{_lambda_.18} parent=23 // pred_region
        %s131 = smul.u32 8, %s9
        %p132 = scmp.lt.s32.totalorder %s131, 15
        %s133 = scalar_select %p132, %s131, 15
        %s134 = smul.addr %s133, 4
        %s135 = scalar_lea.vmem %s0, %s134
        %s136 = smul.u32 8, %s9
      $region28: #{_lambda_.18} parent=23 // pred_fallthru
        _
    $region24: #{_lambda_.18} parent=5 // pred_fallthru
      _
    %p137 = scmp.le.s32.totalorder 1, %s9
    %p138 = scmp.lt.s32.totalorder %s9, 3
    %p139 = pnand %p137, %p138
    %p140 = pneg %p139
    // Predicated region
    $region29: #{_lambda_.18} parent=5 // pred_check
      _
    $region30: #{_lambda_.18} parent=5 // pred_check_branch
      %142 = sbr.rel (%p139) target = $region32
    $region31: #{_lambda_.18} parent=5 // pred_region
      %s143 = ssub.s32 %s9, 1
      %s144 = smul.u32 8, %s14
      %p145 = scmp.lt.s32.totalorder %s144, 15
      %s146 = scalar_select %p145, %s144, 15
      %s147 = smul.addr %s146, 4
      %s148 = scalar_lea.vmem %s0, %s147
      %p149 = pneg %p35
      %p150 = pneg %p32
      %p151 = pneg %p56
      %p152 = pneg %p53
      %p153 = pneg %p77
      %p154 = pneg %p74
      %p155 = pneg %p103
      %p156 = pneg %p100
      %s157 = smul.u32 8, %s14
      %p158 = scmp.lt.s32.totalorder %s157, 15
      %s159 = scalar_select %p158, %s157, 15
      %s160 = smul.addr %s159, 4
      %s161 = scalar_lea.vmem %s3, %s160
      %s162 = smul.u32 8, %s14
      %p163 = scmp.lt.s32.totalorder %s162, 15
      %s164 = scalar_select %p163, %s162, 15
      %s165 = smul.addr %s164, 4
      %s166 = scalar_lea.vmem %s0, %s165
      %s167 = smul.u32 8, %s14
      %s168 = smul.u32 8, %s14
      %p169 = scmp.lt.s32.totalorder %s168, 15
      %s170 = scalar_select %p169, %s168, 15
      %s171 = smul.addr %s170, 4
      %s172 = scalar_lea.vmem %s3, %s171
      %s173 = smul.u32 8, %s14
      %v175 = vld [vmem:[%s166] sm:$0xf]
      %v176 = vld [vmem:[%s166 + $0x4] sm:$0xf]
      %v177 = vld [vmem:[%s166 + $0x8] sm:$0xf]
      %v178 = vld [vmem:[%s166 + $0xc] sm:$0xf]
      %v179 = vld [vmem:[%s166 + $0x10] sm:$0xf]
      %v180 = vld [vmem:[%s166 + $0x14] sm:$0xf]
      %v181 = vld [vmem:[%s166 + $0x18] sm:$0xf]
      %v182 = vld [vmem:[%s166 + $0x1c] sm:$0xf]
      %v183 = vld [vmem:[%s1] sm:$0xf]
      %v184 = vld [vmem:[%s1 + $0x4] sm:$0xf]
      %v185 = vld [vmem:[%s1 + $0x8] sm:$0xf]
      %v186 = vld [vmem:[%s1 + $0xc] sm:$0xf]
      %v187 = vld [vmem:[%s2] sm:$0x1]
      %v189 = vperm.slane %v187, 0
      %v199 = vunpack.c.l.b16 %v175
      %v200 = vunpack.c.l.b16 %v176
      %v201 = vunpack.c.l.b16 %v177
      %v202 = vunpack.c.l.b16 %v178
      %v203 = vunpack.c.l.b16 %v179
      %v204 = vunpack.c.l.b16 %v180
      %v205 = vunpack.c.l.b16 %v181
      %v206 = vunpack.c.l.b16 %v182
      %v207 = vpack.c.b16 %v200, %v199
      %v208 = vpack.c.b16 %v202, %v201
      %v209 = vpack.c.b16 %v204, %v203
      %v210 = vpack.c.b16 %v206, %v205
      %v215 = vunpack.c.l.b16 %v183
      %v216 = vunpack.c.l.b16 %v184
      %v217 = vunpack.c.l.b16 %v185
      %v218 = vunpack.c.l.b16 %v186
      %v219 = vpack.c.b16 %v216, %v215
      %v220 = vpack.c.b16 %v218, %v217
      %vm223 = vcmask 261120
      %v225 = vsel %vm223, %v207, 0
      %v228 = vsel %vm223, %v208, 0
      %v231 = vsel %vm223, %v209, 0
      %v234 = vsel %vm223, %v210, 0
      %236 = vmatpush.bf16.msra.mxu0 0
      %237 = vmatpush.bf16.msra.mxu0 0
      %238 = vmatpush.bf16.msra.mxu0 0
      %239 = vmatpush.bf16.msra.mxu0 0
      %240 = vmatpush.bf16.msra.mxu0 0
      %241 = vmatpush.bf16.msra.mxu0 0
      %242 = vmatpush.bf16.msra.mxu0 %v220
      %243 = vmatpush.bf16.msra.mxu0 %v219
      %244 = vmatmul.bf16.gmra.mxu0 %v225
      %v245 = vpop.f32.mrf.mxu0
      %v246 = vadd.f32 %v189, %v245
      %v247 = vpop.f32.mrf.mxu0
      %v248 = vadd.f32 %v189, %v247
      %249 = vmatmul.bf16.gmra.mxu0 %v228
      %v250 = vpop.f32.mrf.mxu0
      %v251 = vadd.f32 %v189, %v250
      %v252 = vpop.f32.mrf.mxu0
      %v253 = vadd.f32 %v189, %v252
      %254 = vmatmul.bf16.gmra.mxu0 %v231
      %v255 = vpop.f32.mrf.mxu0
      %v256 = vadd.f32 %v189, %v255
      %v257 = vpop.f32.mrf.mxu0
      %v258 = vadd.f32 %v189, %v257
      %259 = vmatmul.bf16.gmra.mxu0 %v234
      %v260 = vpop.f32.mrf.mxu0
      %v261 = vadd.f32 %v189, %v260
      %v262 = vpop.f32.mrf.mxu0
      %v263 = vadd.f32 %v189, %v262
      %264 = vdwg.mxu0
      %v265 = vmax.f32 %v246, 0.0
      %v266 = vmax.f32 %v248, 0.0
      %v267 = vmax.f32 %v251, 0.0
      %v268 = vmax.f32 %v253, 0.0
      %v269 = vmax.f32 %v256, 0.0
      %v270 = vmax.f32 %v258, 0.0
      %v271 = vmax.f32 %v261, 0.0
      %v272 = vmax.f32 %v263, 0.0
      %v273 = vpack.c.bf16 %v265, %v265
      %v274 = vpack.c.bf16 %v266, %v266
      %v275 = vpack.c.bf16 %v267, %v267
      %v276 = vpack.c.bf16 %v268, %v268
      %v277 = vpack.c.bf16 %v269, %v269
      %v278 = vpack.c.bf16 %v270, %v270
      %v279 = vpack.c.bf16 %v271, %v271
      %v280 = vpack.c.bf16 %v272, %v272
      %vm281 = vcmask 60416
      %282 = vst.msk [vmem:[%s172] sm:$0xf] %vm281, %v273
      %283 = vst.msk [vmem:[%s172 + $0x4] sm:$0xf] %vm281, %v274
      %284 = vst.msk [vmem:[%s172 + $0x8] sm:$0xf] %vm281, %v275
      %285 = vst.msk [vmem:[%s172 + $0xc] sm:$0xf] %vm281, %v276
      %286 = vst.msk [vmem:[%s172 + $0x10] sm:$0xf] %vm281, %v277
      %287 = vst.msk [vmem:[%s172 + $0x14] sm:$0xf] %vm281, %v278
      %288 = vst.msk [vmem:[%s172 + $0x18] sm:$0xf] %vm281, %v279
      %289 = vst.msk [vmem:[%s172 + $0x1c] sm:$0xf] %vm281, %v280
      %s290 = smul.u32 8, %s14
      %p291 = scmp.lt.s32.totalorder %s290, 15
      %s292 = scalar_select %p291, %s290, 15
      %s293 = smul.addr %s292, 4
      %s294 = scalar_lea.vmem %s3, %s293
      // Predicated region
      $region33: #{_lambda_.18} parent=31 // pred_check
        %p295 = pneg %p100
      $region34: #{_lambda_.18} parent=31 // pred_check_branch
        %297 = sbr.rel (%p295) target = $region36
      $region35: #{_lambda_.18} parent=31 // pred_region
        %s298 = smul.u32 8, %s14
      $region36: #{_lambda_.18} parent=31 // pred_fallthru
        _
    $region32: #{_lambda_.18} parent=5 // pred_fallthru
      _
    %p299 = scmp.le.s32.totalorder 2, %s9
    // Predicated region
    $region37: #{_lambda_.18} parent=5 // pred_check
      %p300 = pneg %p299
    $region38: #{_lambda_.18} parent=5 // pred_check_branch
      %302 = sbr.rel (%p300) target = $region40
    $region39: #{_lambda_.18} parent=5 // pred_region
      %s303 = ssub.s32 %s9, 2
      // Predicated region
      $region41: #{_lambda_.18} parent=39 // pred_check
        %p304 = pneg %p106
      $region42: #{_lambda_.18} parent=39 // pred_check_branch
        %306 = sbr.rel (%p304) target = $region44
      $region43: #{_lambda_.18} parent=39 // pred_region
        %s307 = smul.u32 8, %s15
        %p308 = scmp.lt.s32.totalorder %s307, 15
        %s309 = scalar_select %p308, %s307, 15
        %s310 = smul.addr %s309, 4
        %s311 = scalar_lea.vmem %s3, %s310
      $region44: #{_lambda_.18} parent=39 // pred_fallthru
        _
    $region40: #{_lambda_.18} parent=5 // pred_fallthru
      _
  $region6: #{_lambda_.18} parent=0 // loop_footer
    %s13 = sadd.s32 1, %s9
  $region7: #{_lambda_.18} parent=0 // loop_footer_branch
    %8 = sbr.rel target = $region3
  $region8: #{_lambda_.18} parent=0 // loop_exit
    _

</llo_original>
